<compile_context>
chip_gen: v5e
topology: v5e:2x2
jax: 0.10.0
libtpu: 0.0.40
codegen_flags: <defaults>
</compile_context>

<pallas_src>
import functools

import jax
import jax.numpy as jnp
from jax import lax
from jax.experimental import pallas as pl
from jax.experimental.pallas import tpu as pltpu


# ----------------------------------------------------------------------------
# Pallas kernel: one batch element per grid step.
# Inputs:
#   x_ref  : (1, H+2, W+2, C)  zero-padded NHWC input tile (f32)
#   w1_ref : (9, C, C)         conv1 weights (BN1 folded), k = dy*3+dx, [Cin,Cout]
#   b1_ref : (1, C)            conv1 effective bias (f32, BN1 folded)
#   w2_ref : (9, C, C)         conv2 weights (BN2 folded)
#   b2_ref : (1, C)            conv2 effective bias (f32, BN2 folded)
# Output:
#   o_ref  : (1, H, W, C)      f32
# Scratch:
#   mid_ref: (H+2, W+2, C)     compute-dtype, zero-bordered intermediate act.
# ----------------------------------------------------------------------------
def _resblock_kernel(x_ref, w1_ref, b1_ref, w2_ref, b2_ref, o_ref, mid_ref,
                     *, row_chunk):
    _, H, W, C = o_ref.shape
    RH = row_chunk
    n_chunks = H // RH
    cdt = w1_ref.dtype                      # MXU operand dtype (bf16 or f32)
    dn = (((2,), (0,)), ((), ()))           # contract channel dim with w[Cin]

    # Hoisted bias broadcasts (do not re-broadcast inside the tap loops).
    b1 = b1_ref[...].reshape(1, 1, C)
    b2 = b2_ref[...].reshape(1, 1, C)

    # Zero only the 1-pixel border of the conv2 scratch pad (the interior is
    # fully overwritten below).  Done every step so it is correct regardless
    # of how the "parallel" batch axis is split across TensorCores.
    zrow = jnp.zeros((1, W + 2, C), mid_ref.dtype)
    zcol = jnp.zeros((H + 2, 1, C), mid_ref.dtype)
    mid_ref[0:1, :, :] = zrow
    mid_ref[H + 1:H + 2, :, :] = zrow
    mid_ref[:, 0:1, :] = zcol
    mid_ref[:, W + 1:W + 2, :] = zcol

    # ---- conv1 (3x3, pad=1) + folded BN1 + LeakyReLU, row-chunked ----------
    for c in range(n_chunks):
        r0 = c * RH
        acc = jnp.zeros((RH, W, C), jnp.float32)
        for k in range(9):
            dy, dx = divmod(k, 3)
            patch = x_ref[0, r0 + dy:r0 + dy + RH, dx:dx + W, :].astype(cdt)
            acc = acc + lax.dot_general(
                patch, w1_ref[k], dimension_numbers=dn,
                preferred_element_type=jnp.float32)
        acc = acc + b1
        acc = jnp.where(acc > 0, acc, jnp.float32(0.01) * acc)   # LeakyReLU
        mid_ref[1 + r0:1 + r0 + RH, 1:W + 1, :] = acc.astype(mid_ref.dtype)

    # ---- conv2 (3x3, pad=1) + folded BN2 + residual add, row-chunked -------
    for c in range(n_chunks):
        r0 = c * RH
        acc2 = jnp.zeros((RH, W, C), jnp.float32)
        for k in range(9):
            dy, dx = divmod(k, 3)
            patch = mid_ref[r0 + dy:r0 + dy + RH, dx:dx + W, :].astype(cdt)
            acc2 = acc2 + lax.dot_general(
                patch, w2_ref[k], dimension_numbers=dn,
                preferred_element_type=jnp.float32)
        acc2 = acc2 + b2
        res = x_ref[0, 1 + r0:1 + r0 + RH, 1:W + 1, :] + acc2    # f32 skip
        o_ref[0, r0:r0 + RH, :, :] = res.astype(o_ref.dtype)


# ----------------------------------------------------------------------------
# Host-side glue
# ----------------------------------------------------------------------------
def _fold_bn_into_conv(w_oihw, b, gamma, beta, mean, var, eps=1e-5):
    """Return (weights as (9, Cin, Cout) with BN folded, effective bias (Cout,))."""
    scale = gamma / jnp.sqrt(var + eps)                 # (Cout,)
    w_eff = w_oihw * scale[:, None, None, None]         # OIHW
    b_eff = (b - mean) * scale + beta                   # (Cout,)
    w_hwio = jnp.transpose(w_eff, (2, 3, 1, 0))         # (3, 3, Cin, Cout)
    c_in, c_out = w_hwio.shape[2], w_hwio.shape[3]
    return w_hwio.reshape(9, c_in, c_out), b_eff


def _pick_row_chunk(H, W, C, budget_bytes=64 * 1024):
    """Largest divisor of H whose f32 accumulator (rh, W, C) fits the budget."""
    best = 1
    for rh in range(1, H + 1):
        if H % rh == 0 and rh * W * C * 4 <= budget_bytes:
            best = rh
    return best


def residual_block_forward(x_nchw, params, *, compute_dtype=jnp.bfloat16):
    """Pallas-backed forward pass. x_nchw: (N, C, H, W) float32."""
    x = jnp.transpose(x_nchw, (0, 2, 3, 1)).astype(jnp.float32)   # NHWC
    N, H, W, C = x.shape
    CP = max(128, ((C + 127) // 128) * 128)             # lane-dense channels

    # One fused pad: spatial 1-px halo + channel padding to CP.
    x_pad = jnp.pad(x, ((0, 0), (1, 1), (1, 1), (0, CP - C)))

    def prep(wk, bk, gk, bek, mk, vk):
        wf, bf = _fold_bn_into_conv(params[wk], params[bk], params[gk],
                                    params[bek], params[mk], params[vk])
        wf = jnp.pad(wf, ((0, 0), (0, CP - C), (0, CP - C))).astype(compute_dtype)
        bf = jnp.pad(bf, ((0, CP - C),)).reshape(1, CP).astype(jnp.float32)
        return wf, bf

    w1f, b1f = prep("w1", "b1", "g1", "be1", "m1", "v1")
    w2f, b2f = prep("w2", "b2", "g2", "be2", "m2", "v2")

    rh = _pick_row_chunk(H, W, CP)
    kernel = functools.partial(_resblock_kernel, row_chunk=rh)

    out = pl.pallas_call(
        kernel,
        out_shape=jax.ShapeDtypeStruct((N, H, W, CP), jnp.float32),
        grid_spec=pltpu.PrefetchScalarGridSpec(
            num_scalar_prefetch=0,
            grid=(N,),
            in_specs=[
                pl.BlockSpec((1, H + 2, W + 2, CP), lambda n: (n, 0, 0, 0)),
                pl.BlockSpec((9, CP, CP), lambda n: (0, 0, 0)),
                pl.BlockSpec((1, CP), lambda n: (0, 0)),
                pl.BlockSpec((9, CP, CP), lambda n: (0, 0, 0)),
                pl.BlockSpec((1, CP), lambda n: (0, 0)),
            ],
            out_specs=pl.BlockSpec((1, H, W, CP), lambda n: (n, 0, 0, 0)),
            scratch_shapes=[pltpu.VMEM((H + 2, W + 2, CP), compute_dtype)],
        ),
        compiler_params=pltpu.CompilerParams(
            dimension_semantics=("parallel",),
            vmem_limit_bytes=64 * 1024 * 1024),
    )(x_pad, w1f, b1f, w2f, b2f)

    out = out[..., :C]                                   # drop channel padding
    return jnp.transpose(out, (0, 3, 1, 2))              # back to NCHW


# ----------------------------------------------------------------------------
# Pure-JAX reference (mirrors PyTorch semantics, NCHW / OIHW, eval-mode BN)
# ----------------------------------------------------------------------------
def _ref_forward(x, p, eps=1e-5):
    dn = ("NCHW", "OIHW", "NCHW")

    def conv(z, w, b):
        y = lax.conv_general_dilated(z, w, (1, 1), "SAME",
                                     dimension_numbers=dn)
        return y + b[None, :, None, None]

    def bn(z, g, be, m, v):
        return (z - m[None, :, None, None]) / jnp.sqrt(
            v[None, :, None, None] + eps) * g[None, :, None, None] \
            + be[None, :, None, None]

    y = conv(x, p["w1"], p["b1"])
    y = bn(y, p["g1"], p["be1"], p["m1"], p["v1"])
    y = jnp.where(y > 0, y, 0.01 * y)
    y = conv(y, p["w2"], p["b2"])
    y = bn(y, p["g2"], p["be2"], p["m2"], p["v2"])
    return x + y


def _make_params(key, C):
    ks = jax.random.split(key, 8)
    return {
        "w1": 0.1 * jax.random.normal(ks[0], (C, C, 3, 3), jnp.float32),
        "b1": 0.1 * jax.random.normal(ks[1], (C,), jnp.float32),
        "w2": 0.1 * jax.random.normal(ks[2], (C, C, 3, 3), jnp.float32),
        "b2": 0.1 * jax.random.normal(ks[3], (C,), jnp.float32),
        # BatchNorm affine + running stats (eval-mode)
        "g1": 1.0 + 0.1 * jax.random.normal(ks[4], (C,), jnp.float32),
        "be1": 0.05 * jax.random.normal(ks[5], (C,), jnp.float32),
        "m1": 0.02 * jnp.arange(C, dtype=jnp.float32),
        "v1": 1.0 + 0.01 * jnp.arange(C, dtype=jnp.float32),
        "g2": 1.0 + 0.1 * jax.random.normal(ks[6], (C,), jnp.float32),
        "be2": 0.05 * jax.random.normal(ks[7], (C,), jnp.float32),
        "m2": 0.01 * jnp.arange(C, dtype=jnp.float32),
        "v2": 1.0 + 0.02 * jnp.arange(C, dtype=jnp.float32),
    }


if __name__ == "__main__":
    key = jax.random.PRNGKey(0)
    k_x, k_p = jax.random.split(key)

    N, C, H, W = 2, 4, 16, 16
    x = jax.random.normal(k_x, (N, C, H, W), jnp.float32)
    params = _make_params(k_p, C)

    ref = jax.block_until_ready(_ref_forward(x, params))

    # Exact-precision path (f32 MXU operands + f32 scratch): validates math.
    out_f32 = jax.block_until_ready(
        residual_block_forward(x, params, compute_dtype=jnp.float32))
    assert out_f32.shape == (N, C, H, W)
    assert jnp.allclose(out_f32, ref, rtol=1e-4, atol=1e-4), \
        f"f32 path max abs err {jnp.max(jnp.abs(out_f32 - ref))}"

    # Default perf path (bf16 MXU operands + bf16 intermediate, f32 accum).
    out_bf16 = jax.block_until_ready(residual_block_forward(x, params))
    assert out_bf16.shape == (N, C, H, W)
    assert jnp.allclose(out_bf16, ref, rtol=5e-2, atol=5e-2), \
        f"bf16 path max abs err {jnp.max(jnp.abs(out_bf16 - ref))}"

    print("KERNEL_OK")
</pallas_src>

<mosaic_0001>
module attributes {stable_mosaic.version = 11 : i64} {
  func.func @_resblock_kernel(%arg0: i32, %arg1: memref<1x18x18x128xf32, #tpu.memory_space<vmem>>, %arg2: memref<9x128x128xf32, #tpu.memory_space<vmem>>, %arg3: memref<1x128xf32, #tpu.memory_space<vmem>>, %arg4: memref<9x128x128xf32, #tpu.memory_space<vmem>>, %arg5: memref<1x128xf32, #tpu.memory_space<vmem>>, %arg6: memref<1x16x16x128xf32, #tpu.memory_space<vmem>>, %arg7: memref<18x18x128xf32, #tpu.memory_space<vmem>>) attributes {dimension_semantics = [#tpu.dimension_semantics<parallel>], iteration_bounds = array<i64: 2>, scalar_prefetch = 0 : i64, scratch_operands = 1 : i64, tpu.core_type = #tpu.core_type<tc>, window_params = [{transform_indices = @transform_0, window_bounds = array<i64: 1, 18, 18, 128>}, {pipeline_mode = #tpu.pipeline_mode<synchronous>, transform_indices = @transform_1, window_bounds = array<i64: 9, 128, 128>}, {pipeline_mode = #tpu.pipeline_mode<synchronous>, transform_indices = @transform_2, window_bounds = array<i64: 1, 128>}, {pipeline_mode = #tpu.pipeline_mode<synchronous>, transform_indices = @transform_3, window_bounds = array<i64: 9, 128, 128>}, {pipeline_mode = #tpu.pipeline_mode<synchronous>, transform_indices = @transform_4, window_bounds = array<i64: 1, 128>}, {transform_indices = @transform_5, window_bounds = array<i64: 1, 16, 16, 128>}]} {
    %c0 = arith.constant 0 : index
    %c0_0 = arith.constant 0 : index
    %0 = vector.load %arg3[%c0, %c0_0] : memref<1x128xf32, #tpu.memory_space<vmem>>, vector<1x128xf32>
    %1 = vector.shape_cast %0 : vector<1x128xf32> to vector<1x1x128xf32>
    %c0_1 = arith.constant 0 : index
    %c0_2 = arith.constant 0 : index
    %2 = vector.load %arg5[%c0_1, %c0_2] : memref<1x128xf32, #tpu.memory_space<vmem>>, vector<1x128xf32>
    %3 = vector.shape_cast %2 : vector<1x128xf32> to vector<1x1x128xf32>
    %cst = arith.constant 0.000000e+00 : f32
    %4 = vector.broadcast %cst : f32 to vector<1x18x128xf32>
    %cst_3 = arith.constant 0.000000e+00 : f32
    %5 = vector.broadcast %cst_3 : f32 to vector<18x1x128xf32>
    %c0_4 = arith.constant 0 : index
    %c0_5 = arith.constant 0 : index
    %c0_6 = arith.constant 0 : index
    %6 = vector.load %arg7[%c0_4, %c0_5, %c0_6] : memref<18x18x128xf32, #tpu.memory_space<vmem>>, vector<1x18x128xf32>
    tpu.vector_store %arg7[%c0_4, %c0_5, %c0_6], %4 {strides = array<i32>} : memref<18x18x128xf32, #tpu.memory_space<vmem>>, vector<1x18x128xf32>,
    %c17 = arith.constant 17 : index
    %c0_7 = arith.constant 0 : index
    %c0_8 = arith.constant 0 : index
    %7 = vector.load %arg7[%c17, %c0_7, %c0_8] : memref<18x18x128xf32, #tpu.memory_space<vmem>>, vector<1x18x128xf32>
    tpu.vector_store %arg7[%c17, %c0_7, %c0_8], %4 {strides = array<i32>} : memref<18x18x128xf32, #tpu.memory_space<vmem>>, vector<1x18x128xf32>,
    %c0_9 = arith.constant 0 : index
    %c0_10 = arith.constant 0 : index
    %c0_11 = arith.constant 0 : index
    %8 = vector.load %arg7[%c0_9, %c0_10, %c0_11] : memref<18x18x128xf32, #tpu.memory_space<vmem>>, vector<18x1x128xf32>
    tpu.vector_store %arg7[%c0_9, %c0_10, %c0_11], %5 {strides = array<i32>} : memref<18x18x128xf32, #tpu.memory_space<vmem>>, vector<18x1x128xf32>,
    %c0_12 = arith.constant 0 : index
    %c17_13 = arith.constant 17 : index
    %c0_14 = arith.constant 0 : index
    %9 = vector.load %arg7[%c0_12, %c17_13, %c0_14] : memref<18x18x128xf32, #tpu.memory_space<vmem>>, vector<18x1x128xf32>
    tpu.vector_store %arg7[%c0_12, %c17_13, %c0_14], %5 {strides = array<i32>} : memref<18x18x128xf32, #tpu.memory_space<vmem>>, vector<18x1x128xf32>,
    %cst_15 = arith.constant 0.000000e+00 : f32
    %10 = vector.broadcast %cst_15 : f32 to vector<8x16x128xf32>
    %c0_16 = arith.constant 0 : index
    %c0_17 = arith.constant 0 : index
    %c0_18 = arith.constant 0 : index
    %c0_19 = arith.constant 0 : index
    %11 = vector.load %arg1[%c0_16, %c0_17, %c0_18, %c0_19] : memref<1x18x18x128xf32, #tpu.memory_space<vmem>>, vector<1x8x16x128xf32>
    %12 = vector.shape_cast %11 : vector<1x8x16x128xf32> to vector<8x16x128xf32>
    %c0_20 = arith.constant 0 : index
    %c0_21 = arith.constant 0 : index
    %c0_22 = arith.constant 0 : index
    %13 = vector.load %arg2[%c0_20, %c0_21, %c0_22] : memref<9x128x128xf32, #tpu.memory_space<vmem>>, vector<1x128x128xf32>
    %14 = vector.shape_cast %13 : vector<1x128x128xf32> to vector<128x128xf32>
    %cst_23 = arith.constant dense<0.000000e+00> : vector<8x16x128xf32>
    %15 = tpu.matmul %12, %14, %cst_23 {dimension_numbers = #tpu.dot_dimension_numbers<[2], [0], [0, 1], [1], [0, 0, 0, 1, 1, 1], [], []>} : vector<8x16x128xf32>, vector<128x128xf32>, vector<8x16x128xf32> -> vector<8x16x128xf32>
    %16 = arith.addf %10, %15 : vector<8x16x128xf32>
    %c0_24 = arith.constant 0 : index
    %c0_25 = arith.constant 0 : index
    %c1 = arith.constant 1 : index
    %c0_26 = arith.constant 0 : index
    %17 = vector.load %arg1[%c0_24, %c0_25, %c1, %c0_26] : memref<1x18x18x128xf32, #tpu.memory_space<vmem>>, vector<1x8x16x128xf32>
    %18 = vector.shape_cast %17 : vector<1x8x16x128xf32> to vector<8x16x128xf32>
    %c1_27 = arith.constant 1 : index
    %c0_28 = arith.constant 0 : index
    %c0_29 = arith.constant 0 : index
    %19 = vector.load %arg2[%c1_27, %c0_28, %c0_29] : memref<9x128x128xf32, #tpu.memory_space<vmem>>, vector<1x128x128xf32>
    %20 = vector.shape_cast %19 : vector<1x128x128xf32> to vector<128x128xf32>
    %cst_30 = arith.constant dense<0.000000e+00> : vector<8x16x128xf32>
    %21 = tpu.matmul %18, %20, %cst_30 {dimension_numbers = #tpu.dot_dimension_numbers<[2], [0], [0, 1], [1], [0, 0, 0, 1, 1, 1], [], []>} : vector<8x16x128xf32>, vector<128x128xf32>, vector<8x16x128xf32> -> vector<8x16x128xf32>
    %22 = arith.addf %16, %21 : vector<8x16x128xf32>
    %c0_31 = arith.constant 0 : index
    %c0_32 = arith.constant 0 : index
    %c2 = arith.constant 2 : index
    %c0_33 = arith.constant 0 : index
    %23 = vector.load %arg1[%c0_31, %c0_32, %c2, %c0_33] : memref<1x18x18x128xf32, #tpu.memory_space<vmem>>, vector<1x8x16x128xf32>
    %24 = vector.shape_cast %23 : vector<1x8x16x128xf32> to vector<8x16x128xf32>
    %c2_34 = arith.constant 2 : index
    %c0_35 = arith.constant 0 : index
    %c0_36 = arith.constant 0 : index
    %25 = vector.load %arg2[%c2_34, %c0_35, %c0_36] : memref<9x128x128xf32, #tpu.memory_space<vmem>>, vector<1x128x128xf32>
    %26 = vector.shape_cast %25 : vector<1x128x128xf32> to vector<128x128xf32>
    %cst_37 = arith.constant dense<0.000000e+00> : vector<8x16x128xf32>
    %27 = tpu.matmul %24, %26, %cst_37 {dimension_numbers = #tpu.dot_dimension_numbers<[2], [0], [0, 1], [1], [0, 0, 0, 1, 1, 1], [], []>} : vector<8x16x128xf32>, vector<128x128xf32>, vector<8x16x128xf32> -> vector<8x16x128xf32>
    %28 = arith.addf %22, %27 : vector<8x16x128xf32>
    %c0_38 = arith.constant 0 : index
    %c1_39 = arith.constant 1 : index
    %c0_40 = arith.constant 0 : index
    %c0_41 = arith.constant 0 : index
    %29 = vector.load %arg1[%c0_38, %c1_39, %c0_40, %c0_41] : memref<1x18x18x128xf32, #tpu.memory_space<vmem>>, vector<1x8x16x128xf32>
    %30 = vector.shape_cast %29 : vector<1x8x16x128xf32> to vector<8x16x128xf32>
    %c3 = arith.constant 3 : index
    %c0_42 = arith.constant 0 : index
    %c0_43 = arith.constant 0 : index
    %31 = vector.load %arg2[%c3, %c0_42, %c0_43] : memref<9x128x128xf32, #tpu.memory_space<vmem>>, vector<1x128x128xf32>
    %32 = vector.shape_cast %31 : vector<1x128x128xf32> to vector<128x128xf32>
    %cst_44 = arith.constant dense<0.000000e+00> : vector<8x16x128xf32>
    %33 = tpu.matmul %30, %32, %cst_44 {dimension_numbers = #tpu.dot_dimension_numbers<[2], [0], [0, 1], [1], [0, 0, 0, 1, 1, 1], [], []>} : vector<8x16x128xf32>, vector<128x128xf32>, vector<8x16x128xf32> -> vector<8x16x128xf32>
    %34 = arith.addf %28, %33 : vector<8x16x128xf32>
    %c0_45 = arith.constant 0 : index
    %c1_46 = arith.constant 1 : index
    %c1_47 = arith.constant 1 : index
    %c0_48 = arith.constant 0 : index
    %35 = vector.load %arg1[%c0_45, %c1_46, %c1_47, %c0_48] : memref<1x18x18x128xf32, #tpu.memory_space<vmem>>, vector<1x8x16x128xf32>
    %36 = vector.shape_cast %35 : vector<1x8x16x128xf32> to vector<8x16x128xf32>
    %c4 = arith.constant 4 : index
    %c0_49 = arith.constant 0 : index
    %c0_50 = arith.constant 0 : index
    %37 = vector.load %arg2[%c4, %c0_49, %c0_50] : memref<9x128x128xf32, #tpu.memory_space<vmem>>, vector<1x128x128xf32>
    %38 = vector.shape_cast %37 : vector<1x128x128xf32> to vector<128x128xf32>
    %cst_51 = arith.constant dense<0.000000e+00> : vector<8x16x128xf32>
    %39 = tpu.matmul %36, %38, %cst_51 {dimension_numbers = #tpu.dot_dimension_numbers<[2], [0], [0, 1], [1], [0, 0, 0, 1, 1, 1], [], []>} : vector<8x16x128xf32>, vector<128x128xf32>, vector<8x16x128xf32> -> vector<8x16x128xf32>
    %40 = arith.addf %34, %39 : vector<8x16x128xf32>
    %c0_52 = arith.constant 0 : index
    %c1_53 = arith.constant 1 : index
    %c2_54 = arith.constant 2 : index
    %c0_55 = arith.constant 0 : index
    %41 = vector.load %arg1[%c0_52, %c1_53, %c2_54, %c0_55] : memref<1x18x18x128xf32, #tpu.memory_space<vmem>>, vector<1x8x16x128xf32>
    %42 = vector.shape_cast %41 : vector<1x8x16x128xf32> to vector<8x16x128xf32>
    %c5 = arith.constant 5 : index
    %c0_56 = arith.constant 0 : index
    %c0_57 = arith.constant 0 : index
    %43 = vector.load %arg2[%c5, %c0_56, %c0_57] : memref<9x128x128xf32, #tpu.memory_space<vmem>>, vector<1x128x128xf32>
    %44 = vector.shape_cast %43 : vector<1x128x128xf32> to vector<128x128xf32>
    %cst_58 = arith.constant dense<0.000000e+00> : vector<8x16x128xf32>
    %45 = tpu.matmul %42, %44, %cst_58 {dimension_numbers = #tpu.dot_dimension_numbers<[2], [0], [0, 1], [1], [0, 0, 0, 1, 1, 1], [], []>} : vector<8x16x128xf32>, vector<128x128xf32>, vector<8x16x128xf32> -> vector<8x16x128xf32>
    %46 = arith.addf %40, %45 : vector<8x16x128xf32>
    %c0_59 = arith.constant 0 : index
    %c2_60 = arith.constant 2 : index
    %c0_61 = arith.constant 0 : index
    %c0_62 = arith.constant 0 : index
    %47 = vector.load %arg1[%c0_59, %c2_60, %c0_61, %c0_62] : memref<1x18x18x128xf32, #tpu.memory_space<vmem>>, vector<1x8x16x128xf32>
    %48 = vector.shape_cast %47 : vector<1x8x16x128xf32> to vector<8x16x128xf32>
    %c6 = arith.constant 6 : index
    %c0_63 = arith.constant 0 : index
    %c0_64 = arith.constant 0 : index
    %49 = vector.load %arg2[%c6, %c0_63, %c0_64] : memref<9x128x128xf32, #tpu.memory_space<vmem>>, vector<1x128x128xf32>
    %50 = vector.shape_cast %49 : vector<1x128x128xf32> to vector<128x128xf32>
    %cst_65 = arith.constant dense<0.000000e+00> : vector<8x16x128xf32>
    %51 = tpu.matmul %48, %50, %cst_65 {dimension_numbers = #tpu.dot_dimension_numbers<[2], [0], [0, 1], [1], [0, 0, 0, 1, 1, 1], [], []>} : vector<8x16x128xf32>, vector<128x128xf32>, vector<8x16x128xf32> -> vector<8x16x128xf32>
    %52 = arith.addf %46, %51 : vector<8x16x128xf32>
    %c0_66 = arith.constant 0 : index
    %c2_67 = arith.constant 2 : index
    %c1_68 = arith.constant 1 : index
    %c0_69 = arith.constant 0 : index
    %53 = vector.load %arg1[%c0_66, %c2_67, %c1_68, %c0_69] : memref<1x18x18x128xf32, #tpu.memory_space<vmem>>, vector<1x8x16x128xf32>
    %54 = vector.shape_cast %53 : vector<1x8x16x128xf32> to vector<8x16x128xf32>
    %c7 = arith.constant 7 : index
    %c0_70 = arith.constant 0 : index
    %c0_71 = arith.constant 0 : index
    %55 = vector.load %arg2[%c7, %c0_70, %c0_71] : memref<9x128x128xf32, #tpu.memory_space<vmem>>, vector<1x128x128xf32>
    %56 = vector.shape_cast %55 : vector<1x128x128xf32> to vector<128x128xf32>
    %cst_72 = arith.constant dense<0.000000e+00> : vector<8x16x128xf32>
    %57 = tpu.matmul %54, %56, %cst_72 {dimension_numbers = #tpu.dot_dimension_numbers<[2], [0], [0, 1], [1], [0, 0, 0, 1, 1, 1], [], []>} : vector<8x16x128xf32>, vector<128x128xf32>, vector<8x16x128xf32> -> vector<8x16x128xf32>
    %58 = arith.addf %52, %57 : vector<8x16x128xf32>
    %c0_73 = arith.constant 0 : index
    %c2_74 = arith.constant 2 : index
    %c2_75 = arith.constant 2 : index
    %c0_76 = arith.constant 0 : index
    %59 = vector.load %arg1[%c0_73, %c2_74, %c2_75, %c0_76] : memref<1x18x18x128xf32, #tpu.memory_space<vmem>>, vector<1x8x16x128xf32>
    %60 = vector.shape_cast %59 : vector<1x8x16x128xf32> to vector<8x16x128xf32>
    %c8 = arith.constant 8 : index
    %c0_77 = arith.constant 0 : index
    %c0_78 = arith.constant 0 : index
    %61 = vector.load %arg2[%c8, %c0_77, %c0_78] : memref<9x128x128xf32, #tpu.memory_space<vmem>>, vector<1x128x128xf32>
    %62 = vector.shape_cast %61 : vector<1x128x128xf32> to vector<128x128xf32>
    %cst_79 = arith.constant dense<0.000000e+00> : vector<8x16x128xf32>
    %63 = tpu.matmul %60, %62, %cst_79 {dimension_numbers = #tpu.dot_dimension_numbers<[2], [0], [0, 1], [1], [0, 0, 0, 1, 1, 1], [], []>} : vector<8x16x128xf32>, vector<128x128xf32>, vector<8x16x128xf32> -> vector<8x16x128xf32>
    %64 = arith.addf %58, %63 : vector<8x16x128xf32>
    %65 = vector.broadcast %1 : vector<1x1x128xf32> to vector<8x16x128xf32>
    %66 = arith.addf %64, %65 : vector<8x16x128xf32>
    %cst_80 = arith.constant 0.000000e+00 : f32
    %67 = vector.broadcast %cst_80 : f32 to vector<8x16x128xf32>
    %68 = arith.cmpf ogt, %66, %67 : vector<8x16x128xf32>
    %cst_81 = arith.constant 0.00999999977 : f32
    %69 = vector.broadcast %cst_81 : f32 to vector<8x16x128xf32>
    %70 = arith.mulf %69, %66 : vector<8x16x128xf32>
    %71 = arith.select %68, %66, %70 : vector<8x16x128xi1>, vector<8x16x128xf32>
    %c1_82 = arith.constant 1 : index
    %c1_83 = arith.constant 1 : index
    %c0_84 = arith.constant 0 : index
    %72 = vector.load %arg7[%c1_82, %c1_83, %c0_84] : memref<18x18x128xf32, #tpu.memory_space<vmem>>, vector<8x16x128xf32>
    tpu.vector_store %arg7[%c1_82, %c1_83, %c0_84], %71 {strides = array<i32>} : memref<18x18x128xf32, #tpu.memory_space<vmem>>, vector<8x16x128xf32>,
    %cst_85 = arith.constant 0.000000e+00 : f32
    %73 = vector.broadcast %cst_85 : f32 to vector<8x16x128xf32>
    %c0_86 = arith.constant 0 : index
    %c8_87 = arith.constant 8 : index
    %c0_88 = arith.constant 0 : index
    %c0_89 = arith.constant 0 : index
    %74 = vector.load %arg1[%c0_86, %c8_87, %c0_88, %c0_89] : memref<1x18x18x128xf32, #tpu.memory_space<vmem>>, vector<1x8x16x128xf32>
    %75 = vector.shape_cast %74 : vector<1x8x16x128xf32> to vector<8x16x128xf32>
    %c0_90 = arith.constant 0 : index
    %c0_91 = arith.constant 0 : index
    %c0_92 = arith.constant 0 : index
    %76 = vector.load %arg2[%c0_90, %c0_91, %c0_92] : memref<9x128x128xf32, #tpu.memory_space<vmem>>, vector<1x128x128xf32>
    %77 = vector.shape_cast %76 : vector<1x128x128xf32> to vector<128x128xf32>
    %cst_93 = arith.constant dense<0.000000e+00> : vector<8x16x128xf32>
    %78 = tpu.matmul %75, %77, %cst_93 {dimension_numbers = #tpu.dot_dimension_numbers<[2], [0], [0, 1], [1], [0, 0, 0, 1, 1, 1], [], []>} : vector<8x16x128xf32>, vector<128x128xf32>, vector<8x16x128xf32> -> vector<8x16x128xf32>
    %79 = arith.addf %73, %78 : vector<8x16x128xf32>
    %c0_94 = arith.constant 0 : index
    %c8_95 = arith.constant 8 : index
    %c1_96 = arith.constant 1 : index
    %c0_97 = arith.constant 0 : index
    %80 = vector.load %arg1[%c0_94, %c8_95, %c1_96, %c0_97] : memref<1x18x18x128xf32, #tpu.memory_space<vmem>>, vector<1x8x16x128xf32>
    %81 = vector.shape_cast %80 : vector<1x8x16x128xf32> to vector<8x16x128xf32>
    %c1_98 = arith.constant 1 : index
    %c0_99 = arith.constant 0 : index
    %c0_100 = arith.constant 0 : index
    %82 = vector.load %arg2[%c1_98, %c0_99, %c0_100] : memref<9x128x128xf32, #tpu.memory_space<vmem>>, vector<1x128x128xf32>
    %83 = vector.shape_cast %82 : vector<1x128x128xf32> to vector<128x128xf32>
    %cst_101 = arith.constant dense<0.000000e+00> : vector<8x16x128xf32>
    %84 = tpu.matmul %81, %83, %cst_101 {dimension_numbers = #tpu.dot_dimension_numbers<[2], [0], [0, 1], [1], [0, 0, 0, 1, 1, 1], [], []>} : vector<8x16x128xf32>, vector<128x128xf32>, vector<8x16x128xf32> -> vector<8x16x128xf32>
    %85 = arith.addf %79, %84 : vector<8x16x128xf32>
    %c0_102 = arith.constant 0 : index
    %c8_103 = arith.constant 8 : index
    %c2_104 = arith.constant 2 : index
    %c0_105 = arith.constant 0 : index
    %86 = vector.load %arg1[%c0_102, %c8_103, %c2_104, %c0_105] : memref<1x18x18x128xf32, #tpu.memory_space<vmem>>, vector<1x8x16x128xf32>
    %87 = vector.shape_cast %86 : vector<1x8x16x128xf32> to vector<8x16x128xf32>
    %c2_106 = arith.constant 2 : index
    %c0_107 = arith.constant 0 : index
    %c0_108 = arith.constant 0 : index
    %88 = vector.load %arg2[%c2_106, %c0_107, %c0_108] : memref<9x128x128xf32, #tpu.memory_space<vmem>>, vector<1x128x128xf32>
    %89 = vector.shape_cast %88 : vector<1x128x128xf32> to vector<128x128xf32>
    %cst_109 = arith.constant dense<0.000000e+00> : vector<8x16x128xf32>
    %90 = tpu.matmul %87, %89, %cst_109 {dimension_numbers = #tpu.dot_dimension_numbers<[2], [0], [0, 1], [1], [0, 0, 0, 1, 1, 1], [], []>} : vector<8x16x128xf32>, vector<128x128xf32>, vector<8x16x128xf32> -> vector<8x16x128xf32>
    %91 = arith.addf %85, %90 : vector<8x16x128xf32>
    %c0_110 = arith.constant 0 : index
    %c9 = arith.constant 9 : index
    %c0_111 = arith.constant 0 : index
    %c0_112 = arith.constant 0 : index
    %92 = vector.load %arg1[%c0_110, %c9, %c0_111, %c0_112] : memref<1x18x18x128xf32, #tpu.memory_space<vmem>>, vector<1x8x16x128xf32>
    %93 = vector.shape_cast %92 : vector<1x8x16x128xf32> to vector<8x16x128xf32>
    %c3_113 = arith.constant 3 : index
    %c0_114 = arith.constant 0 : index
    %c0_115 = arith.constant 0 : index
    %94 = vector.load %arg2[%c3_113, %c0_114, %c0_115] : memref<9x128x128xf32, #tpu.memory_space<vmem>>, vector<1x128x128xf32>
    %95 = vector.shape_cast %94 : vector<1x128x128xf32> to vector<128x128xf32>
    %cst_116 = arith.constant dense<0.000000e+00> : vector<8x16x128xf32>
    %96 = tpu.matmul %93, %95, %cst_116 {dimension_numbers = #tpu.dot_dimension_numbers<[2], [0], [0, 1], [1], [0, 0, 0, 1, 1, 1], [], []>} : vector<8x16x128xf32>, vector<128x128xf32>, vector<8x16x128xf32> -> vector<8x16x128xf32>
    %97 = arith.addf %91, %96 : vector<8x16x128xf32>
    %c0_117 = arith.constant 0 : index
    %c9_118 = arith.constant 9 : index
    %c1_119 = arith.constant 1 : index
    %c0_120 = arith.constant 0 : index
    %98 = vector.load %arg1[%c0_117, %c9_118, %c1_119, %c0_120] : memref<1x18x18x128xf32, #tpu.memory_space<vmem>>, vector<1x8x16x128xf32>
    %99 = vector.shape_cast %98 : vector<1x8x16x128xf32> to vector<8x16x128xf32>
    %c4_121 = arith.constant 4 : index
    %c0_122 = arith.constant 0 : index
    %c0_123 = arith.constant 0 : index
    %100 = vector.load %arg2[%c4_121, %c0_122, %c0_123] : memref<9x128x128xf32, #tpu.memory_space<vmem>>, vector<1x128x128xf32>
    %101 = vector.shape_cast %100 : vector<1x128x128xf32> to vector<128x128xf32>
    %cst_124 = arith.constant dense<0.000000e+00> : vector<8x16x128xf32>
    %102 = tpu.matmul %99, %101, %cst_124 {dimension_numbers = #tpu.dot_dimension_numbers<[2], [0], [0, 1], [1], [0, 0, 0, 1, 1, 1], [], []>} : vector<8x16x128xf32>, vector<128x128xf32>, vector<8x16x128xf32> -> vector<8x16x128xf32>
    %103 = arith.addf %97, %102 : vector<8x16x128xf32>
    %c0_125 = arith.constant 0 : index
    %c9_126 = arith.constant 9 : index
    %c2_127 = arith.constant 2 : index
    %c0_128 = arith.constant 0 : index
    %104 = vector.load %arg1[%c0_125, %c9_126, %c2_127, %c0_128] : memref<1x18x18x128xf32, #tpu.memory_space<vmem>>, vector<1x8x16x128xf32>
    %105 = vector.shape_cast %104 : vector<1x8x16x128xf32> to vector<8x16x128xf32>
    %c5_129 = arith.constant 5 : index
    %c0_130 = arith.constant 0 : index
    %c0_131 = arith.constant 0 : index
    %106 = vector.load %arg2[%c5_129, %c0_130, %c0_131] : memref<9x128x128xf32, #tpu.memory_space<vmem>>, vector<1x128x128xf32>
    %107 = vector.shape_cast %106 : vector<1x128x128xf32> to vector<128x128xf32>
    %cst_132 = arith.constant dense<0.000000e+00> : vector<8x16x128xf32>
    %108 = tpu.matmul %105, %107, %cst_132 {dimension_numbers = #tpu.dot_dimension_numbers<[2], [0], [0, 1], [1], [0, 0, 0, 1, 1, 1], [], []>} : vector<8x16x128xf32>, vector<128x128xf32>, vector<8x16x128xf32> -> vector<8x16x128xf32>
    %109 = arith.addf %103, %108 : vector<8x16x128xf32>
    %c0_133 = arith.constant 0 : index
    %c10 = arith.constant 10 : index
    %c0_134 = arith.constant 0 : index
    %c0_135 = arith.constant 0 : index
    %110 = vector.load %arg1[%c0_133, %c10, %c0_134, %c0_135] : memref<1x18x18x128xf32, #tpu.memory_space<vmem>>, vector<1x8x16x128xf32>
    %111 = vector.shape_cast %110 : vector<1x8x16x128xf32> to vector<8x16x128xf32>
    %c6_136 = arith.constant 6 : index
    %c0_137 = arith.constant 0 : index
    %c0_138 = arith.constant 0 : index
    %112 = vector.load %arg2[%c6_136, %c0_137, %c0_138] : memref<9x128x128xf32, #tpu.memory_space<vmem>>, vector<1x128x128xf32>
    %113 = vector.shape_cast %112 : vector<1x128x128xf32> to vector<128x128xf32>
    %cst_139 = arith.constant dense<0.000000e+00> : vector<8x16x128xf32>
    %114 = tpu.matmul %111, %113, %cst_139 {dimension_numbers = #tpu.dot_dimension_numbers<[2], [0], [0, 1], [1], [0, 0, 0, 1, 1, 1], [], []>} : vector<8x16x128xf32>, vector<128x128xf32>, vector<8x16x128xf32> -> vector<8x16x128xf32>
    %115 = arith.addf %109, %114 : vector<8x16x128xf32>
    %c0_140 = arith.constant 0 : index
    %c10_141 = arith.constant 10 : index
    %c1_142 = arith.constant 1 : index
    %c0_143 = arith.constant 0 : index
    %116 = vector.load %arg1[%c0_140, %c10_141, %c1_142, %c0_143] : memref<1x18x18x128xf32, #tpu.memory_space<vmem>>, vector<1x8x16x128xf32>
    %117 = vector.shape_cast %116 : vector<1x8x16x128xf32> to vector<8x16x128xf32>
    %c7_144 = arith.constant 7 : index
    %c0_145 = arith.constant 0 : index
    %c0_146 = arith.constant 0 : index
    %118 = vector.load %arg2[%c7_144, %c0_145, %c0_146] : memref<9x128x128xf32, #tpu.memory_space<vmem>>, vector<1x128x128xf32>
    %119 = vector.shape_cast %118 : vector<1x128x128xf32> to vector<128x128xf32>
    %cst_147 = arith.constant dense<0.000000e+00> : vector<8x16x128xf32>
    %120 = tpu.matmul %117, %119, %cst_147 {dimension_numbers = #tpu.dot_dimension_numbers<[2], [0], [0, 1], [1], [0, 0, 0, 1, 1, 1], [], []>} : vector<8x16x128xf32>, vector<128x128xf32>, vector<8x16x128xf32> -> vector<8x16x128xf32>
    %121 = arith.addf %115, %120 : vector<8x16x128xf32>
    %c0_148 = arith.constant 0 : index
    %c10_149 = arith.constant 10 : index
    %c2_150 = arith.constant 2 : index
    %c0_151 = arith.constant 0 : index
    %122 = vector.load %arg1[%c0_148, %c10_149, %c2_150, %c0_151] : memref<1x18x18x128xf32, #tpu.memory_space<vmem>>, vector<1x8x16x128xf32>
    %123 = vector.shape_cast %122 : vector<1x8x16x128xf32> to vector<8x16x128xf32>
    %c8_152 = arith.constant 8 : index
    %c0_153 = arith.constant 0 : index
    %c0_154 = arith.constant 0 : index
    %124 = vector.load %arg2[%c8_152, %c0_153, %c0_154] : memref<9x128x128xf32, #tpu.memory_space<vmem>>, vector<1x128x128xf32>
    %125 = vector.shape_cast %124 : vector<1x128x128xf32> to vector<128x128xf32>
    %cst_155 = arith.constant dense<0.000000e+00> : vector<8x16x128xf32>
    %126 = tpu.matmul %123, %125, %cst_155 {dimension_numbers = #tpu.dot_dimension_numbers<[2], [0], [0, 1], [1], [0, 0, 0, 1, 1, 1], [], []>} : vector<8x16x128xf32>, vector<128x128xf32>, vector<8x16x128xf32> -> vector<8x16x128xf32>
    %127 = arith.addf %121, %126 : vector<8x16x128xf32>
    %128 = vector.broadcast %1 : vector<1x1x128xf32> to vector<8x16x128xf32>
    %129 = arith.addf %127, %128 : vector<8x16x128xf32>
    %cst_156 = arith.constant 0.000000e+00 : f32
    %130 = vector.broadcast %cst_156 : f32 to vector<8x16x128xf32>
    %131 = arith.cmpf ogt, %129, %130 : vector<8x16x128xf32>
    %cst_157 = arith.constant 0.00999999977 : f32
    %132 = vector.broadcast %cst_157 : f32 to vector<8x16x128xf32>
    %133 = arith.mulf %132, %129 : vector<8x16x128xf32>
    %134 = arith.select %131, %129, %133 : vector<8x16x128xi1>, vector<8x16x128xf32>
    %c9_158 = arith.constant 9 : index
    %c1_159 = arith.constant 1 : index
    %c0_160 = arith.constant 0 : index
    %135 = vector.load %arg7[%c9_158, %c1_159, %c0_160] : memref<18x18x128xf32, #tpu.memory_space<vmem>>, vector<8x16x128xf32>
    tpu.vector_store %arg7[%c9_158, %c1_159, %c0_160], %134 {strides = array<i32>} : memref<18x18x128xf32, #tpu.memory_space<vmem>>, vector<8x16x128xf32>,
    %cst_161 = arith.constant 0.000000e+00 : f32
    %136 = vector.broadcast %cst_161 : f32 to vector<8x16x128xf32>
    %c0_162 = arith.constant 0 : index
    %c0_163 = arith.constant 0 : index
    %c0_164 = arith.constant 0 : index
    %137 = vector.load %arg7[%c0_162, %c0_163, %c0_164] : memref<18x18x128xf32, #tpu.memory_space<vmem>>, vector<8x16x128xf32>
    %c0_165 = arith.constant 0 : index
    %c0_166 = arith.constant 0 : index
    %c0_167 = arith.constant 0 : index
    %138 = vector.load %arg4[%c0_165, %c0_166, %c0_167] : memref<9x128x128xf32, #tpu.memory_space<vmem>>, vector<1x128x128xf32>
    %139 = vector.shape_cast %138 : vector<1x128x128xf32> to vector<128x128xf32>
    %cst_168 = arith.constant dense<0.000000e+00> : vector<8x16x128xf32>
    %140 = tpu.matmul %137, %139, %cst_168 {dimension_numbers = #tpu.dot_dimension_numbers<[2], [0], [0, 1], [1], [0, 0, 0, 1, 1, 1], [], []>} : vector<8x16x128xf32>, vector<128x128xf32>, vector<8x16x128xf32> -> vector<8x16x128xf32>
    %141 = arith.addf %136, %140 : vector<8x16x128xf32>
    %c0_169 = arith.constant 0 : index
    %c1_170 = arith.constant 1 : index
    %c0_171 = arith.constant 0 : index
    %142 = vector.load %arg7[%c0_169, %c1_170, %c0_171] : memref<18x18x128xf32, #tpu.memory_space<vmem>>, vector<8x16x128xf32>
    %c1_172 = arith.constant 1 : index
    %c0_173 = arith.constant 0 : index
    %c0_174 = arith.constant 0 : index
    %143 = vector.load %arg4[%c1_172, %c0_173, %c0_174] : memref<9x128x128xf32, #tpu.memory_space<vmem>>, vector<1x128x128xf32>
    %144 = vector.shape_cast %143 : vector<1x128x128xf32> to vector<128x128xf32>
    %cst_175 = arith.constant dense<0.000000e+00> : vector<8x16x128xf32>
    %145 = tpu.matmul %142, %144, %cst_175 {dimension_numbers = #tpu.dot_dimension_numbers<[2], [0], [0, 1], [1], [0, 0, 0, 1, 1, 1], [], []>} : vector<8x16x128xf32>, vector<128x128xf32>, vector<8x16x128xf32> -> vector<8x16x128xf32>
    %146 = arith.addf %141, %145 : vector<8x16x128xf32>
    %c0_176 = arith.constant 0 : index
    %c2_177 = arith.constant 2 : index
    %c0_178 = arith.constant 0 : index
    %147 = vector.load %arg7[%c0_176, %c2_177, %c0_178] : memref<18x18x128xf32, #tpu.memory_space<vmem>>, vector<8x16x128xf32>
    %c2_179 = arith.constant 2 : index
    %c0_180 = arith.constant 0 : index
    %c0_181 = arith.constant 0 : index
    %148 = vector.load %arg4[%c2_179, %c0_180, %c0_181] : memref<9x128x128xf32, #tpu.memory_space<vmem>>, vector<1x128x128xf32>
    %149 = vector.shape_cast %148 : vector<1x128x128xf32> to vector<128x128xf32>
    %cst_182 = arith.constant dense<0.000000e+00> : vector<8x16x128xf32>
    %150 = tpu.matmul %147, %149, %cst_182 {dimension_numbers = #tpu.dot_dimension_numbers<[2], [0], [0, 1], [1], [0, 0, 0, 1, 1, 1], [], []>} : vector<8x16x128xf32>, vector<128x128xf32>, vector<8x16x128xf32> -> vector<8x16x128xf32>
    %151 = arith.addf %146, %150 : vector<8x16x128xf32>
    %c1_183 = arith.constant 1 : index
    %c0_184 = arith.constant 0 : index
    %c0_185 = arith.constant 0 : index
    %152 = vector.load %arg7[%c1_183, %c0_184, %c0_185] : memref<18x18x128xf32, #tpu.memory_space<vmem>>, vector<8x16x128xf32>
    %c3_186 = arith.constant 3 : index
    %c0_187 = arith.constant 0 : index
    %c0_188 = arith.constant 0 : index
    %153 = vector.load %arg4[%c3_186, %c0_187, %c0_188] : memref<9x128x128xf32, #tpu.memory_space<vmem>>, vector<1x128x128xf32>
    %154 = vector.shape_cast %153 : vector<1x128x128xf32> to vector<128x128xf32>
    %cst_189 = arith.constant dense<0.000000e+00> : vector<8x16x128xf32>
    %155 = tpu.matmul %152, %154, %cst_189 {dimension_numbers = #tpu.dot_dimension_numbers<[2], [0], [0, 1], [1], [0, 0, 0, 1, 1, 1], [], []>} : vector<8x16x128xf32>, vector<128x128xf32>, vector<8x16x128xf32> -> vector<8x16x128xf32>
    %156 = arith.addf %151, %155 : vector<8x16x128xf32>
    %c1_190 = arith.constant 1 : index
    %c1_191 = arith.constant 1 : index
    %c0_192 = arith.constant 0 : index
    %157 = vector.load %arg7[%c1_190, %c1_191, %c0_192] : memref<18x18x128xf32, #tpu.memory_space<vmem>>, vector<8x16x128xf32>
    %c4_193 = arith.constant 4 : index
    %c0_194 = arith.constant 0 : index
    %c0_195 = arith.constant 0 : index
    %158 = vector.load %arg4[%c4_193, %c0_194, %c0_195] : memref<9x128x128xf32, #tpu.memory_space<vmem>>, vector<1x128x128xf32>
    %159 = vector.shape_cast %158 : vector<1x128x128xf32> to vector<128x128xf32>
    %cst_196 = arith.constant dense<0.000000e+00> : vector<8x16x128xf32>
    %160 = tpu.matmul %157, %159, %cst_196 {dimension_numbers = #tpu.dot_dimension_numbers<[2], [0], [0, 1], [1], [0, 0, 0, 1, 1, 1], [], []>} : vector<8x16x128xf32>, vector<128x128xf32>, vector<8x16x128xf32> -> vector<8x16x128xf32>
    %161 = arith.addf %156, %160 : vector<8x16x128xf32>
    %c1_197 = arith.constant 1 : index
    %c2_198 = arith.constant 2 : index
    %c0_199 = arith.constant 0 : index
    %162 = vector.load %arg7[%c1_197, %c2_198, %c0_199] : memref<18x18x128xf32, #tpu.memory_space<vmem>>, vector<8x16x128xf32>
    %c5_200 = arith.constant 5 : index
    %c0_201 = arith.constant 0 : index
    %c0_202 = arith.constant 0 : index
    %163 = vector.load %arg4[%c5_200, %c0_201, %c0_202] : memref<9x128x128xf32, #tpu.memory_space<vmem>>, vector<1x128x128xf32>
    %164 = vector.shape_cast %163 : vector<1x128x128xf32> to vector<128x128xf32>
    %cst_203 = arith.constant dense<0.000000e+00> : vector<8x16x128xf32>
    %165 = tpu.matmul %162, %164, %cst_203 {dimension_numbers = #tpu.dot_dimension_numbers<[2], [0], [0, 1], [1], [0, 0, 0, 1, 1, 1], [], []>} : vector<8x16x128xf32>, vector<128x128xf32>, vector<8x16x128xf32> -> vector<8x16x128xf32>
    %166 = arith.addf %161, %165 : vector<8x16x128xf32>
    %c2_204 = arith.constant 2 : index
    %c0_205 = arith.constant 0 : index
    %c0_206 = arith.constant 0 : index
    %167 = vector.load %arg7[%c2_204, %c0_205, %c0_206] : memref<18x18x128xf32, #tpu.memory_space<vmem>>, vector<8x16x128xf32>
    %c6_207 = arith.constant 6 : index
    %c0_208 = arith.constant 0 : index
    %c0_209 = arith.constant 0 : index
    %168 = vector.load %arg4[%c6_207, %c0_208, %c0_209] : memref<9x128x128xf32, #tpu.memory_space<vmem>>, vector<1x128x128xf32>
    %169 = vector.shape_cast %168 : vector<1x128x128xf32> to vector<128x128xf32>
    %cst_210 = arith.constant dense<0.000000e+00> : vector<8x16x128xf32>
    %170 = tpu.matmul %167, %169, %cst_210 {dimension_numbers = #tpu.dot_dimension_numbers<[2], [0], [0, 1], [1], [0, 0, 0, 1, 1, 1], [], []>} : vector<8x16x128xf32>, vector<128x128xf32>, vector<8x16x128xf32> -> vector<8x16x128xf32>
    %171 = arith.addf %166, %170 : vector<8x16x128xf32>
    %c2_211 = arith.constant 2 : index
    %c1_212 = arith.constant 1 : index
    %c0_213 = arith.constant 0 : index
    %172 = vector.load %arg7[%c2_211, %c1_212, %c0_213] : memref<18x18x128xf32, #tpu.memory_space<vmem>>, vector<8x16x128xf32>
    %c7_214 = arith.constant 7 : index
    %c0_215 = arith.constant 0 : index
    %c0_216 = arith.constant 0 : index
    %173 = vector.load %arg4[%c7_214, %c0_215, %c0_216] : memref<9x128x128xf32, #tpu.memory_space<vmem>>, vector<1x128x128xf32>
    %174 = vector.shape_cast %173 : vector<1x128x128xf32> to vector<128x128xf32>
    %cst_217 = arith.constant dense<0.000000e+00> : vector<8x16x128xf32>
    %175 = tpu.matmul %172, %174, %cst_217 {dimension_numbers = #tpu.dot_dimension_numbers<[2], [0], [0, 1], [1], [0, 0, 0, 1, 1, 1], [], []>} : vector<8x16x128xf32>, vector<128x128xf32>, vector<8x16x128xf32> -> vector<8x16x128xf32>
    %176 = arith.addf %171, %175 : vector<8x16x128xf32>
    %c2_218 = arith.constant 2 : index
    %c2_219 = arith.constant 2 : index
    %c0_220 = arith.constant 0 : index
    %177 = vector.load %arg7[%c2_218, %c2_219, %c0_220] : memref<18x18x128xf32, #tpu.memory_space<vmem>>, vector<8x16x128xf32>
    %c8_221 = arith.constant 8 : index
    %c0_222 = arith.constant 0 : index
    %c0_223 = arith.constant 0 : index
    %178 = vector.load %arg4[%c8_221, %c0_222, %c0_223] : memref<9x128x128xf32, #tpu.memory_space<vmem>>, vector<1x128x128xf32>
    %179 = vector.shape_cast %178 : vector<1x128x128xf32> to vector<128x128xf32>
    %cst_224 = arith.constant dense<0.000000e+00> : vector<8x16x128xf32>
    %180 = tpu.matmul %177, %179, %cst_224 {dimension_numbers = #tpu.dot_dimension_numbers<[2], [0], [0, 1], [1], [0, 0, 0, 1, 1, 1], [], []>} : vector<8x16x128xf32>, vector<128x128xf32>, vector<8x16x128xf32> -> vector<8x16x128xf32>
    %181 = arith.addf %176, %180 : vector<8x16x128xf32>
    %182 = vector.broadcast %3 : vector<1x1x128xf32> to vector<8x16x128xf32>
    %183 = arith.addf %181, %182 : vector<8x16x128xf32>
    %c0_225 = arith.constant 0 : index
    %c1_226 = arith.constant 1 : index
    %c1_227 = arith.constant 1 : index
    %c0_228 = arith.constant 0 : index
    %184 = vector.load %arg1[%c0_225, %c1_226, %c1_227, %c0_228] : memref<1x18x18x128xf32, #tpu.memory_space<vmem>>, vector<1x8x16x128xf32>
    %185 = vector.shape_cast %184 : vector<1x8x16x128xf32> to vector<8x16x128xf32>
    %186 = arith.addf %185, %183 : vector<8x16x128xf32>
    %c0_229 = arith.constant 0 : index
    %c0_230 = arith.constant 0 : index
    %c0_231 = arith.constant 0 : index
    %c0_232 = arith.constant 0 : index
    %187 = vector.load %arg6[%c0_229, %c0_230, %c0_231, %c0_232] : memref<1x16x16x128xf32, #tpu.memory_space<vmem>>, vector<1x8x16x128xf32>
    %188 = vector.shape_cast %187 : vector<1x8x16x128xf32> to vector<8x16x128xf32>
    %189 = vector.shape_cast %186 : vector<8x16x128xf32> to vector<1x8x16x128xf32>
    tpu.vector_store %arg6[%c0_229, %c0_230, %c0_231, %c0_232], %189 {strides = array<i32>} : memref<1x16x16x128xf32, #tpu.memory_space<vmem>>, vector<1x8x16x128xf32>,
    %cst_233 = arith.constant 0.000000e+00 : f32
    %190 = vector.broadcast %cst_233 : f32 to vector<8x16x128xf32>
    %c8_234 = arith.constant 8 : index
    %c0_235 = arith.constant 0 : index
    %c0_236 = arith.constant 0 : index
    %191 = vector.load %arg7[%c8_234, %c0_235, %c0_236] : memref<18x18x128xf32, #tpu.memory_space<vmem>>, vector<8x16x128xf32>
    %c0_237 = arith.constant 0 : index
    %c0_238 = arith.constant 0 : index
    %c0_239 = arith.constant 0 : index
    %192 = vector.load %arg4[%c0_237, %c0_238, %c0_239] : memref<9x128x128xf32, #tpu.memory_space<vmem>>, vector<1x128x128xf32>
    %193 = vector.shape_cast %192 : vector<1x128x128xf32> to vector<128x128xf32>
    %cst_240 = arith.constant dense<0.000000e+00> : vector<8x16x128xf32>
    %194 = tpu.matmul %191, %193, %cst_240 {dimension_numbers = #tpu.dot_dimension_numbers<[2], [0], [0, 1], [1], [0, 0, 0, 1, 1, 1], [], []>} : vector<8x16x128xf32>, vector<128x128xf32>, vector<8x16x128xf32> -> vector<8x16x128xf32>
    %195 = arith.addf %190, %194 : vector<8x16x128xf32>
    %c8_241 = arith.constant 8 : index
    %c1_242 = arith.constant 1 : index
    %c0_243 = arith.constant 0 : index
    %196 = vector.load %arg7[%c8_241, %c1_242, %c0_243] : memref<18x18x128xf32, #tpu.memory_space<vmem>>, vector<8x16x128xf32>
    %c1_244 = arith.constant 1 : index
    %c0_245 = arith.constant 0 : index
    %c0_246 = arith.constant 0 : index
    %197 = vector.load %arg4[%c1_244, %c0_245, %c0_246] : memref<9x128x128xf32, #tpu.memory_space<vmem>>, vector<1x128x128xf32>
    %198 = vector.shape_cast %197 : vector<1x128x128xf32> to vector<128x128xf32>
    %cst_247 = arith.constant dense<0.000000e+00> : vector<8x16x128xf32>
    %199 = tpu.matmul %196, %198, %cst_247 {dimension_numbers = #tpu.dot_dimension_numbers<[2], [0], [0, 1], [1], [0, 0, 0, 1, 1, 1], [], []>} : vector<8x16x128xf32>, vector<128x128xf32>, vector<8x16x128xf32> -> vector<8x16x128xf32>
    %200 = arith.addf %195, %199 : vector<8x16x128xf32>
    %c8_248 = arith.constant 8 : index
    %c2_249 = arith.constant 2 : index
    %c0_250 = arith.constant 0 : index
    %201 = vector.load %arg7[%c8_248, %c2_249, %c0_250] : memref<18x18x128xf32, #tpu.memory_space<vmem>>, vector<8x16x128xf32>
    %c2_251 = arith.constant 2 : index
    %c0_252 = arith.constant 0 : index
    %c0_253 = arith.constant 0 : index
    %202 = vector.load %arg4[%c2_251, %c0_252, %c0_253] : memref<9x128x128xf32, #tpu.memory_space<vmem>>, vector<1x128x128xf32>
    %203 = vector.shape_cast %202 : vector<1x128x128xf32> to vector<128x128xf32>
    %cst_254 = arith.constant dense<0.000000e+00> : vector<8x16x128xf32>
    %204 = tpu.matmul %201, %203, %cst_254 {dimension_numbers = #tpu.dot_dimension_numbers<[2], [0], [0, 1], [1], [0, 0, 0, 1, 1, 1], [], []>} : vector<8x16x128xf32>, vector<128x128xf32>, vector<8x16x128xf32> -> vector<8x16x128xf32>
    %205 = arith.addf %200, %204 : vector<8x16x128xf32>
    %c9_255 = arith.constant 9 : index
    %c0_256 = arith.constant 0 : index
    %c0_257 = arith.constant 0 : index
    %206 = vector.load %arg7[%c9_255, %c0_256, %c0_257] : memref<18x18x128xf32, #tpu.memory_space<vmem>>, vector<8x16x128xf32>
    %c3_258 = arith.constant 3 : index
    %c0_259 = arith.constant 0 : index
    %c0_260 = arith.constant 0 : index
    %207 = vector.load %arg4[%c3_258, %c0_259, %c0_260] : memref<9x128x128xf32, #tpu.memory_space<vmem>>, vector<1x128x128xf32>
    %208 = vector.shape_cast %207 : vector<1x128x128xf32> to vector<128x128xf32>
    %cst_261 = arith.constant dense<0.000000e+00> : vector<8x16x128xf32>
    %209 = tpu.matmul %206, %208, %cst_261 {dimension_numbers = #tpu.dot_dimension_numbers<[2], [0], [0, 1], [1], [0, 0, 0, 1, 1, 1], [], []>} : vector<8x16x128xf32>, vector<128x128xf32>, vector<8x16x128xf32> -> vector<8x16x128xf32>
    %210 = arith.addf %205, %209 : vector<8x16x128xf32>
    %c9_262 = arith.constant 9 : index
    %c1_263 = arith.constant 1 : index
    %c0_264 = arith.constant 0 : index
    %211 = vector.load %arg7[%c9_262, %c1_263, %c0_264] : memref<18x18x128xf32, #tpu.memory_space<vmem>>, vector<8x16x128xf32>
    %c4_265 = arith.constant 4 : index
    %c0_266 = arith.constant 0 : index
    %c0_267 = arith.constant 0 : index
    %212 = vector.load %arg4[%c4_265, %c0_266, %c0_267] : memref<9x128x128xf32, #tpu.memory_space<vmem>>, vector<1x128x128xf32>
    %213 = vector.shape_cast %212 : vector<1x128x128xf32> to vector<128x128xf32>
    %cst_268 = arith.constant dense<0.000000e+00> : vector<8x16x128xf32>
    %214 = tpu.matmul %211, %213, %cst_268 {dimension_numbers = #tpu.dot_dimension_numbers<[2], [0], [0, 1], [1], [0, 0, 0, 1, 1, 1], [], []>} : vector<8x16x128xf32>, vector<128x128xf32>, vector<8x16x128xf32> -> vector<8x16x128xf32>
    %215 = arith.addf %210, %214 : vector<8x16x128xf32>
    %c9_269 = arith.constant 9 : index
    %c2_270 = arith.constant 2 : index
    %c0_271 = arith.constant 0 : index
    %216 = vector.load %arg7[%c9_269, %c2_270, %c0_271] : memref<18x18x128xf32, #tpu.memory_space<vmem>>, vector<8x16x128xf32>
    %c5_272 = arith.constant 5 : index
    %c0_273 = arith.constant 0 : index
    %c0_274 = arith.constant 0 : index
    %217 = vector.load %arg4[%c5_272, %c0_273, %c0_274] : memref<9x128x128xf32, #tpu.memory_space<vmem>>, vector<1x128x128xf32>
    %218 = vector.shape_cast %217 : vector<1x128x128xf32> to vector<128x128xf32>
    %cst_275 = arith.constant dense<0.000000e+00> : vector<8x16x128xf32>
    %219 = tpu.matmul %216, %218, %cst_275 {dimension_numbers = #tpu.dot_dimension_numbers<[2], [0], [0, 1], [1], [0, 0, 0, 1, 1, 1], [], []>} : vector<8x16x128xf32>, vector<128x128xf32>, vector<8x16x128xf32> -> vector<8x16x128xf32>
    %220 = arith.addf %215, %219 : vector<8x16x128xf32>
    %c10_276 = arith.constant 10 : index
    %c0_277 = arith.constant 0 : index
    %c0_278 = arith.constant 0 : index
    %221 = vector.load %arg7[%c10_276, %c0_277, %c0_278] : memref<18x18x128xf32, #tpu.memory_space<vmem>>, vector<8x16x128xf32>
    %c6_279 = arith.constant 6 : index
    %c0_280 = arith.constant 0 : index
    %c0_281 = arith.constant 0 : index
    %222 = vector.load %arg4[%c6_279, %c0_280, %c0_281] : memref<9x128x128xf32, #tpu.memory_space<vmem>>, vector<1x128x128xf32>
    %223 = vector.shape_cast %222 : vector<1x128x128xf32> to vector<128x128xf32>
    %cst_282 = arith.constant dense<0.000000e+00> : vector<8x16x128xf32>
    %224 = tpu.matmul %221, %223, %cst_282 {dimension_numbers = #tpu.dot_dimension_numbers<[2], [0], [0, 1], [1], [0, 0, 0, 1, 1, 1], [], []>} : vector<8x16x128xf32>, vector<128x128xf32>, vector<8x16x128xf32> -> vector<8x16x128xf32>
    %225 = arith.addf %220, %224 : vector<8x16x128xf32>
    %c10_283 = arith.constant 10 : index
    %c1_284 = arith.constant 1 : index
    %c0_285 = arith.constant 0 : index
    %226 = vector.load %arg7[%c10_283, %c1_284, %c0_285] : memref<18x18x128xf32, #tpu.memory_space<vmem>>, vector<8x16x128xf32>
    %c7_286 = arith.constant 7 : index
    %c0_287 = arith.constant 0 : index
    %c0_288 = arith.constant 0 : index
    %227 = vector.load %arg4[%c7_286, %c0_287, %c0_288] : memref<9x128x128xf32, #tpu.memory_space<vmem>>, vector<1x128x128xf32>
    %228 = vector.shape_cast %227 : vector<1x128x128xf32> to vector<128x128xf32>
    %cst_289 = arith.constant dense<0.000000e+00> : vector<8x16x128xf32>
    %229 = tpu.matmul %226, %228, %cst_289 {dimension_numbers = #tpu.dot_dimension_numbers<[2], [0], [0, 1], [1], [0, 0, 0, 1, 1, 1], [], []>} : vector<8x16x128xf32>, vector<128x128xf32>, vector<8x16x128xf32> -> vector<8x16x128xf32>
    %230 = arith.addf %225, %229 : vector<8x16x128xf32>
    %c10_290 = arith.constant 10 : index
    %c2_291 = arith.constant 2 : index
    %c0_292 = arith.constant 0 : index
    %231 = vector.load %arg7[%c10_290, %c2_291, %c0_292] : memref<18x18x128xf32, #tpu.memory_space<vmem>>, vector<8x16x128xf32>
    %c8_293 = arith.constant 8 : index
    %c0_294 = arith.constant 0 : index
    %c0_295 = arith.constant 0 : index
    %232 = vector.load %arg4[%c8_293, %c0_294, %c0_295] : memref<9x128x128xf32, #tpu.memory_space<vmem>>, vector<1x128x128xf32>
    %233 = vector.shape_cast %232 : vector<1x128x128xf32> to vector<128x128xf32>
    %cst_296 = arith.constant dense<0.000000e+00> : vector<8x16x128xf32>
    %234 = tpu.matmul %231, %233, %cst_296 {dimension_numbers = #tpu.dot_dimension_numbers<[2], [0], [0, 1], [1], [0, 0, 0, 1, 1, 1], [], []>} : vector<8x16x128xf32>, vector<128x128xf32>, vector<8x16x128xf32> -> vector<8x16x128xf32>
    %235 = arith.addf %230, %234 : vector<8x16x128xf32>
    %236 = vector.broadcast %3 : vector<1x1x128xf32> to vector<8x16x128xf32>
    %237 = arith.addf %235, %236 : vector<8x16x128xf32>
    %c0_297 = arith.constant 0 : index
    %c9_298 = arith.constant 9 : index
    %c1_299 = arith.constant 1 : index
    %c0_300 = arith.constant 0 : index
    %238 = vector.load %arg1[%c0_297, %c9_298, %c1_299, %c0_300] : memref<1x18x18x128xf32, #tpu.memory_space<vmem>>, vector<1x8x16x128xf32>
    %239 = vector.shape_cast %238 : vector<1x8x16x128xf32> to vector<8x16x128xf32>
    %240 = arith.addf %239, %237 : vector<8x16x128xf32>
    %c0_301 = arith.constant 0 : index
    %c8_302 = arith.constant 8 : index
    %c0_303 = arith.constant 0 : index
    %c0_304 = arith.constant 0 : index
    %241 = vector.load %arg6[%c0_301, %c8_302, %c0_303, %c0_304] : memref<1x16x16x128xf32, #tpu.memory_space<vmem>>, vector<1x8x16x128xf32>
    %242 = vector.shape_cast %241 : vector<1x8x16x128xf32> to vector<8x16x128xf32>
    %243 = vector.shape_cast %240 : vector<8x16x128xf32> to vector<1x8x16x128xf32>
    tpu.vector_store %arg6[%c0_301, %c8_302, %c0_303, %c0_304], %243 {strides = array<i32>} : memref<1x16x16x128xf32, #tpu.memory_space<vmem>>, vector<1x8x16x128xf32>,
    return
  }
  func.func @transform_0(%arg0: i32) -> (i32, i32, i32, i32) {
    %c0_i32 = arith.constant 0 : i32
    %c0_i32_0 = arith.constant 0 : i32
    %c0_i32_1 = arith.constant 0 : i32
    %c0_i32_2 = arith.constant 0 : i32
    return %arg0, %c0_i32, %c0_i32_0, %c0_i32_1 : i32, i32, i32, i32
  }
  func.func @transform_1(%arg0: i32) -> (i32, i32, i32) {
    %c0_i32 = arith.constant 0 : i32
    %c0_i32_0 = arith.constant 0 : i32
    %c0_i32_1 = arith.constant 0 : i32
    %c0_i32_2 = arith.constant 0 : i32
    return %c0_i32, %c0_i32_0, %c0_i32_1 : i32, i32, i32
  }
  func.func @transform_2(%arg0: i32) -> (i32, i32) {
    %c0_i32 = arith.constant 0 : i32
    %c0_i32_0 = arith.constant 0 : i32
    %c0_i32_1 = arith.constant 0 : i32
    return %c0_i32, %c0_i32_0 : i32, i32
  }
  func.func @transform_3(%arg0: i32) -> (i32, i32, i32) {
    %c0_i32 = arith.constant 0 : i32
    %c0_i32_0 = arith.constant 0 : i32
    %c0_i32_1 = arith.constant 0 : i32
    %c0_i32_2 = arith.constant 0 : i32
    return %c0_i32, %c0_i32_0, %c0_i32_1 : i32, i32, i32
  }
  func.func @transform_4(%arg0: i32) -> (i32, i32) {
    %c0_i32 = arith.constant 0 : i32
    %c0_i32_0 = arith.constant 0 : i32
    %c0_i32_1 = arith.constant 0 : i32
    return %c0_i32, %c0_i32_0 : i32, i32
  }
  func.func @transform_5(%arg0: i32) -> (i32, i32, i32, i32) {
    %c0_i32 = arith.constant 0 : i32
    %c0_i32_0 = arith.constant 0 : i32
    %c0_i32_1 = arith.constant 0 : i32
    %c0_i32_2 = arith.constant 0 : i32
    return %arg0, %c0_i32, %c0_i32_0, %c0_i32_1 : i32, i32, i32, i32
  }
}

</mosaic_0001>

<llo_original>
// kernel: tpu_custom_call.1
$region0: #{tpu_custom_call.1}
  #allocation0 [shape = 'u32[]', space=smem, size = 0x4, offset = 0x4, fixed_abs, tag = 'smem constant byte address 0x4 - core index']
  #allocation1 [shape = 'u32[72,128]{1,0:T(1,128)}', space=vmem, size = 0x9000, scoped, tag = 'internal scratch']
  #allocation2 [shape = 'f32[18,18,128]{2,1,0:T(8,128)}', space=vmem, size = 0x36000, scoped, tag = 'scratch operand']
  %s0 = inlined_call_operand.vmem [shape: f32[2,18,18,128], index: 0, kind: input, shape index: {}]
  %s1 = inlined_call_operand.vmem [shape: f32[9,128,128], index: 1, kind: input, shape index: {}]
  %s2 = inlined_call_operand.vmem [shape: f32[1,128], index: 2, kind: input, shape index: {}]
  %s3 = inlined_call_operand.hbm [shape: f32[9,128,128], index: 3, kind: input, shape index: {}]
  %s4 = inlined_call_operand.vmem [shape: f32[1,128], index: 4, kind: input, shape index: {}]
  %s5 = inlined_call_operand.hbm [shape: f32[2,16,16,128], index: 5, kind: output, shape index: {}]
  %s6 = sld [smem:[#allocation0]]
  $region57: #{tpu_custom_call.1} parent=0
    _
  %s8 = ssub.s32 1, %s6
  %s9 = scalar_select 0, %s8, %s6
  $region1: #{tpu_custom_call.1} parent=0
    #allocation3 [shape = 'u8[589824]{0}', space=vmem, size = 0x90000, scoped, tag = 'input window, operand 3, single buffered']
    #allocation4 [shape = 's32[2]{0}', space=sflag, size = 0x8, scoped, tag = 'scoped memory for tpu_custom_call.1']
    #allocation5 [shape = 's32[2]{0}', space=sflag, size = 0x8, scoped, tag = 'scoped memory for tpu_custom_call.1']
    #allocation6 [shape = 'u8[262144]{0}', space=vmem, size = 0x40000, scoped, tag = 'output window, operand 0']
    %10 = vsyncpa [#allocation4], 0
    %11 = vsyncpa [#allocation5], 0
    %s12 = scalar_lea.sflag [#allocation5], 1
    %13 = vsyncpa %s12, 0
    loop: start=0, step=1, limit=4
    $region2: #{tpu_custom_call.1} parent=1 // loop_pre_header
      _
    $region3: #{tpu_custom_call.1} parent=1 // loop_header
      %s15 = sphi 0, %s19
      %p16 = scmp.ge.s32.totalorder %s15, 4
      %s25 = sphi 0, %s27
      %s28 = sphi 0, %s25
      %s29 = sphi 0, %s28
      %s45 = sphi 0, %s29
      %s49 = sphi 0, %s49
      %s51 = sphi 0, %s49
      %s52 = sphi 0, %s51
      %s66 = sphi 0, %s52
      %s70 = sphi 0, %s70
      %s72 = sphi 0, %s70
      %s73 = sphi 0, %s72
      %s87 = sphi 0, %s73
      %s91 = sphi 0, %s91
      %s93 = sphi 0, %s91
      %s94 = sphi 0, %s93
      %s108 = sphi 0, %s94
      %s112 = sphi 0, %s112
      %s114 = sphi 0, %s112
      %s115 = sphi 0, %s114
      %s129 = sphi 0, %s115
      %s135 = sphi 0, %s137
      %s138 = sphi 0, %s135
      %s139 = sphi 0, %s138
      %s155 = sphi 0, %s139
    $region4: #{tpu_custom_call.1} parent=1 // loop_header_branch
      %18 = sbr.rel (%p16) target = $region8
    $region5: #{tpu_custom_call.1} parent=1 // loop_body
      %s20 = ssub.s32 %s15, 1
      %s21 = ssub.s32 %s15, 2
      %s22 = sadd.s32 %s15, 1
      %s23 = ssub.s32 %s15, %s22
      %p24 = scmp.eq.s32.totalorder %s23, 0
      %s26 = sadd.s32 %s25, 1
      %s27 = scalar_select %p24, %s25, %s26
      %p30 = pneg %p24
      %p31 = scmp.eq.s32.totalorder %s15, 1
      %p32 = por %p30, %p31
      %p33 = scmp.ne.s32.totalorder %s25, %s28
      %p34 = scmp.eq.s32.totalorder %s15, 0
      %p35 = por %p33, %p34
      %p36 = scmp.ne.s32.totalorder %s25, %s28
      %p37 = scmp.eq.s32.totalorder %s20, 1
      %p38 = por %p36, %p37
      %p39 = scmp.ne.s32.totalorder %s28, %s29
      %p40 = scmp.eq.s32.totalorder %s20, 0
      %p41 = por %p39, %p40
      %p42 = scmp.ne.s32.totalorder %s28, %s29
      %p43 = scmp.eq.s32.totalorder %s21, 1
      %p44 = por %p42, %p43
      %p46 = scmp.ne.s32.totalorder %s29, %s45
      %p47 = scmp.eq.s32.totalorder %s21, 0
      %p48 = por %p46, %p47
      %s50 = sadd.s32 %s49, 1
      %p53 = scmp.eq.s32.totalorder %s15, 1
      %p54 = scmp.ne.s32.totalorder %s49, %s51
      %p55 = scmp.eq.s32.totalorder %s15, 0
      %p56 = por %p54, %p55
      %p57 = scmp.ne.s32.totalorder %s49, %s51
      %p58 = scmp.eq.s32.totalorder %s20, 1
      %p59 = por %p57, %p58
      %p60 = scmp.ne.s32.totalorder %s51, %s52
      %p61 = scmp.eq.s32.totalorder %s20, 0
      %p62 = por %p60, %p61
      %p63 = scmp.ne.s32.totalorder %s51, %s52
      %p64 = scmp.eq.s32.totalorder %s21, 1
      %p65 = por %p63, %p64
      %p67 = scmp.ne.s32.totalorder %s52, %s66
      %p68 = scmp.eq.s32.totalorder %s21, 0
      %p69 = por %p67, %p68
      %s71 = sadd.s32 %s70, 1
      %p74 = scmp.eq.s32.totalorder %s15, 1
      %p75 = scmp.ne.s32.totalorder %s70, %s72
      %p76 = scmp.eq.s32.totalorder %s15, 0
      %p77 = por %p75, %p76
      %p78 = scmp.ne.s32.totalorder %s70, %s72
      %p79 = scmp.eq.s32.totalorder %s20, 1
      %p80 = por %p78, %p79
      %p81 = scmp.ne.s32.totalorder %s72, %s73
      %p82 = scmp.eq.s32.totalorder %s20, 0
      %p83 = por %p81, %p82
      %p84 = scmp.ne.s32.totalorder %s72, %s73
      %p85 = scmp.eq.s32.totalorder %s21, 1
      %p86 = por %p84, %p85
      %p88 = scmp.ne.s32.totalorder %s73, %s87
      %p89 = scmp.eq.s32.totalorder %s21, 0
      %p90 = por %p88, %p89
      %s92 = sadd.s32 %s91, 1
      %p95 = scmp.eq.s32.totalorder %s15, 1
      %p96 = scmp.ne.s32.totalorder %s91, %s93
      %p97 = scmp.eq.s32.totalorder %s15, 0
      %p98 = por %p96, %p97
      %p99 = scmp.ne.s32.totalorder %s91, %s93
      %p100 = scmp.eq.s32.totalorder %s20, 1
      %p101 = por %p99, %p100
      %p102 = scmp.ne.s32.totalorder %s93, %s94
      %p103 = scmp.eq.s32.totalorder %s20, 0
      %p104 = por %p102, %p103
      %p105 = scmp.ne.s32.totalorder %s93, %s94
      %p106 = scmp.eq.s32.totalorder %s21, 1
      %p107 = por %p105, %p106
      %p109 = scmp.ne.s32.totalorder %s94, %s108
      %p110 = scmp.eq.s32.totalorder %s21, 0
      %p111 = por %p109, %p110
      %s113 = sadd.s32 %s112, 1
      %p116 = scmp.eq.s32.totalorder %s15, 1
      %p117 = scmp.ne.s32.totalorder %s112, %s114
      %p118 = scmp.eq.s32.totalorder %s15, 0
      %p119 = por %p117, %p118
      %p120 = scmp.ne.s32.totalorder %s112, %s114
      %p121 = scmp.eq.s32.totalorder %s20, 1
      %p122 = por %p120, %p121
      %p123 = scmp.ne.s32.totalorder %s114, %s115
      %p124 = scmp.eq.s32.totalorder %s20, 0
      %p125 = por %p123, %p124
      %p126 = scmp.ne.s32.totalorder %s114, %s115
      %p127 = scmp.eq.s32.totalorder %s21, 1
      %p128 = por %p126, %p127
      %p130 = scmp.ne.s32.totalorder %s115, %s129
      %p131 = scmp.eq.s32.totalorder %s21, 0
      %p132 = por %p130, %p131
      %s133 = ssub.s32 %s15, %s22
      %p134 = scmp.eq.s32.totalorder %s133, 0
      %s136 = sadd.s32 %s135, 1
      %s137 = scalar_select %p134, %s135, %s136
      %p140 = pneg %p134
      %p141 = scmp.eq.s32.totalorder %s15, 1
      %p142 = por %p140, %p141
      %p143 = scmp.ne.s32.totalorder %s135, %s138
      %p144 = scmp.eq.s32.totalorder %s15, 0
      %p145 = por %p143, %p144
      %p146 = scmp.ne.s32.totalorder %s135, %s138
      %p147 = scmp.eq.s32.totalorder %s20, 1
      %p148 = por %p146, %p147
      %p149 = scmp.ne.s32.totalorder %s138, %s139
      %p150 = scmp.eq.s32.totalorder %s20, 0
      %p151 = por %p149, %p150
      %p152 = scmp.ne.s32.totalorder %s138, %s139
      %p153 = scmp.eq.s32.totalorder %s21, 1
      %p154 = por %p152, %p153
      %p156 = scmp.ne.s32.totalorder %s139, %s155
      %p157 = scmp.eq.s32.totalorder %s21, 0
      %p158 = por %p156, %p157
      %p159 = scmp.le.s32.totalorder 1, %s15
      %p160 = scmp.lt.s32.totalorder %s15, 3
      %p161 = pnand %p159, %p160
      %p162 = pneg %p161
      // Predicated region
      $region9: #{tpu_custom_call.1} parent=5 // pred_check
        _
      $region10: #{tpu_custom_call.1} parent=5 // pred_check_branch
        %164 = sbr.rel (%p161) target = $region12
      $region11: #{tpu_custom_call.1} parent=5 // pred_region
        %s165 = ssub.s32 %s15, 1
        // Predicated region
        $region13: #{tpu_custom_call.1} parent=11 // pred_check
          %p166 = pneg %p62
        $region14: #{tpu_custom_call.1} parent=11 // pred_check_branch
          %168 = sbr.rel (%p166) target = $region16
        $region15: #{tpu_custom_call.1} parent=11 // pred_region
          _
        $region16: #{tpu_custom_call.1} parent=11 // pred_fallthru
          _
        // Predicated region
        $region17: #{tpu_custom_call.1} parent=11 // pred_check
          %p169 = pneg %p83
        $region18: #{tpu_custom_call.1} parent=11 // pred_check_branch
          %171 = sbr.rel (%p169) target = $region20
        $region19: #{tpu_custom_call.1} parent=11 // pred_region
          _
        $region20: #{tpu_custom_call.1} parent=11 // pred_fallthru
          _
        // Predicated region
        $region21: #{tpu_custom_call.1} parent=11 // pred_check
          %p172 = pneg %p104
        $region22: #{tpu_custom_call.1} parent=11 // pred_check_branch
          %174 = sbr.rel (%p172) target = $region24
        $region23: #{tpu_custom_call.1} parent=11 // pred_region
          %176 = vsyncadd [#allocation4], 0
          %s177 = sshll.u32 %s3, 4
          %s178 = int_to_ptr.hbm [resolvable:$true] %s177
          %s179 = sshll.u32 [#allocation3], 4
          %s180 = int_to_ptr.vmem [resolvable:$true] %s179
          %185 = dma.hbm_to_vmem [thread:$0]  %s178, 18432, %s180, [#allocation4], 128, 128, 8
        $region24: #{tpu_custom_call.1} parent=11 // pred_fallthru
          _
        // Predicated region
        $region25: #{tpu_custom_call.1} parent=11 // pred_check
          %p186 = pneg %p125
        $region26: #{tpu_custom_call.1} parent=11 // pred_check_branch
          %188 = sbr.rel (%p186) target = $region28
        $region27: #{tpu_custom_call.1} parent=11 // pred_region
          _
        $region28: #{tpu_custom_call.1} parent=11 // pred_fallthru
          _
      $region12: #{tpu_custom_call.1} parent=5 // pred_fallthru
        _
      %p189 = scmp.lt.s32.totalorder %s15, 2
      // Predicated region
      $region29: #{tpu_custom_call.1} parent=5 // pred_check
        %p190 = pneg %p189
      $region30: #{tpu_custom_call.1} parent=5 // pred_check_branch
        %192 = sbr.rel (%p190) target = $region32
      $region31: #{tpu_custom_call.1} parent=5 // pred_region
        // Predicated region
        $region33: #{tpu_custom_call.1} parent=31 // pred_check
          %p193 = pneg %p35
        $region34: #{tpu_custom_call.1} parent=31 // pred_check_branch
          %195 = sbr.rel (%p193) target = $region36
        $region35: #{tpu_custom_call.1} parent=31 // pred_region
          %p196 = scmp.lt.s32.totalorder %s15, 1
          %s197 = scalar_select %p196, %s15, 1
          %s198 = smul.addr %s197, 54
          %s199 = smul.addr %s198, 8
          %s200 = scalar_lea.vmem %s0, %s199
        $region36: #{tpu_custom_call.1} parent=31 // pred_fallthru
          _
      $region32: #{tpu_custom_call.1} parent=5 // pred_fallthru
        _
      %p201 = scmp.le.s32.totalorder 1, %s15
      %p202 = scmp.lt.s32.totalorder %s15, 3
      %p203 = pnand %p201, %p202
      %p204 = pneg %p203
      // Predicated region
      $region37: #{tpu_custom_call.1} parent=5 // pred_check
        _
      $region38: #{tpu_custom_call.1} parent=5 // pred_check_branch
        %206 = sbr.rel (%p203) target = $region40
      $region39: #{tpu_custom_call.1} parent=5 // pred_region
        %s207 = ssub.s32 %s15, 1
        // Predicated region
        $region41: #{tpu_custom_call.1} parent=39 // pred_check
          %p208 = pneg %p104
        $region42: #{tpu_custom_call.1} parent=39 // pred_check_branch
          %210 = sbr.rel (%p208) target = $region44
        $region43: #{tpu_custom_call.1} parent=39 // pred_region
          %212 = dma.done [#allocation4], 18432
        $region44: #{tpu_custom_call.1} parent=39 // pred_fallthru
          _
        %p213 = scmp.lt.s32.totalorder %s20, 1
        %s214 = scalar_select %p213, %s20, 1
        %s215 = smul.addr %s214, 54
        %s216 = smul.addr %s215, 8
        %s217 = scalar_lea.vmem %s0, %s216
        %p218 = pneg %p41
        %p219 = pneg %p38
        %p220 = pneg %p62
        %p221 = pneg %p59
        %p222 = pneg %p83
        %p223 = pneg %p80
        %p224 = pneg %p104
        %p225 = pneg %p101
        %p226 = pneg %p125
        %p227 = pneg %p122
        %p228 = pneg %p151
        %p229 = pneg %p148
        %s230 = sand.u32 %s138, 1
        %s231 = scalar_lea.sflag [#allocation5], %s230
        %s232 = sand.u32 %s138, 1
        %s233 = smul.addr %s232, 256
        %s234 = scalar_lea.vmem [#allocation6], %s233
        %p235 = scmp.lt.s32.totalorder %s20, 1
        %s236 = scalar_select %p235, %s20, 1
        %s237 = smul.addr %s236, 54
        %s238 = smul.addr %s237, 8
        %s239 = scalar_lea.vmem %s0, %s238
        %v240 = vld [vmem:[%s2] sm:$0x1]
        %v241 = vld [vmem:[%s4] sm:$0x1]
        %242 = vst [vmem:[#allocation2] sm:$0xff] 0.0
        %243 = vst [vmem:[#allocation2 + $0x8] sm:$0xff] 0.0
        %244 = vst [vmem:[#allocation2 + $0x10] sm:$0x3] 0.0
        %s245 = scalar_lea.vmem [#allocation2], 408
        %246 = vst [vmem:[%s245] sm:$0xff] 0.0
        %247 = vst [vmem:[%s245 + $0x8] sm:$0xff] 0.0
        %248 = vst [vmem:[%s245 + $0x10] sm:$0x3] 0.0
        %249 = vst [vmem:[#allocation2] sm:$0x1] 0.0
        %250 = vst [vmem:[#allocation2 + $0x18] sm:$0x1] 0.0
        %251 = vst [vmem:[#allocation2 + $0x30] sm:$0x1] 0.0
        %252 = vst [vmem:[#allocation2 + $0x48] sm:$0x1] 0.0
        %253 = vst [vmem:[#allocation2 + $0x60] sm:$0x1] 0.0
        %254 = vst [vmem:[#allocation2 + $0x78] sm:$0x1] 0.0
        %255 = vst [vmem:[#allocation2 + $0x90] sm:$0x1] 0.0
        %256 = vst [vmem:[#allocation2 + $0xa8] sm:$0x1] 0.0
        %257 = vst [vmem:[#allocation2 + $0xc0] sm:$0x1] 0.0
        %258 = vst [vmem:[#allocation2 + $0xd8] sm:$0x1] 0.0
        %259 = vst [vmem:[#allocation2 + $0xf0] sm:$0x1] 0.0
        %260 = vst [vmem:[#allocation2 + $0x108] sm:$0x1] 0.0
        %261 = vst [vmem:[#allocation2 + $0x120] sm:$0x1] 0.0
        %262 = vst [vmem:[#allocation2 + $0x138] sm:$0x1] 0.0
        %263 = vst [vmem:[#allocation2 + $0x150] sm:$0x1] 0.0
        %264 = vst [vmem:[#allocation2 + $0x168] sm:$0x1] 0.0
        %265 = vst [vmem:[#allocation2 + $0x180] sm:$0x1] 0.0
        %266 = vst [vmem:[#allocation2 + $0x198] sm:$0x1] 0.0
        %267 = vst [vmem:[#allocation2 + $0x11] sm:$0x1] 0.0
        %268 = vst [vmem:[#allocation2 + $0x29] sm:$0x1] 0.0
        %269 = vst [vmem:[#allocation2 + $0x41] sm:$0x1] 0.0
        %270 = vst [vmem:[#allocation2 + $0x59] sm:$0x1] 0.0
        %271 = vst [vmem:[#allocation2 + $0x71] sm:$0x1] 0.0
        %272 = vst [vmem:[#allocation2 + $0x89] sm:$0x1] 0.0
        %273 = vst [vmem:[#allocation2 + $0xa1] sm:$0x1] 0.0
        %274 = vst [vmem:[#allocation2 + $0xb9] sm:$0x1] 0.0
        %275 = vst [vmem:[#allocation2 + $0xd1] sm:$0x1] 0.0
        %276 = vst [vmem:[#allocation2 + $0xe9] sm:$0x1] 0.0
        %277 = vst [vmem:[#allocation2 + $0x101] sm:$0x1] 0.0
        %278 = vst [vmem:[#allocation2 + $0x119] sm:$0x1] 0.0
        %279 = vst [vmem:[#allocation2 + $0x131] sm:$0x1] 0.0
        %280 = vst [vmem:[#allocation2 + $0x149] sm:$0x1] 0.0
        %281 = vst [vmem:[#allocation2 + $0x161] sm:$0x1] 0.0
        %282 = vst [vmem:[#allocation2 + $0x179] sm:$0x1] 0.0
        %283 = vst [vmem:[#allocation2 + $0x191] sm:$0x1] 0.0
        %284 = vst [vmem:[#allocation2 + $0x1a9] sm:$0x1] 0.0
        %v285 = vld [vmem:[%s239] sm:$0xff]
        %v286 = vld [vmem:[%s239 + $0x8] sm:$0xff]
        %v287 = vld [vmem:[%s239 + $0x18] sm:$0xff]
        %v288 = vld [vmem:[%s239 + $0x20] sm:$0xff]
        %v289 = vld [vmem:[%s239 + $0x30] sm:$0xff]
        %v290 = vld [vmem:[%s239 + $0x38] sm:$0xff]
        %v291 = vld [vmem:[%s239 + $0x48] sm:$0xff]
        %v292 = vld [vmem:[%s239 + $0x50] sm:$0xff]
        %v293 = vld [vmem:[%s239 + $0x60] sm:$0xff]
        %v294 = vld [vmem:[%s239 + $0x68] sm:$0xff]
        %v295 = vld [vmem:[%s239 + $0x78] sm:$0xff]
        %v296 = vld [vmem:[%s239 + $0x80] sm:$0xff]
        %v297 = vld [vmem:[%s239 + $0x90] sm:$0xff]
        %v298 = vld [vmem:[%s239 + $0x98] sm:$0xff]
        %v299 = vld [vmem:[%s239 + $0xa8] sm:$0xff]
        %v300 = vld [vmem:[%s239 + $0xb0] sm:$0xff]
        %v301 = vld [vmem:[%s1] sm:$0xff]
        %v302 = vld [vmem:[%s1 + $0x8] sm:$0xff]
        %v303 = vld [vmem:[%s1 + $0x10] sm:$0xff]
        %v304 = vld [vmem:[%s1 + $0x18] sm:$0xff]
        %v305 = vld [vmem:[%s1 + $0x20] sm:$0xff]
        %v306 = vld [vmem:[%s1 + $0x28] sm:$0xff]
        %v307 = vld [vmem:[%s1 + $0x30] sm:$0xff]
        %v308 = vld [vmem:[%s1 + $0x38] sm:$0xff]
        %v309 = vld [vmem:[%s1 + $0x40] sm:$0xff]
        %v310 = vld [vmem:[%s1 + $0x48] sm:$0xff]
        %v311 = vld [vmem:[%s1 + $0x50] sm:$0xff]
        %v312 = vld [vmem:[%s1 + $0x58] sm:$0xff]
        %v313 = vld [vmem:[%s1 + $0x60] sm:$0xff]
        %v314 = vld [vmem:[%s1 + $0x68] sm:$0xff]
        %v315 = vld [vmem:[%s1 + $0x70] sm:$0xff]
        %v316 = vld [vmem:[%s1 + $0x78] sm:$0xff]
        %v317 = vld [vmem:[%s239 + $0x1] sm:$0xff]
        %v318 = vld [vmem:[%s239 + $0x9] sm:$0xff]
        %v319 = vld [vmem:[%s239 + $0x19] sm:$0xff]
        %v320 = vld [vmem:[%s239 + $0x21] sm:$0xff]
        %v321 = vld [vmem:[%s239 + $0x31] sm:$0xff]
        %v322 = vld [vmem:[%s239 + $0x39] sm:$0xff]
        %v323 = vld [vmem:[%s239 + $0x49] sm:$0xff]
        %v324 = vld [vmem:[%s239 + $0x51] sm:$0xff]
        %v325 = vld [vmem:[%s239 + $0x61] sm:$0xff]
        %v326 = vld [vmem:[%s239 + $0x69] sm:$0xff]
        %v327 = vld [vmem:[%s239 + $0x79] sm:$0xff]
        %v328 = vld [vmem:[%s239 + $0x81] sm:$0xff]
        %v329 = vld [vmem:[%s239 + $0x91] sm:$0xff]
        %v330 = vld [vmem:[%s239 + $0x99] sm:$0xff]
        %v331 = vld [vmem:[%s239 + $0xa9] sm:$0xff]
        %v332 = vld [vmem:[%s239 + $0xb1] sm:$0xff]
        %s333 = scalar_lea.vmem %s1, 128
        %v334 = vld [vmem:[%s333] sm:$0xff]
        %v335 = vld [vmem:[%s333 + $0x8] sm:$0xff]
        %v336 = vld [vmem:[%s333 + $0x10] sm:$0xff]
        %v337 = vld [vmem:[%s333 + $0x18] sm:$0xff]
        %v338 = vld [vmem:[%s333 + $0x20] sm:$0xff]
        %v339 = vld [vmem:[%s333 + $0x28] sm:$0xff]
        %v340 = vld [vmem:[%s333 + $0x30] sm:$0xff]
        %v341 = vld [vmem:[%s333 + $0x38] sm:$0xff]
        %v342 = vld [vmem:[%s333 + $0x40] sm:$0xff]
        %v343 = vld [vmem:[%s333 + $0x48] sm:$0xff]
        %v344 = vld [vmem:[%s333 + $0x50] sm:$0xff]
        %v345 = vld [vmem:[%s333 + $0x58] sm:$0xff]
        %v346 = vld [vmem:[%s333 + $0x60] sm:$0xff]
        %v347 = vld [vmem:[%s333 + $0x68] sm:$0xff]
        %v348 = vld [vmem:[%s333 + $0x70] sm:$0xff]
        %v349 = vld [vmem:[%s333 + $0x78] sm:$0xff]
        %350 = vmatpush.msra.mxu0 %v349
        %351 = vmatpush.msra.mxu0 %v348
        %352 = vmatpush.msra.mxu0 %v347
        %353 = vmatpush.msra.mxu0 %v346
        %354 = vmatpush.msra.mxu0 %v345
        %355 = vmatpush.msra.mxu0 %v344
        %356 = vmatpush.msra.mxu0 %v343
        %357 = vmatpush.msra.mxu0 %v342
        %358 = vmatpush.msra.mxu0 %v341
        %359 = vmatpush.msra.mxu0 %v340
        %360 = vmatpush.msra.mxu0 %v339
        %361 = vmatpush.msra.mxu0 %v338
        %362 = vmatpush.msra.mxu0 %v337
        %363 = vmatpush.msra.mxu0 %v336
        %364 = vmatpush.msra.mxu0 %v335
        %365 = vmatpush.msra.mxu0 %v334
        %366 = vmatmul.f32.gmra.mxu0 %v317
        %v367 = vpop.f32.mrf.mxu0
        %v368 = vadd.f32 0.0, %v367
        %369 = vmatmul.f32.gmra.mxu0 %v318
        %v370 = vpop.f32.mrf.mxu0
        %v371 = vadd.f32 0.0, %v370
        %372 = vmatmul.f32.gmra.mxu0 %v319
        %v373 = vpop.f32.mrf.mxu0
        %v374 = vadd.f32 0.0, %v373
        %375 = vmatmul.f32.gmra.mxu0 %v320
        %v376 = vpop.f32.mrf.mxu0
        %v377 = vadd.f32 0.0, %v376
        %378 = vmatmul.f32.gmra.mxu0 %v321
        %v379 = vpop.f32.mrf.mxu0
        %v380 = vadd.f32 0.0, %v379
        %381 = vmatmul.f32.gmra.mxu0 %v322
        %v382 = vpop.f32.mrf.mxu0
        %v383 = vadd.f32 0.0, %v382
        %384 = vmatmul.f32.gmra.mxu0 %v323
        %v385 = vpop.f32.mrf.mxu0
        %v386 = vadd.f32 0.0, %v385
        %387 = vmatmul.f32.gmra.mxu0 %v324
        %v388 = vpop.f32.mrf.mxu0
        %v389 = vadd.f32 0.0, %v388
        %390 = vmatmul.f32.gmra.mxu0 %v325
        %v391 = vpop.f32.mrf.mxu0
        %v392 = vadd.f32 0.0, %v391
        %393 = vmatmul.f32.gmra.mxu0 %v326
        %v394 = vpop.f32.mrf.mxu0
        %v395 = vadd.f32 0.0, %v394
        %396 = vmatmul.f32.gmra.mxu0 %v327
        %v397 = vpop.f32.mrf.mxu0
        %v398 = vadd.f32 0.0, %v397
        %399 = vmatmul.f32.gmra.mxu0 %v328
        %v400 = vpop.f32.mrf.mxu0
        %v401 = vadd.f32 0.0, %v400
        %402 = vmatmul.f32.gmra.mxu0 %v329
        %v403 = vpop.f32.mrf.mxu0
        %v404 = vadd.f32 0.0, %v403
        %405 = vmatmul.f32.gmra.mxu0 %v330
        %v406 = vpop.f32.mrf.mxu0
        %v407 = vadd.f32 0.0, %v406
        %408 = vmatmul.f32.gmra.mxu0 %v331
        %v409 = vpop.f32.mrf.mxu0
        %v410 = vadd.f32 0.0, %v409
        %411 = vmatmul.f32.gmra.mxu0 %v332
        %v412 = vpop.f32.mrf.mxu0
        %v413 = vadd.f32 0.0, %v412
        %414 = vdwg.mxu0
        %415 = vmatpush.msra.mxu0 %v316
        %416 = vmatpush.msra.mxu0 %v315
        %417 = vmatpush.msra.mxu0 %v314
        %418 = vmatpush.msra.mxu0 %v313
        %419 = vmatpush.msra.mxu0 %v312
        %420 = vmatpush.msra.mxu0 %v311
        %421 = vmatpush.msra.mxu0 %v310
        %422 = vmatpush.msra.mxu0 %v309
        %423 = vmatpush.msra.mxu0 %v308
        %424 = vmatpush.msra.mxu0 %v307
        %425 = vmatpush.msra.mxu0 %v306
        %426 = vmatpush.msra.mxu0 %v305
        %427 = vmatpush.msra.mxu0 %v304
        %428 = vmatpush.msra.mxu0 %v303
        %429 = vmatpush.msra.mxu0 %v302
        %430 = vmatpush.msra.mxu0 %v301
        %431 = vmatmul.f32.gmra.mxu0 %v285
        %v432 = vpop.f32.mrf.mxu0
        %v433 = vadd.f32 %v368, %v432
        %434 = vmatmul.f32.gmra.mxu0 %v286
        %v435 = vpop.f32.mrf.mxu0
        %v436 = vadd.f32 %v371, %v435
        %437 = vmatmul.f32.gmra.mxu0 %v287
        %v438 = vpop.f32.mrf.mxu0
        %v439 = vadd.f32 %v374, %v438
        %440 = vmatmul.f32.gmra.mxu0 %v288
        %v441 = vpop.f32.mrf.mxu0
        %v442 = vadd.f32 %v377, %v441
        %443 = vmatmul.f32.gmra.mxu0 %v289
        %v444 = vpop.f32.mrf.mxu0
        %v445 = vadd.f32 %v380, %v444
        %446 = vmatmul.f32.gmra.mxu0 %v290
        %v447 = vpop.f32.mrf.mxu0
        %v448 = vadd.f32 %v383, %v447
        %449 = vmatmul.f32.gmra.mxu0 %v291
        %v450 = vpop.f32.mrf.mxu0
        %v451 = vadd.f32 %v386, %v450
        %452 = vmatmul.f32.gmra.mxu0 %v292
        %v453 = vpop.f32.mrf.mxu0
        %v454 = vadd.f32 %v389, %v453
        %455 = vmatmul.f32.gmra.mxu0 %v293
        %v456 = vpop.f32.mrf.mxu0
        %v457 = vadd.f32 %v392, %v456
        %458 = vmatmul.f32.gmra.mxu0 %v294
        %v459 = vpop.f32.mrf.mxu0
        %v460 = vadd.f32 %v395, %v459
        %461 = vmatmul.f32.gmra.mxu0 %v295
        %v462 = vpop.f32.mrf.mxu0
        %v463 = vadd.f32 %v398, %v462
        %464 = vmatmul.f32.gmra.mxu0 %v296
        %v465 = vpop.f32.mrf.mxu0
        %v466 = vadd.f32 %v401, %v465
        %467 = vmatmul.f32.gmra.mxu0 %v297
        %v468 = vpop.f32.mrf.mxu0
        %v469 = vadd.f32 %v404, %v468
        %470 = vmatmul.f32.gmra.mxu0 %v298
        %v471 = vpop.f32.mrf.mxu0
        %v472 = vadd.f32 %v407, %v471
        %473 = vmatmul.f32.gmra.mxu0 %v299
        %v474 = vpop.f32.mrf.mxu0
        %v475 = vadd.f32 %v410, %v474
        %476 = vmatmul.f32.gmra.mxu0 %v300
        %v477 = vpop.f32.mrf.mxu0
        %v478 = vadd.f32 %v413, %v477
        %479 = vdwg.mxu0
        %v480 = vld [vmem:[%s239 + $0x2] sm:$0xff]
        %v481 = vld [vmem:[%s239 + $0xa] sm:$0xff]
        %v482 = vld [vmem:[%s239 + $0x1a] sm:$0xff]
        %v483 = vld [vmem:[%s239 + $0x22] sm:$0xff]
        %v484 = vld [vmem:[%s239 + $0x32] sm:$0xff]
        %v485 = vld [vmem:[%s239 + $0x3a] sm:$0xff]
        %v486 = vld [vmem:[%s239 + $0x4a] sm:$0xff]
        %v487 = vld [vmem:[%s239 + $0x52] sm:$0xff]
        %v488 = vld [vmem:[%s239 + $0x62] sm:$0xff]
        %v489 = vld [vmem:[%s239 + $0x6a] sm:$0xff]
        %v490 = vld [vmem:[%s239 + $0x7a] sm:$0xff]
        %v491 = vld [vmem:[%s239 + $0x82] sm:$0xff]
        %v492 = vld [vmem:[%s239 + $0x92] sm:$0xff]
        %v493 = vld [vmem:[%s239 + $0x9a] sm:$0xff]
        %v494 = vld [vmem:[%s239 + $0xaa] sm:$0xff]
        %v495 = vld [vmem:[%s239 + $0xb2] sm:$0xff]
        %s496 = scalar_lea.vmem %s1, 256
        %v497 = vld [vmem:[%s496] sm:$0xff]
        %v498 = vld [vmem:[%s496 + $0x8] sm:$0xff]
        %v499 = vld [vmem:[%s496 + $0x10] sm:$0xff]
        %v500 = vld [vmem:[%s496 + $0x18] sm:$0xff]
        %v501 = vld [vmem:[%s496 + $0x20] sm:$0xff]
        %v502 = vld [vmem:[%s496 + $0x28] sm:$0xff]
        %v503 = vld [vmem:[%s496 + $0x30] sm:$0xff]
        %v504 = vld [vmem:[%s496 + $0x38] sm:$0xff]
        %v505 = vld [vmem:[%s496 + $0x40] sm:$0xff]
        %v506 = vld [vmem:[%s496 + $0x48] sm:$0xff]
        %v507 = vld [vmem:[%s496 + $0x50] sm:$0xff]
        %v508 = vld [vmem:[%s496 + $0x58] sm:$0xff]
        %v509 = vld [vmem:[%s496 + $0x60] sm:$0xff]
        %v510 = vld [vmem:[%s496 + $0x68] sm:$0xff]
        %v511 = vld [vmem:[%s496 + $0x70] sm:$0xff]
        %v512 = vld [vmem:[%s496 + $0x78] sm:$0xff]
        %513 = vmatpush.msra.mxu0 %v512
        %514 = vmatpush.msra.mxu0 %v511
        %515 = vmatpush.msra.mxu0 %v510
        %516 = vmatpush.msra.mxu0 %v509
        %517 = vmatpush.msra.mxu0 %v508
        %518 = vmatpush.msra.mxu0 %v507
        %519 = vmatpush.msra.mxu0 %v506
        %520 = vmatpush.msra.mxu0 %v505
        %521 = vmatpush.msra.mxu0 %v504
        %522 = vmatpush.msra.mxu0 %v503
        %523 = vmatpush.msra.mxu0 %v502
        %524 = vmatpush.msra.mxu0 %v501
        %525 = vmatpush.msra.mxu0 %v500
        %526 = vmatpush.msra.mxu0 %v499
        %527 = vmatpush.msra.mxu0 %v498
        %528 = vmatpush.msra.mxu0 %v497
        %529 = vmatmul.f32.gmra.mxu0 %v480
        %v530 = vpop.f32.mrf.mxu0
        %v531 = vadd.f32 0.0, %v530
        %532 = vmatmul.f32.gmra.mxu0 %v481
        %v533 = vpop.f32.mrf.mxu0
        %v534 = vadd.f32 0.0, %v533
        %535 = vmatmul.f32.gmra.mxu0 %v482
        %v536 = vpop.f32.mrf.mxu0
        %v537 = vadd.f32 0.0, %v536
        %538 = vmatmul.f32.gmra.mxu0 %v483
        %v539 = vpop.f32.mrf.mxu0
        %v540 = vadd.f32 0.0, %v539
        %541 = vmatmul.f32.gmra.mxu0 %v484
        %v542 = vpop.f32.mrf.mxu0
        %v543 = vadd.f32 0.0, %v542
        %544 = vmatmul.f32.gmra.mxu0 %v485
        %v545 = vpop.f32.mrf.mxu0
        %v546 = vadd.f32 0.0, %v545
        %547 = vmatmul.f32.gmra.mxu0 %v486
        %v548 = vpop.f32.mrf.mxu0
        %v549 = vadd.f32 0.0, %v548
        %550 = vmatmul.f32.gmra.mxu0 %v487
        %v551 = vpop.f32.mrf.mxu0
        %v552 = vadd.f32 0.0, %v551
        %553 = vmatmul.f32.gmra.mxu0 %v488
        %v554 = vpop.f32.mrf.mxu0
        %v555 = vadd.f32 0.0, %v554
        %556 = vmatmul.f32.gmra.mxu0 %v489
        %v557 = vpop.f32.mrf.mxu0
        %v558 = vadd.f32 0.0, %v557
        %559 = vmatmul.f32.gmra.mxu0 %v490
        %v560 = vpop.f32.mrf.mxu0
        %v561 = vadd.f32 0.0, %v560
        %562 = vmatmul.f32.gmra.mxu0 %v491
        %v563 = vpop.f32.mrf.mxu0
        %v564 = vadd.f32 0.0, %v563
        %565 = vmatmul.f32.gmra.mxu0 %v492
        %v566 = vpop.f32.mrf.mxu0
        %v567 = vadd.f32 0.0, %v566
        %568 = vmatmul.f32.gmra.mxu0 %v493
        %v569 = vpop.f32.mrf.mxu0
        %v570 = vadd.f32 0.0, %v569
        %571 = vmatmul.f32.gmra.mxu0 %v494
        %v572 = vpop.f32.mrf.mxu0
        %v573 = vadd.f32 0.0, %v572
        %574 = vmatmul.f32.gmra.mxu0 %v495
        %v575 = vpop.f32.mrf.mxu0
        %v576 = vadd.f32 0.0, %v575
        %577 = vdwg.mxu0
        %v578 = vadd.f32 %v433, %v531
        %v579 = vadd.f32 %v436, %v534
        %v580 = vadd.f32 %v439, %v537
        %v581 = vadd.f32 %v442, %v540
        %v582 = vadd.f32 %v445, %v543
        %v583 = vadd.f32 %v448, %v546
        %v584 = vadd.f32 %v451, %v549
        %v585 = vadd.f32 %v454, %v552
        %v586 = vadd.f32 %v457, %v555
        %v587 = vadd.f32 %v460, %v558
        %v588 = vadd.f32 %v463, %v561
        %v589 = vadd.f32 %v466, %v564
        %v590 = vadd.f32 %v469, %v567
        %v591 = vadd.f32 %v472, %v570
        %v592 = vadd.f32 %v475, %v573
        %v593 = vadd.f32 %v478, %v576
        %s594 = scalar_lea.vmem %s239, 24
        %v595 = vld [vmem:[%s594] sm:$0xff]
        %v596 = vld [vmem:[%s594 + $0x8] sm:$0xff]
        %v597 = vld [vmem:[%s594 + $0x18] sm:$0xff]
        %v598 = vld [vmem:[%s594 + $0x20] sm:$0xff]
        %v599 = vld [vmem:[%s594 + $0x30] sm:$0xff]
        %v600 = vld [vmem:[%s594 + $0x38] sm:$0xff]
        %v601 = vld [vmem:[%s594 + $0x48] sm:$0xff]
        %v602 = vld [vmem:[%s594 + $0x50] sm:$0xff]
        %v603 = vld [vmem:[%s594 + $0x60] sm:$0xff]
        %v604 = vld [vmem:[%s594 + $0x68] sm:$0xff]
        %v605 = vld [vmem:[%s594 + $0x78] sm:$0xff]
        %v606 = vld [vmem:[%s594 + $0x80] sm:$0xff]
        %v607 = vld [vmem:[%s594 + $0x90] sm:$0xff]
        %v608 = vld [vmem:[%s594 + $0x98] sm:$0xff]
        %v609 = vld [vmem:[%s594 + $0xa8] sm:$0xff]
        %v610 = vld [vmem:[%s594 + $0xb0] sm:$0xff]
        %s611 = scalar_lea.vmem %s1, 384
        %v612 = vld [vmem:[%s611] sm:$0xff]
        %v613 = vld [vmem:[%s611 + $0x8] sm:$0xff]
        %v614 = vld [vmem:[%s611 + $0x10] sm:$0xff]
        %v615 = vld [vmem:[%s611 + $0x18] sm:$0xff]
        %v616 = vld [vmem:[%s611 + $0x20] sm:$0xff]
        %v617 = vld [vmem:[%s611 + $0x28] sm:$0xff]
        %v618 = vld [vmem:[%s611 + $0x30] sm:$0xff]
        %v619 = vld [vmem:[%s611 + $0x38] sm:$0xff]
        %v620 = vld [vmem:[%s611 + $0x40] sm:$0xff]
        %v621 = vld [vmem:[%s611 + $0x48] sm:$0xff]
        %v622 = vld [vmem:[%s611 + $0x50] sm:$0xff]
        %v623 = vld [vmem:[%s611 + $0x58] sm:$0xff]
        %v624 = vld [vmem:[%s611 + $0x60] sm:$0xff]
        %v625 = vld [vmem:[%s611 + $0x68] sm:$0xff]
        %v626 = vld [vmem:[%s611 + $0x70] sm:$0xff]
        %v627 = vld [vmem:[%s611 + $0x78] sm:$0xff]
        %628 = vmatpush.msra.mxu0 %v627
        %629 = vmatpush.msra.mxu0 %v626
        %630 = vmatpush.msra.mxu0 %v625
        %631 = vmatpush.msra.mxu0 %v624
        %632 = vmatpush.msra.mxu0 %v623
        %633 = vmatpush.msra.mxu0 %v622
        %634 = vmatpush.msra.mxu0 %v621
        %635 = vmatpush.msra.mxu0 %v620
        %636 = vmatpush.msra.mxu0 %v619
        %637 = vmatpush.msra.mxu0 %v618
        %638 = vmatpush.msra.mxu0 %v617
        %639 = vmatpush.msra.mxu0 %v616
        %640 = vmatpush.msra.mxu0 %v615
        %641 = vmatpush.msra.mxu0 %v614
        %642 = vmatpush.msra.mxu0 %v613
        %643 = vmatpush.msra.mxu0 %v612
        %644 = vmatmul.f32.gmra.mxu0 %v595
        %v645 = vpop.f32.mrf.mxu0
        %v646 = vadd.f32 0.0, %v645
        %647 = vmatmul.f32.gmra.mxu0 %v596
        %v648 = vpop.f32.mrf.mxu0
        %v649 = vadd.f32 0.0, %v648
        %650 = vmatmul.f32.gmra.mxu0 %v597
        %v651 = vpop.f32.mrf.mxu0
        %v652 = vadd.f32 0.0, %v651
        %653 = vmatmul.f32.gmra.mxu0 %v598
        %v654 = vpop.f32.mrf.mxu0
        %v655 = vadd.f32 0.0, %v654
        %656 = vmatmul.f32.gmra.mxu0 %v599
        %v657 = vpop.f32.mrf.mxu0
        %v658 = vadd.f32 0.0, %v657
        %659 = vmatmul.f32.gmra.mxu0 %v600
        %v660 = vpop.f32.mrf.mxu0
        %v661 = vadd.f32 0.0, %v660
        %662 = vmatmul.f32.gmra.mxu0 %v601
        %v663 = vpop.f32.mrf.mxu0
        %v664 = vadd.f32 0.0, %v663
        %665 = vmatmul.f32.gmra.mxu0 %v602
        %v666 = vpop.f32.mrf.mxu0
        %v667 = vadd.f32 0.0, %v666
        %668 = vmatmul.f32.gmra.mxu0 %v603
        %v669 = vpop.f32.mrf.mxu0
        %v670 = vadd.f32 0.0, %v669
        %671 = vmatmul.f32.gmra.mxu0 %v604
        %v672 = vpop.f32.mrf.mxu0
        %v673 = vadd.f32 0.0, %v672
        %674 = vmatmul.f32.gmra.mxu0 %v605
        %v675 = vpop.f32.mrf.mxu0
        %v676 = vadd.f32 0.0, %v675
        %677 = vmatmul.f32.gmra.mxu0 %v606
        %v678 = vpop.f32.mrf.mxu0
        %v679 = vadd.f32 0.0, %v678
        %680 = vmatmul.f32.gmra.mxu0 %v607
        %v681 = vpop.f32.mrf.mxu0
        %v682 = vadd.f32 0.0, %v681
        %683 = vmatmul.f32.gmra.mxu0 %v608
        %v684 = vpop.f32.mrf.mxu0
        %v685 = vadd.f32 0.0, %v684
        %686 = vmatmul.f32.gmra.mxu0 %v609
        %v687 = vpop.f32.mrf.mxu0
        %v688 = vadd.f32 0.0, %v687
        %689 = vmatmul.f32.gmra.mxu0 %v610
        %v690 = vpop.f32.mrf.mxu0
        %v691 = vadd.f32 0.0, %v690
        %692 = vdwg.mxu0
        %v693 = vadd.f32 %v578, %v646
        %v694 = vadd.f32 %v579, %v649
        %v695 = vadd.f32 %v580, %v652
        %v696 = vadd.f32 %v581, %v655
        %v697 = vadd.f32 %v582, %v658
        %v698 = vadd.f32 %v583, %v661
        %v699 = vadd.f32 %v584, %v664
        %v700 = vadd.f32 %v585, %v667
        %v701 = vadd.f32 %v586, %v670
        %v702 = vadd.f32 %v587, %v673
        %v703 = vadd.f32 %v588, %v676
        %v704 = vadd.f32 %v589, %v679
        %v705 = vadd.f32 %v590, %v682
        %v706 = vadd.f32 %v591, %v685
        %v707 = vadd.f32 %v592, %v688
        %v708 = vadd.f32 %v593, %v691
        %v709 = vld [vmem:[%s594 + $0x1] sm:$0xff]
        %v710 = vld [vmem:[%s594 + $0x9] sm:$0xff]
        %v711 = vld [vmem:[%s594 + $0x19] sm:$0xff]
        %v712 = vld [vmem:[%s594 + $0x21] sm:$0xff]
        %v713 = vld [vmem:[%s594 + $0x31] sm:$0xff]
        %v714 = vld [vmem:[%s594 + $0x39] sm:$0xff]
        %v715 = vld [vmem:[%s594 + $0x49] sm:$0xff]
        %v716 = vld [vmem:[%s594 + $0x51] sm:$0xff]
        %v717 = vld [vmem:[%s594 + $0x61] sm:$0xff]
        %v718 = vld [vmem:[%s594 + $0x69] sm:$0xff]
        %v719 = vld [vmem:[%s594 + $0x79] sm:$0xff]
        %v720 = vld [vmem:[%s594 + $0x81] sm:$0xff]
        %v721 = vld [vmem:[%s594 + $0x91] sm:$0xff]
        %v722 = vld [vmem:[%s594 + $0x99] sm:$0xff]
        %v723 = vld [vmem:[%s594 + $0xa9] sm:$0xff]
        %v724 = vld [vmem:[%s594 + $0xb1] sm:$0xff]
        %s725 = scalar_lea.vmem %s1, 512
        %v726 = vld [vmem:[%s725] sm:$0xff]
        %v727 = vld [vmem:[%s725 + $0x8] sm:$0xff]
        %v728 = vld [vmem:[%s725 + $0x10] sm:$0xff]
        %v729 = vld [vmem:[%s725 + $0x18] sm:$0xff]
        %v730 = vld [vmem:[%s725 + $0x20] sm:$0xff]
        %v731 = vld [vmem:[%s725 + $0x28] sm:$0xff]
        %v732 = vld [vmem:[%s725 + $0x30] sm:$0xff]
        %v733 = vld [vmem:[%s725 + $0x38] sm:$0xff]
        %v734 = vld [vmem:[%s725 + $0x40] sm:$0xff]
        %v735 = vld [vmem:[%s725 + $0x48] sm:$0xff]
        %v736 = vld [vmem:[%s725 + $0x50] sm:$0xff]
        %v737 = vld [vmem:[%s725 + $0x58] sm:$0xff]
        %v738 = vld [vmem:[%s725 + $0x60] sm:$0xff]
        %v739 = vld [vmem:[%s725 + $0x68] sm:$0xff]
        %v740 = vld [vmem:[%s725 + $0x70] sm:$0xff]
        %v741 = vld [vmem:[%s725 + $0x78] sm:$0xff]
        %742 = vmatpush.msra.mxu0 %v741
        %743 = vmatpush.msra.mxu0 %v740
        %744 = vmatpush.msra.mxu0 %v739
        %745 = vmatpush.msra.mxu0 %v738
        %746 = vmatpush.msra.mxu0 %v737
        %747 = vmatpush.msra.mxu0 %v736
        %748 = vmatpush.msra.mxu0 %v735
        %749 = vmatpush.msra.mxu0 %v734
        %750 = vmatpush.msra.mxu0 %v733
        %751 = vmatpush.msra.mxu0 %v732
        %752 = vmatpush.msra.mxu0 %v731
        %753 = vmatpush.msra.mxu0 %v730
        %754 = vmatpush.msra.mxu0 %v729
        %755 = vmatpush.msra.mxu0 %v728
        %756 = vmatpush.msra.mxu0 %v727
        %757 = vmatpush.msra.mxu0 %v726
        %758 = vmatmul.f32.gmra.mxu0 %v709
        %v759 = vpop.f32.mrf.mxu0
        %v760 = vadd.f32 0.0, %v759
        %761 = vmatmul.f32.gmra.mxu0 %v710
        %v762 = vpop.f32.mrf.mxu0
        %v763 = vadd.f32 0.0, %v762
        %764 = vmatmul.f32.gmra.mxu0 %v711
        %v765 = vpop.f32.mrf.mxu0
        %v766 = vadd.f32 0.0, %v765
        %767 = vmatmul.f32.gmra.mxu0 %v712
        %v768 = vpop.f32.mrf.mxu0
        %v769 = vadd.f32 0.0, %v768
        %770 = vmatmul.f32.gmra.mxu0 %v713
        %v771 = vpop.f32.mrf.mxu0
        %v772 = vadd.f32 0.0, %v771
        %773 = vmatmul.f32.gmra.mxu0 %v714
        %v774 = vpop.f32.mrf.mxu0
        %v775 = vadd.f32 0.0, %v774
        %776 = vmatmul.f32.gmra.mxu0 %v715
        %v777 = vpop.f32.mrf.mxu0
        %v778 = vadd.f32 0.0, %v777
        %779 = vmatmul.f32.gmra.mxu0 %v716
        %v780 = vpop.f32.mrf.mxu0
        %v781 = vadd.f32 0.0, %v780
        %782 = vmatmul.f32.gmra.mxu0 %v717
        %v783 = vpop.f32.mrf.mxu0
        %v784 = vadd.f32 0.0, %v783
        %785 = vmatmul.f32.gmra.mxu0 %v718
        %v786 = vpop.f32.mrf.mxu0
        %v787 = vadd.f32 0.0, %v786
        %788 = vmatmul.f32.gmra.mxu0 %v719
        %v789 = vpop.f32.mrf.mxu0
        %v790 = vadd.f32 0.0, %v789
        %791 = vmatmul.f32.gmra.mxu0 %v720
        %v792 = vpop.f32.mrf.mxu0
        %v793 = vadd.f32 0.0, %v792
        %794 = vmatmul.f32.gmra.mxu0 %v721
        %v795 = vpop.f32.mrf.mxu0
        %v796 = vadd.f32 0.0, %v795
        %797 = vmatmul.f32.gmra.mxu0 %v722
        %v798 = vpop.f32.mrf.mxu0
        %v799 = vadd.f32 0.0, %v798
        %800 = vmatmul.f32.gmra.mxu0 %v723
        %v801 = vpop.f32.mrf.mxu0
        %v802 = vadd.f32 0.0, %v801
        %803 = vmatmul.f32.gmra.mxu0 %v724
        %v804 = vpop.f32.mrf.mxu0
        %v805 = vadd.f32 0.0, %v804
        %806 = vdwg.mxu0
        %v807 = vadd.f32 %v693, %v760
        %v808 = vadd.f32 %v694, %v763
        %v809 = vadd.f32 %v695, %v766
        %v810 = vadd.f32 %v696, %v769
        %v811 = vadd.f32 %v697, %v772
        %v812 = vadd.f32 %v698, %v775
        %v813 = vadd.f32 %v699, %v778
        %v814 = vadd.f32 %v700, %v781
        %v815 = vadd.f32 %v701, %v784
        %v816 = vadd.f32 %v702, %v787
        %v817 = vadd.f32 %v703, %v790
        %v818 = vadd.f32 %v704, %v793
        %v819 = vadd.f32 %v705, %v796
        %v820 = vadd.f32 %v706, %v799
        %v821 = vadd.f32 %v707, %v802
        %v822 = vadd.f32 %v708, %v805
        %v823 = vld [vmem:[%s594 + $0x2] sm:$0xff]
        %v824 = vld [vmem:[%s594 + $0xa] sm:$0xff]
        %v825 = vld [vmem:[%s594 + $0x1a] sm:$0xff]
        %v826 = vld [vmem:[%s594 + $0x22] sm:$0xff]
        %v827 = vld [vmem:[%s594 + $0x32] sm:$0xff]
        %v828 = vld [vmem:[%s594 + $0x3a] sm:$0xff]
        %v829 = vld [vmem:[%s594 + $0x4a] sm:$0xff]
        %v830 = vld [vmem:[%s594 + $0x52] sm:$0xff]
        %v831 = vld [vmem:[%s594 + $0x62] sm:$0xff]
        %v832 = vld [vmem:[%s594 + $0x6a] sm:$0xff]
        %v833 = vld [vmem:[%s594 + $0x7a] sm:$0xff]
        %v834 = vld [vmem:[%s594 + $0x82] sm:$0xff]
        %v835 = vld [vmem:[%s594 + $0x92] sm:$0xff]
        %v836 = vld [vmem:[%s594 + $0x9a] sm:$0xff]
        %v837 = vld [vmem:[%s594 + $0xaa] sm:$0xff]
        %v838 = vld [vmem:[%s594 + $0xb2] sm:$0xff]
        %s839 = scalar_lea.vmem %s1, 640
        %v840 = vld [vmem:[%s839] sm:$0xff]
        %v841 = vld [vmem:[%s839 + $0x8] sm:$0xff]
        %v842 = vld [vmem:[%s839 + $0x10] sm:$0xff]
        %v843 = vld [vmem:[%s839 + $0x18] sm:$0xff]
        %v844 = vld [vmem:[%s839 + $0x20] sm:$0xff]
        %v845 = vld [vmem:[%s839 + $0x28] sm:$0xff]
        %v846 = vld [vmem:[%s839 + $0x30] sm:$0xff]
        %v847 = vld [vmem:[%s839 + $0x38] sm:$0xff]
        %v848 = vld [vmem:[%s839 + $0x40] sm:$0xff]
        %v849 = vld [vmem:[%s839 + $0x48] sm:$0xff]
        %v850 = vld [vmem:[%s839 + $0x50] sm:$0xff]
        %v851 = vld [vmem:[%s839 + $0x58] sm:$0xff]
        %v852 = vld [vmem:[%s839 + $0x60] sm:$0xff]
        %v853 = vld [vmem:[%s839 + $0x68] sm:$0xff]
        %v854 = vld [vmem:[%s839 + $0x70] sm:$0xff]
        %v855 = vld [vmem:[%s839 + $0x78] sm:$0xff]
        %856 = vmatpush.msra.mxu0 %v855
        %857 = vmatpush.msra.mxu0 %v854
        %858 = vmatpush.msra.mxu0 %v853
        %859 = vmatpush.msra.mxu0 %v852
        %860 = vmatpush.msra.mxu0 %v851
        %861 = vmatpush.msra.mxu0 %v850
        %862 = vmatpush.msra.mxu0 %v849
        %863 = vmatpush.msra.mxu0 %v848
        %864 = vmatpush.msra.mxu0 %v847
        %865 = vmatpush.msra.mxu0 %v846
        %866 = vmatpush.msra.mxu0 %v845
        %867 = vmatpush.msra.mxu0 %v844
        %868 = vmatpush.msra.mxu0 %v843
        %869 = vmatpush.msra.mxu0 %v842
        %870 = vmatpush.msra.mxu0 %v841
        %871 = vmatpush.msra.mxu0 %v840
        %872 = vmatmul.f32.gmra.mxu0 %v823
        %v873 = vpop.f32.mrf.mxu0
        %v874 = vadd.f32 0.0, %v873
        %875 = vmatmul.f32.gmra.mxu0 %v824
        %v876 = vpop.f32.mrf.mxu0
        %v877 = vadd.f32 0.0, %v876
        %878 = vmatmul.f32.gmra.mxu0 %v825
        %v879 = vpop.f32.mrf.mxu0
        %v880 = vadd.f32 0.0, %v879
        %881 = vmatmul.f32.gmra.mxu0 %v826
        %v882 = vpop.f32.mrf.mxu0
        %v883 = vadd.f32 0.0, %v882
        %884 = vmatmul.f32.gmra.mxu0 %v827
        %v885 = vpop.f32.mrf.mxu0
        %v886 = vadd.f32 0.0, %v885
        %887 = vmatmul.f32.gmra.mxu0 %v828
        %v888 = vpop.f32.mrf.mxu0
        %v889 = vadd.f32 0.0, %v888
        %890 = vmatmul.f32.gmra.mxu0 %v829
        %v891 = vpop.f32.mrf.mxu0
        %v892 = vadd.f32 0.0, %v891
        %893 = vmatmul.f32.gmra.mxu0 %v830
        %v894 = vpop.f32.mrf.mxu0
        %v895 = vadd.f32 0.0, %v894
        %896 = vmatmul.f32.gmra.mxu0 %v831
        %v897 = vpop.f32.mrf.mxu0
        %v898 = vadd.f32 0.0, %v897
        %899 = vmatmul.f32.gmra.mxu0 %v832
        %v900 = vpop.f32.mrf.mxu0
        %v901 = vadd.f32 0.0, %v900
        %902 = vmatmul.f32.gmra.mxu0 %v833
        %v903 = vpop.f32.mrf.mxu0
        %v904 = vadd.f32 0.0, %v903
        %905 = vmatmul.f32.gmra.mxu0 %v834
        %v906 = vpop.f32.mrf.mxu0
        %v907 = vadd.f32 0.0, %v906
        %908 = vmatmul.f32.gmra.mxu0 %v835
        %v909 = vpop.f32.mrf.mxu0
        %v910 = vadd.f32 0.0, %v909
        %911 = vmatmul.f32.gmra.mxu0 %v836
        %v912 = vpop.f32.mrf.mxu0
        %v913 = vadd.f32 0.0, %v912
        %914 = vmatmul.f32.gmra.mxu0 %v837
        %v915 = vpop.f32.mrf.mxu0
        %v916 = vadd.f32 0.0, %v915
        %917 = vmatmul.f32.gmra.mxu0 %v838
        %v918 = vpop.f32.mrf.mxu0
        %v919 = vadd.f32 0.0, %v918
        %920 = vdwg.mxu0
        %v921 = vadd.f32 %v807, %v874
        %v922 = vadd.f32 %v808, %v877
        %v923 = vadd.f32 %v809, %v880
        %v924 = vadd.f32 %v810, %v883
        %v925 = vadd.f32 %v811, %v886
        %v926 = vadd.f32 %v812, %v889
        %v927 = vadd.f32 %v813, %v892
        %v928 = vadd.f32 %v814, %v895
        %v929 = vadd.f32 %v815, %v898
        %v930 = vadd.f32 %v816, %v901
        %v931 = vadd.f32 %v817, %v904
        %v932 = vadd.f32 %v818, %v907
        %v933 = vadd.f32 %v819, %v910
        %v934 = vadd.f32 %v820, %v913
        %v935 = vadd.f32 %v821, %v916
        %v936 = vadd.f32 %v822, %v919
        %s937 = scalar_lea.vmem %s239, 48
        %v938 = vld [vmem:[%s937] sm:$0xff]
        %v939 = vld [vmem:[%s937 + $0x8] sm:$0xff]
        %v940 = vld [vmem:[%s937 + $0x18] sm:$0xff]
        %v941 = vld [vmem:[%s937 + $0x20] sm:$0xff]
        %v942 = vld [vmem:[%s937 + $0x30] sm:$0xff]
        %v943 = vld [vmem:[%s937 + $0x38] sm:$0xff]
        %v944 = vld [vmem:[%s937 + $0x48] sm:$0xff]
        %v945 = vld [vmem:[%s937 + $0x50] sm:$0xff]
        %v946 = vld [vmem:[%s937 + $0x60] sm:$0xff]
        %v947 = vld [vmem:[%s937 + $0x68] sm:$0xff]
        %v948 = vld [vmem:[%s937 + $0x78] sm:$0xff]
        %v949 = vld [vmem:[%s937 + $0x80] sm:$0xff]
        %v950 = vld [vmem:[%s937 + $0x90] sm:$0xff]
        %v951 = vld [vmem:[%s937 + $0x98] sm:$0xff]
        %v952 = vld [vmem:[%s937 + $0xa8] sm:$0xff]
        %v953 = vld [vmem:[%s937 + $0xb0] sm:$0xff]
        %s954 = scalar_lea.vmem %s1, 768
        %v955 = vld [vmem:[%s954] sm:$0xff]
        %v956 = vld [vmem:[%s954 + $0x8] sm:$0xff]
        %v957 = vld [vmem:[%s954 + $0x10] sm:$0xff]
        %v958 = vld [vmem:[%s954 + $0x18] sm:$0xff]
        %v959 = vld [vmem:[%s954 + $0x20] sm:$0xff]
        %v960 = vld [vmem:[%s954 + $0x28] sm:$0xff]
        %v961 = vld [vmem:[%s954 + $0x30] sm:$0xff]
        %v962 = vld [vmem:[%s954 + $0x38] sm:$0xff]
        %v963 = vld [vmem:[%s954 + $0x40] sm:$0xff]
        %v964 = vld [vmem:[%s954 + $0x48] sm:$0xff]
        %v965 = vld [vmem:[%s954 + $0x50] sm:$0xff]
        %v966 = vld [vmem:[%s954 + $0x58] sm:$0xff]
        %v967 = vld [vmem:[%s954 + $0x60] sm:$0xff]
        %v968 = vld [vmem:[%s954 + $0x68] sm:$0xff]
        %v969 = vld [vmem:[%s954 + $0x70] sm:$0xff]
        %v970 = vld [vmem:[%s954 + $0x78] sm:$0xff]
        %971 = vmatpush.msra.mxu0 %v970
        %972 = vmatpush.msra.mxu0 %v969
        %973 = vmatpush.msra.mxu0 %v968
        %974 = vmatpush.msra.mxu0 %v967
        %975 = vmatpush.msra.mxu0 %v966
        %976 = vmatpush.msra.mxu0 %v965
        %977 = vmatpush.msra.mxu0 %v964
        %978 = vmatpush.msra.mxu0 %v963
        %979 = vmatpush.msra.mxu0 %v962
        %980 = vmatpush.msra.mxu0 %v961
        %981 = vmatpush.msra.mxu0 %v960
        %982 = vmatpush.msra.mxu0 %v959
        %983 = vmatpush.msra.mxu0 %v958
        %984 = vmatpush.msra.mxu0 %v957
        %985 = vmatpush.msra.mxu0 %v956
        %986 = vmatpush.msra.mxu0 %v955
        %987 = vmatmul.f32.gmra.mxu0 %v938
        %v988 = vpop.f32.mrf.mxu0
        %v989 = vadd.f32 0.0, %v988
        %990 = vmatmul.f32.gmra.mxu0 %v939
        %v991 = vpop.f32.mrf.mxu0
        %v992 = vadd.f32 0.0, %v991
        %993 = vmatmul.f32.gmra.mxu0 %v940
        %v994 = vpop.f32.mrf.mxu0
        %v995 = vadd.f32 0.0, %v994
        %996 = vmatmul.f32.gmra.mxu0 %v941
        %v997 = vpop.f32.mrf.mxu0
        %v998 = vadd.f32 0.0, %v997
        %999 = vmatmul.f32.gmra.mxu0 %v942
        %v1000 = vpop.f32.mrf.mxu0
        %v1001 = vadd.f32 0.0, %v1000
        %1002 = vmatmul.f32.gmra.mxu0 %v943
        %v1003 = vpop.f32.mrf.mxu0
        %v1004 = vadd.f32 0.0, %v1003
        %1005 = vmatmul.f32.gmra.mxu0 %v944
        %v1006 = vpop.f32.mrf.mxu0
        %v1007 = vadd.f32 0.0, %v1006
        %1008 = vmatmul.f32.gmra.mxu0 %v945
        %v1009 = vpop.f32.mrf.mxu0
        %v1010 = vadd.f32 0.0, %v1009
        %1011 = vmatmul.f32.gmra.mxu0 %v946
        %v1012 = vpop.f32.mrf.mxu0
        %v1013 = vadd.f32 0.0, %v1012
        %1014 = vmatmul.f32.gmra.mxu0 %v947
        %v1015 = vpop.f32.mrf.mxu0
        %v1016 = vadd.f32 0.0, %v1015
        %1017 = vmatmul.f32.gmra.mxu0 %v948
        %v1018 = vpop.f32.mrf.mxu0
        %v1019 = vadd.f32 0.0, %v1018
        %1020 = vmatmul.f32.gmra.mxu0 %v949
        %v1021 = vpop.f32.mrf.mxu0
        %v1022 = vadd.f32 0.0, %v1021
        %1023 = vmatmul.f32.gmra.mxu0 %v950
        %v1024 = vpop.f32.mrf.mxu0
        %v1025 = vadd.f32 0.0, %v1024
        %1026 = vmatmul.f32.gmra.mxu0 %v951
        %v1027 = vpop.f32.mrf.mxu0
        %v1028 = vadd.f32 0.0, %v1027
        %1029 = vmatmul.f32.gmra.mxu0 %v952
        %v1030 = vpop.f32.mrf.mxu0
        %v1031 = vadd.f32 0.0, %v1030
        %1032 = vmatmul.f32.gmra.mxu0 %v953
        %v1033 = vpop.f32.mrf.mxu0
        %v1034 = vadd.f32 0.0, %v1033
        %1035 = vdwg.mxu0
        %v1036 = vadd.f32 %v921, %v989
        %v1037 = vadd.f32 %v922, %v992
        %v1038 = vadd.f32 %v923, %v995
        %v1039 = vadd.f32 %v924, %v998
        %v1040 = vadd.f32 %v925, %v1001
        %v1041 = vadd.f32 %v926, %v1004
        %v1042 = vadd.f32 %v927, %v1007
        %v1043 = vadd.f32 %v928, %v1010
        %v1044 = vadd.f32 %v929, %v1013
        %v1045 = vadd.f32 %v930, %v1016
        %v1046 = vadd.f32 %v931, %v1019
        %v1047 = vadd.f32 %v932, %v1022
        %v1048 = vadd.f32 %v933, %v1025
        %v1049 = vadd.f32 %v934, %v1028
        %v1050 = vadd.f32 %v935, %v1031
        %v1051 = vadd.f32 %v936, %v1034
        %v1052 = vld [vmem:[%s937 + $0x1] sm:$0xff]
        %v1053 = vld [vmem:[%s937 + $0x9] sm:$0xff]
        %v1054 = vld [vmem:[%s937 + $0x19] sm:$0xff]
        %v1055 = vld [vmem:[%s937 + $0x21] sm:$0xff]
        %v1056 = vld [vmem:[%s937 + $0x31] sm:$0xff]
        %v1057 = vld [vmem:[%s937 + $0x39] sm:$0xff]
        %v1058 = vld [vmem:[%s937 + $0x49] sm:$0xff]
        %v1059 = vld [vmem:[%s937 + $0x51] sm:$0xff]
        %v1060 = vld [vmem:[%s937 + $0x61] sm:$0xff]
        %v1061 = vld [vmem:[%s937 + $0x69] sm:$0xff]
        %v1062 = vld [vmem:[%s937 + $0x79] sm:$0xff]
        %v1063 = vld [vmem:[%s937 + $0x81] sm:$0xff]
        %v1064 = vld [vmem:[%s937 + $0x91] sm:$0xff]
        %v1065 = vld [vmem:[%s937 + $0x99] sm:$0xff]
        %v1066 = vld [vmem:[%s937 + $0xa9] sm:$0xff]
        %v1067 = vld [vmem:[%s937 + $0xb1] sm:$0xff]
        %s1068 = scalar_lea.vmem %s1, 896
        %v1069 = vld [vmem:[%s1068] sm:$0xff]
        %v1070 = vld [vmem:[%s1068 + $0x8] sm:$0xff]
        %v1071 = vld [vmem:[%s1068 + $0x10] sm:$0xff]
        %v1072 = vld [vmem:[%s1068 + $0x18] sm:$0xff]
        %v1073 = vld [vmem:[%s1068 + $0x20] sm:$0xff]
        %v1074 = vld [vmem:[%s1068 + $0x28] sm:$0xff]
        %v1075 = vld [vmem:[%s1068 + $0x30] sm:$0xff]
        %v1076 = vld [vmem:[%s1068 + $0x38] sm:$0xff]
        %v1077 = vld [vmem:[%s1068 + $0x40] sm:$0xff]
        %v1078 = vld [vmem:[%s1068 + $0x48] sm:$0xff]
        %v1079 = vld [vmem:[%s1068 + $0x50] sm:$0xff]
        %v1080 = vld [vmem:[%s1068 + $0x58] sm:$0xff]
        %v1081 = vld [vmem:[%s1068 + $0x60] sm:$0xff]
        %v1082 = vld [vmem:[%s1068 + $0x68] sm:$0xff]
        %v1083 = vld [vmem:[%s1068 + $0x70] sm:$0xff]
        %v1084 = vld [vmem:[%s1068 + $0x78] sm:$0xff]
        %1085 = vmatpush.msra.mxu0 %v1084
        %1086 = vmatpush.msra.mxu0 %v1083
        %1087 = vmatpush.msra.mxu0 %v1082
        %1088 = vmatpush.msra.mxu0 %v1081
        %1089 = vmatpush.msra.mxu0 %v1080
        %1090 = vmatpush.msra.mxu0 %v1079
        %1091 = vmatpush.msra.mxu0 %v1078
        %1092 = vmatpush.msra.mxu0 %v1077
        %1093 = vmatpush.msra.mxu0 %v1076
        %1094 = vmatpush.msra.mxu0 %v1075
        %1095 = vmatpush.msra.mxu0 %v1074
        %1096 = vmatpush.msra.mxu0 %v1073
        %1097 = vmatpush.msra.mxu0 %v1072
        %1098 = vmatpush.msra.mxu0 %v1071
        %1099 = vmatpush.msra.mxu0 %v1070
        %1100 = vmatpush.msra.mxu0 %v1069
        %1101 = vmatmul.f32.gmra.mxu0 %v1052
        %v1102 = vpop.f32.mrf.mxu0
        %v1103 = vadd.f32 0.0, %v1102
        %1104 = vmatmul.f32.gmra.mxu0 %v1053
        %v1105 = vpop.f32.mrf.mxu0
        %v1106 = vadd.f32 0.0, %v1105
        %1107 = vmatmul.f32.gmra.mxu0 %v1054
        %v1108 = vpop.f32.mrf.mxu0
        %v1109 = vadd.f32 0.0, %v1108
        %1110 = vmatmul.f32.gmra.mxu0 %v1055
        %v1111 = vpop.f32.mrf.mxu0
        %v1112 = vadd.f32 0.0, %v1111
        %1113 = vmatmul.f32.gmra.mxu0 %v1056
        %v1114 = vpop.f32.mrf.mxu0
        %v1115 = vadd.f32 0.0, %v1114
        %1116 = vmatmul.f32.gmra.mxu0 %v1057
        %v1117 = vpop.f32.mrf.mxu0
        %v1118 = vadd.f32 0.0, %v1117
        %1119 = vmatmul.f32.gmra.mxu0 %v1058
        %v1120 = vpop.f32.mrf.mxu0
        %v1121 = vadd.f32 0.0, %v1120
        %1122 = vmatmul.f32.gmra.mxu0 %v1059
        %v1123 = vpop.f32.mrf.mxu0
        %v1124 = vadd.f32 0.0, %v1123
        %1125 = vmatmul.f32.gmra.mxu0 %v1060
        %v1126 = vpop.f32.mrf.mxu0
        %v1127 = vadd.f32 0.0, %v1126
        %1128 = vmatmul.f32.gmra.mxu0 %v1061
        %v1129 = vpop.f32.mrf.mxu0
        %v1130 = vadd.f32 0.0, %v1129
        %1131 = vmatmul.f32.gmra.mxu0 %v1062
        %v1132 = vpop.f32.mrf.mxu0
        %v1133 = vadd.f32 0.0, %v1132
        %1134 = vmatmul.f32.gmra.mxu0 %v1063
        %v1135 = vpop.f32.mrf.mxu0
        %v1136 = vadd.f32 0.0, %v1135
        %1137 = vmatmul.f32.gmra.mxu0 %v1064
        %v1138 = vpop.f32.mrf.mxu0
        %v1139 = vadd.f32 0.0, %v1138
        %1140 = vmatmul.f32.gmra.mxu0 %v1065
        %v1141 = vpop.f32.mrf.mxu0
        %v1142 = vadd.f32 0.0, %v1141
        %1143 = vmatmul.f32.gmra.mxu0 %v1066
        %v1144 = vpop.f32.mrf.mxu0
        %v1145 = vadd.f32 0.0, %v1144
        %1146 = vmatmul.f32.gmra.mxu0 %v1067
        %v1147 = vpop.f32.mrf.mxu0
        %v1148 = vadd.f32 0.0, %v1147
        %1149 = vdwg.mxu0
        %v1150 = vadd.f32 %v1036, %v1103
        %v1151 = vadd.f32 %v1037, %v1106
        %v1152 = vadd.f32 %v1038, %v1109
        %v1153 = vadd.f32 %v1039, %v1112
        %v1154 = vadd.f32 %v1040, %v1115
        %v1155 = vadd.f32 %v1041, %v1118
        %v1156 = vadd.f32 %v1042, %v1121
        %v1157 = vadd.f32 %v1043, %v1124
        %v1158 = vadd.f32 %v1044, %v1127
        %v1159 = vadd.f32 %v1045, %v1130
        %v1160 = vadd.f32 %v1046, %v1133
        %v1161 = vadd.f32 %v1047, %v1136
        %v1162 = vadd.f32 %v1048, %v1139
        %v1163 = vadd.f32 %v1049, %v1142
        %v1164 = vadd.f32 %v1050, %v1145
        %v1165 = vadd.f32 %v1051, %v1148
        %v1166 = vld [vmem:[%s937 + $0x2] sm:$0xff]
        %v1167 = vld [vmem:[%s937 + $0xa] sm:$0xff]
        %v1168 = vld [vmem:[%s937 + $0x1a] sm:$0xff]
        %v1169 = vld [vmem:[%s937 + $0x22] sm:$0xff]
        %v1170 = vld [vmem:[%s937 + $0x32] sm:$0xff]
        %v1171 = vld [vmem:[%s937 + $0x3a] sm:$0xff]
        %v1172 = vld [vmem:[%s937 + $0x4a] sm:$0xff]
        %v1173 = vld [vmem:[%s937 + $0x52] sm:$0xff]
        %v1174 = vld [vmem:[%s937 + $0x62] sm:$0xff]
        %v1175 = vld [vmem:[%s937 + $0x6a] sm:$0xff]
        %v1176 = vld [vmem:[%s937 + $0x7a] sm:$0xff]
        %v1177 = vld [vmem:[%s937 + $0x82] sm:$0xff]
        %v1178 = vld [vmem:[%s937 + $0x92] sm:$0xff]
        %v1179 = vld [vmem:[%s937 + $0x9a] sm:$0xff]
        %v1180 = vld [vmem:[%s937 + $0xaa] sm:$0xff]
        %v1181 = vld [vmem:[%s937 + $0xb2] sm:$0xff]
        %s1182 = scalar_lea.vmem %s1, 1024
        %v1183 = vld [vmem:[%s1182] sm:$0xff]
        %v1184 = vld [vmem:[%s1182 + $0x8] sm:$0xff]
        %v1185 = vld [vmem:[%s1182 + $0x10] sm:$0xff]
        %v1186 = vld [vmem:[%s1182 + $0x18] sm:$0xff]
        %v1187 = vld [vmem:[%s1182 + $0x20] sm:$0xff]
        %v1188 = vld [vmem:[%s1182 + $0x28] sm:$0xff]
        %v1189 = vld [vmem:[%s1182 + $0x30] sm:$0xff]
        %v1190 = vld [vmem:[%s1182 + $0x38] sm:$0xff]
        %v1191 = vld [vmem:[%s1182 + $0x40] sm:$0xff]
        %v1192 = vld [vmem:[%s1182 + $0x48] sm:$0xff]
        %v1193 = vld [vmem:[%s1182 + $0x50] sm:$0xff]
        %v1194 = vld [vmem:[%s1182 + $0x58] sm:$0xff]
        %v1195 = vld [vmem:[%s1182 + $0x60] sm:$0xff]
        %v1196 = vld [vmem:[%s1182 + $0x68] sm:$0xff]
        %v1197 = vld [vmem:[%s1182 + $0x70] sm:$0xff]
        %v1198 = vld [vmem:[%s1182 + $0x78] sm:$0xff]
        %1199 = vmatpush.msra.mxu0 %v1198
        %1200 = vmatpush.msra.mxu0 %v1197
        %1201 = vmatpush.msra.mxu0 %v1196
        %1202 = vmatpush.msra.mxu0 %v1195
        %1203 = vmatpush.msra.mxu0 %v1194
        %1204 = vmatpush.msra.mxu0 %v1193
        %1205 = vmatpush.msra.mxu0 %v1192
        %1206 = vmatpush.msra.mxu0 %v1191
        %1207 = vmatpush.msra.mxu0 %v1190
        %1208 = vmatpush.msra.mxu0 %v1189
        %1209 = vmatpush.msra.mxu0 %v1188
        %1210 = vmatpush.msra.mxu0 %v1187
        %1211 = vmatpush.msra.mxu0 %v1186
        %1212 = vmatpush.msra.mxu0 %v1185
        %1213 = vmatpush.msra.mxu0 %v1184
        %1214 = vmatpush.msra.mxu0 %v1183
        %1215 = vmatmul.f32.gmra.mxu0 %v1166
        %v1216 = vpop.f32.mrf.mxu0
        %v1217 = vadd.f32 0.0, %v1216
        %1218 = vmatmul.f32.gmra.mxu0 %v1167
        %v1219 = vpop.f32.mrf.mxu0
        %v1220 = vadd.f32 0.0, %v1219
        %1221 = vmatmul.f32.gmra.mxu0 %v1168
        %v1222 = vpop.f32.mrf.mxu0
        %v1223 = vadd.f32 0.0, %v1222
        %1224 = vmatmul.f32.gmra.mxu0 %v1169
        %v1225 = vpop.f32.mrf.mxu0
        %v1226 = vadd.f32 0.0, %v1225
        %1227 = vmatmul.f32.gmra.mxu0 %v1170
        %v1228 = vpop.f32.mrf.mxu0
        %v1229 = vadd.f32 0.0, %v1228
        %1230 = vmatmul.f32.gmra.mxu0 %v1171
        %v1231 = vpop.f32.mrf.mxu0
        %v1232 = vadd.f32 0.0, %v1231
        %1233 = vmatmul.f32.gmra.mxu0 %v1172
        %v1234 = vpop.f32.mrf.mxu0
        %v1235 = vadd.f32 0.0, %v1234
        %1236 = vmatmul.f32.gmra.mxu0 %v1173
        %v1237 = vpop.f32.mrf.mxu0
        %v1238 = vadd.f32 0.0, %v1237
        %1239 = vmatmul.f32.gmra.mxu0 %v1174
        %v1240 = vpop.f32.mrf.mxu0
        %v1241 = vadd.f32 0.0, %v1240
        %1242 = vmatmul.f32.gmra.mxu0 %v1175
        %v1243 = vpop.f32.mrf.mxu0
        %v1244 = vadd.f32 0.0, %v1243
        %1245 = vmatmul.f32.gmra.mxu0 %v1176
        %v1246 = vpop.f32.mrf.mxu0
        %v1247 = vadd.f32 0.0, %v1246
        %1248 = vmatmul.f32.gmra.mxu0 %v1177
        %v1249 = vpop.f32.mrf.mxu0
        %v1250 = vadd.f32 0.0, %v1249
        %1251 = vmatmul.f32.gmra.mxu0 %v1178
        %v1252 = vpop.f32.mrf.mxu0
        %v1253 = vadd.f32 0.0, %v1252
        %1254 = vmatmul.f32.gmra.mxu0 %v1179
        %v1255 = vpop.f32.mrf.mxu0
        %v1256 = vadd.f32 0.0, %v1255
        %1257 = vmatmul.f32.gmra.mxu0 %v1180
        %v1258 = vpop.f32.mrf.mxu0
        %v1259 = vadd.f32 0.0, %v1258
        %1260 = vmatmul.f32.gmra.mxu0 %v1181
        %v1261 = vpop.f32.mrf.mxu0
        %v1262 = vadd.f32 0.0, %v1261
        %1263 = vdwg.mxu0
        %v1264 = vadd.f32 %v1150, %v1217
        %v1265 = vadd.f32 %v1151, %v1220
        %v1266 = vadd.f32 %v1152, %v1223
        %v1267 = vadd.f32 %v1153, %v1226
        %v1268 = vadd.f32 %v1154, %v1229
        %v1269 = vadd.f32 %v1155, %v1232
        %v1270 = vadd.f32 %v1156, %v1235
        %v1271 = vadd.f32 %v1157, %v1238
        %v1272 = vadd.f32 %v1158, %v1241
        %v1273 = vadd.f32 %v1159, %v1244
        %v1274 = vadd.f32 %v1160, %v1247
        %v1275 = vadd.f32 %v1161, %v1250
        %v1276 = vadd.f32 %v1162, %v1253
        %v1277 = vadd.f32 %v1163, %v1256
        %v1278 = vadd.f32 %v1164, %v1259
        %v1279 = vadd.f32 %v1165, %v1262
        %v1281 = vperm.slane %v240, 0
        %v1283 = vadd.f32 %v1264, %v1281
        %v1284 = vadd.f32 %v1265, %v1281
        %v1285 = vadd.f32 %v1266, %v1281
        %v1286 = vadd.f32 %v1267, %v1281
        %v1287 = vadd.f32 %v1268, %v1281
        %v1288 = vadd.f32 %v1269, %v1281
        %v1289 = vadd.f32 %v1270, %v1281
        %v1290 = vadd.f32 %v1271, %v1281
        %v1291 = vadd.f32 %v1272, %v1281
        %v1292 = vadd.f32 %v1273, %v1281
        %v1293 = vadd.f32 %v1274, %v1281
        %v1294 = vadd.f32 %v1275, %v1281
        %v1295 = vadd.f32 %v1276, %v1281
        %v1296 = vadd.f32 %v1277, %v1281
        %v1297 = vadd.f32 %v1278, %v1281
        %v1298 = vadd.f32 %v1279, %v1281
        %vm1299 = vcmp.gt.f32.partialorder %v1283, 0.0
        %vm1300 = vcmp.gt.f32.partialorder %v1284, 0.0
        %vm1301 = vcmp.gt.f32.partialorder %v1285, 0.0
        %vm1302 = vcmp.gt.f32.partialorder %v1286, 0.0
        %vm1303 = vcmp.gt.f32.partialorder %v1287, 0.0
        %vm1304 = vcmp.gt.f32.partialorder %v1288, 0.0
        %vm1305 = vcmp.gt.f32.partialorder %v1289, 0.0
        %vm1306 = vcmp.gt.f32.partialorder %v1290, 0.0
        %vm1307 = vcmp.gt.f32.partialorder %v1291, 0.0
        %vm1308 = vcmp.gt.f32.partialorder %v1292, 0.0
        %vm1309 = vcmp.gt.f32.partialorder %v1293, 0.0
        %vm1310 = vcmp.gt.f32.partialorder %v1294, 0.0
        %vm1311 = vcmp.gt.f32.partialorder %v1295, 0.0
        %vm1312 = vcmp.gt.f32.partialorder %v1296, 0.0
        %vm1313 = vcmp.gt.f32.partialorder %v1297, 0.0
        %vm1314 = vcmp.gt.f32.partialorder %v1298, 0.0
        %v1315 = vmul.f32 %v1283, 0.01
        %v1316 = vmul.f32 %v1284, 0.01
        %v1317 = vmul.f32 %v1285, 0.01
        %v1318 = vmul.f32 %v1286, 0.01
        %v1319 = vmul.f32 %v1287, 0.01
        %v1320 = vmul.f32 %v1288, 0.01
        %v1321 = vmul.f32 %v1289, 0.01
        %v1322 = vmul.f32 %v1290, 0.01
        %v1323 = vmul.f32 %v1291, 0.01
        %v1324 = vmul.f32 %v1292, 0.01
        %v1325 = vmul.f32 %v1293, 0.01
        %v1326 = vmul.f32 %v1294, 0.01
        %v1327 = vmul.f32 %v1295, 0.01
        %v1328 = vmul.f32 %v1296, 0.01
        %v1329 = vmul.f32 %v1297, 0.01
        %v1330 = vmul.f32 %v1298, 0.01
        %v1331 = vsel %vm1299, %v1283, %v1315
        %v1332 = vsel %vm1300, %v1284, %v1316
        %v1333 = vsel %vm1301, %v1285, %v1317
        %v1334 = vsel %vm1302, %v1286, %v1318
        %v1335 = vsel %vm1303, %v1287, %v1319
        %v1336 = vsel %vm1304, %v1288, %v1320
        %v1337 = vsel %vm1305, %v1289, %v1321
        %v1338 = vsel %vm1306, %v1290, %v1322
        %v1339 = vsel %vm1307, %v1291, %v1323
        %v1340 = vsel %vm1308, %v1292, %v1324
        %v1341 = vsel %vm1309, %v1293, %v1325
        %v1342 = vsel %vm1310, %v1294, %v1326
        %v1343 = vsel %vm1311, %v1295, %v1327
        %v1344 = vsel %vm1312, %v1296, %v1328
        %v1345 = vsel %vm1313, %v1297, %v1329
        %v1346 = vsel %vm1314, %v1298, %v1330
        %s1347 = scalar_lea.vmem [#allocation2], 24
        %1348 = vst [vmem:[%s1347 + $0x1] sm:$0xff] %v1331
        %1349 = vst [vmem:[%s1347 + $0x9] sm:$0xff] %v1332
        %1350 = vst [vmem:[%s1347 + $0x19] sm:$0xff] %v1333
        %1351 = vst [vmem:[%s1347 + $0x21] sm:$0xff] %v1334
        %1352 = vst [vmem:[%s1347 + $0x31] sm:$0xff] %v1335
        %1353 = vst [vmem:[%s1347 + $0x39] sm:$0xff] %v1336
        %1354 = vst [vmem:[%s1347 + $0x49] sm:$0xff] %v1337
        %1355 = vst [vmem:[%s1347 + $0x51] sm:$0xff] %v1338
        %1356 = vst [vmem:[%s1347 + $0x61] sm:$0xff] %v1339
        %1357 = vst [vmem:[%s1347 + $0x69] sm:$0xff] %v1340
        %1358 = vst [vmem:[%s1347 + $0x79] sm:$0xff] %v1341
        %1359 = vst [vmem:[%s1347 + $0x81] sm:$0xff] %v1342
        %1360 = vst [vmem:[%s1347 + $0x91] sm:$0xff] %v1343
        %1361 = vst [vmem:[%s1347 + $0x99] sm:$0xff] %v1344
        %1362 = vst [vmem:[%s1347 + $0xa9] sm:$0xff] %v1345
        %1363 = vst [vmem:[%s1347 + $0xb1] sm:$0xff] %v1346
        %s1364 = scalar_lea.vmem %s239, 192
        %v1365 = vld [vmem:[%s1364] sm:$0xff]
        %v1366 = vld [vmem:[%s1364 + $0x8] sm:$0xff]
        %v1367 = vld [vmem:[%s1364 + $0x18] sm:$0xff]
        %v1368 = vld [vmem:[%s1364 + $0x20] sm:$0xff]
        %v1369 = vld [vmem:[%s1364 + $0x30] sm:$0xff]
        %v1370 = vld [vmem:[%s1364 + $0x38] sm:$0xff]
        %v1371 = vld [vmem:[%s1364 + $0x48] sm:$0xff]
        %v1372 = vld [vmem:[%s1364 + $0x50] sm:$0xff]
        %v1373 = vld [vmem:[%s1364 + $0x60] sm:$0xff]
        %v1374 = vld [vmem:[%s1364 + $0x68] sm:$0xff]
        %v1375 = vld [vmem:[%s1364 + $0x78] sm:$0xff]
        %v1376 = vld [vmem:[%s1364 + $0x80] sm:$0xff]
        %v1377 = vld [vmem:[%s1364 + $0x90] sm:$0xff]
        %v1378 = vld [vmem:[%s1364 + $0x98] sm:$0xff]
        %v1379 = vld [vmem:[%s1364 + $0xa8] sm:$0xff]
        %v1380 = vld [vmem:[%s1364 + $0xb0] sm:$0xff]
        %v1381 = vld [vmem:[%s1] sm:$0xff]
        %v1382 = vld [vmem:[%s1 + $0x8] sm:$0xff]
        %v1383 = vld [vmem:[%s1 + $0x10] sm:$0xff]
        %v1384 = vld [vmem:[%s1 + $0x18] sm:$0xff]
        %v1385 = vld [vmem:[%s1 + $0x20] sm:$0xff]
        %v1386 = vld [vmem:[%s1 + $0x28] sm:$0xff]
        %v1387 = vld [vmem:[%s1 + $0x30] sm:$0xff]
        %v1388 = vld [vmem:[%s1 + $0x38] sm:$0xff]
        %v1389 = vld [vmem:[%s1 + $0x40] sm:$0xff]
        %v1390 = vld [vmem:[%s1 + $0x48] sm:$0xff]
        %v1391 = vld [vmem:[%s1 + $0x50] sm:$0xff]
        %v1392 = vld [vmem:[%s1 + $0x58] sm:$0xff]
        %v1393 = vld [vmem:[%s1 + $0x60] sm:$0xff]
        %v1394 = vld [vmem:[%s1 + $0x68] sm:$0xff]
        %v1395 = vld [vmem:[%s1 + $0x70] sm:$0xff]
        %v1396 = vld [vmem:[%s1 + $0x78] sm:$0xff]
        %v1397 = vld [vmem:[%s1364 + $0x1] sm:$0xff]
        %v1398 = vld [vmem:[%s1364 + $0x9] sm:$0xff]
        %v1399 = vld [vmem:[%s1364 + $0x19] sm:$0xff]
        %v1400 = vld [vmem:[%s1364 + $0x21] sm:$0xff]
        %v1401 = vld [vmem:[%s1364 + $0x31] sm:$0xff]
        %v1402 = vld [vmem:[%s1364 + $0x39] sm:$0xff]
        %v1403 = vld [vmem:[%s1364 + $0x49] sm:$0xff]
        %v1404 = vld [vmem:[%s1364 + $0x51] sm:$0xff]
        %v1405 = vld [vmem:[%s1364 + $0x61] sm:$0xff]
        %v1406 = vld [vmem:[%s1364 + $0x69] sm:$0xff]
        %v1407 = vld [vmem:[%s1364 + $0x79] sm:$0xff]
        %v1408 = vld [vmem:[%s1364 + $0x81] sm:$0xff]
        %v1409 = vld [vmem:[%s1364 + $0x91] sm:$0xff]
        %v1410 = vld [vmem:[%s1364 + $0x99] sm:$0xff]
        %v1411 = vld [vmem:[%s1364 + $0xa9] sm:$0xff]
        %v1412 = vld [vmem:[%s1364 + $0xb1] sm:$0xff]
        %v1413 = vld [vmem:[%s333] sm:$0xff]
        %v1414 = vld [vmem:[%s333 + $0x8] sm:$0xff]
        %v1415 = vld [vmem:[%s333 + $0x10] sm:$0xff]
        %v1416 = vld [vmem:[%s333 + $0x18] sm:$0xff]
        %v1417 = vld [vmem:[%s333 + $0x20] sm:$0xff]
        %v1418 = vld [vmem:[%s333 + $0x28] sm:$0xff]
        %v1419 = vld [vmem:[%s333 + $0x30] sm:$0xff]
        %v1420 = vld [vmem:[%s333 + $0x38] sm:$0xff]
        %v1421 = vld [vmem:[%s333 + $0x40] sm:$0xff]
        %v1422 = vld [vmem:[%s333 + $0x48] sm:$0xff]
        %v1423 = vld [vmem:[%s333 + $0x50] sm:$0xff]
        %v1424 = vld [vmem:[%s333 + $0x58] sm:$0xff]
        %v1425 = vld [vmem:[%s333 + $0x60] sm:$0xff]
        %v1426 = vld [vmem:[%s333 + $0x68] sm:$0xff]
        %v1427 = vld [vmem:[%s333 + $0x70] sm:$0xff]
        %v1428 = vld [vmem:[%s333 + $0x78] sm:$0xff]
        %1429 = vmatpush.msra.mxu0 %v1428
        %1430 = vmatpush.msra.mxu0 %v1427
        %1431 = vmatpush.msra.mxu0 %v1426
        %1432 = vmatpush.msra.mxu0 %v1425
        %1433 = vmatpush.msra.mxu0 %v1424
        %1434 = vmatpush.msra.mxu0 %v1423
        %1435 = vmatpush.msra.mxu0 %v1422
        %1436 = vmatpush.msra.mxu0 %v1421
        %1437 = vmatpush.msra.mxu0 %v1420
        %1438 = vmatpush.msra.mxu0 %v1419
        %1439 = vmatpush.msra.mxu0 %v1418
        %1440 = vmatpush.msra.mxu0 %v1417
        %1441 = vmatpush.msra.mxu0 %v1416
        %1442 = vmatpush.msra.mxu0 %v1415
        %1443 = vmatpush.msra.mxu0 %v1414
        %1444 = vmatpush.msra.mxu0 %v1413
        %1445 = vmatmul.f32.gmra.mxu0 %v1397
        %v1446 = vpop.f32.mrf.mxu0
        %v1447 = vadd.f32 0.0, %v1446
        %1448 = vmatmul.f32.gmra.mxu0 %v1398
        %v1449 = vpop.f32.mrf.mxu0
        %v1450 = vadd.f32 0.0, %v1449
        %1451 = vmatmul.f32.gmra.mxu0 %v1399
        %v1452 = vpop.f32.mrf.mxu0
        %v1453 = vadd.f32 0.0, %v1452
        %1454 = vmatmul.f32.gmra.mxu0 %v1400
        %v1455 = vpop.f32.mrf.mxu0
        %v1456 = vadd.f32 0.0, %v1455
        %1457 = vmatmul.f32.gmra.mxu0 %v1401
        %v1458 = vpop.f32.mrf.mxu0
        %v1459 = vadd.f32 0.0, %v1458
        %1460 = vmatmul.f32.gmra.mxu0 %v1402
        %v1461 = vpop.f32.mrf.mxu0
        %v1462 = vadd.f32 0.0, %v1461
        %1463 = vmatmul.f32.gmra.mxu0 %v1403
        %v1464 = vpop.f32.mrf.mxu0
        %v1465 = vadd.f32 0.0, %v1464
        %1466 = vmatmul.f32.gmra.mxu0 %v1404
        %v1467 = vpop.f32.mrf.mxu0
        %v1468 = vadd.f32 0.0, %v1467
        %1469 = vmatmul.f32.gmra.mxu0 %v1405
        %v1470 = vpop.f32.mrf.mxu0
        %v1471 = vadd.f32 0.0, %v1470
        %1472 = vmatmul.f32.gmra.mxu0 %v1406
        %v1473 = vpop.f32.mrf.mxu0
        %v1474 = vadd.f32 0.0, %v1473
        %1475 = vmatmul.f32.gmra.mxu0 %v1407
        %v1476 = vpop.f32.mrf.mxu0
        %v1477 = vadd.f32 0.0, %v1476
        %1478 = vmatmul.f32.gmra.mxu0 %v1408
        %v1479 = vpop.f32.mrf.mxu0
        %v1480 = vadd.f32 0.0, %v1479
        %1481 = vmatmul.f32.gmra.mxu0 %v1409
        %v1482 = vpop.f32.mrf.mxu0
        %v1483 = vadd.f32 0.0, %v1482
        %1484 = vmatmul.f32.gmra.mxu0 %v1410
        %v1485 = vpop.f32.mrf.mxu0
        %v1486 = vadd.f32 0.0, %v1485
        %1487 = vmatmul.f32.gmra.mxu0 %v1411
        %v1488 = vpop.f32.mrf.mxu0
        %v1489 = vadd.f32 0.0, %v1488
        %1490 = vmatmul.f32.gmra.mxu0 %v1412
        %v1491 = vpop.f32.mrf.mxu0
        %v1492 = vadd.f32 0.0, %v1491
        %1493 = vdwg.mxu0
        %1494 = vmatpush.msra.mxu0 %v1396
        %1495 = vmatpush.msra.mxu0 %v1395
        %1496 = vmatpush.msra.mxu0 %v1394
        %1497 = vmatpush.msra.mxu0 %v1393
        %1498 = vmatpush.msra.mxu0 %v1392
        %1499 = vmatpush.msra.mxu0 %v1391
        %1500 = vmatpush.msra.mxu0 %v1390
        %1501 = vmatpush.msra.mxu0 %v1389
        %1502 = vmatpush.msra.mxu0 %v1388
        %1503 = vmatpush.msra.mxu0 %v1387
        %1504 = vmatpush.msra.mxu0 %v1386
        %1505 = vmatpush.msra.mxu0 %v1385
        %1506 = vmatpush.msra.mxu0 %v1384
        %1507 = vmatpush.msra.mxu0 %v1383
        %1508 = vmatpush.msra.mxu0 %v1382
        %1509 = vmatpush.msra.mxu0 %v1381
        %1510 = vmatmul.f32.gmra.mxu0 %v1365
        %v1511 = vpop.f32.mrf.mxu0
        %v1512 = vadd.f32 %v1447, %v1511
        %1513 = vmatmul.f32.gmra.mxu0 %v1366
        %v1514 = vpop.f32.mrf.mxu0
        %v1515 = vadd.f32 %v1450, %v1514
        %1516 = vmatmul.f32.gmra.mxu0 %v1367
        %v1517 = vpop.f32.mrf.mxu0
        %v1518 = vadd.f32 %v1453, %v1517
        %1519 = vmatmul.f32.gmra.mxu0 %v1368
        %v1520 = vpop.f32.mrf.mxu0
        %v1521 = vadd.f32 %v1456, %v1520
        %1522 = vmatmul.f32.gmra.mxu0 %v1369
        %v1523 = vpop.f32.mrf.mxu0
        %v1524 = vadd.f32 %v1459, %v1523
        %1525 = vmatmul.f32.gmra.mxu0 %v1370
        %v1526 = vpop.f32.mrf.mxu0
        %v1527 = vadd.f32 %v1462, %v1526
        %1528 = vmatmul.f32.gmra.mxu0 %v1371
        %v1529 = vpop.f32.mrf.mxu0
        %v1530 = vadd.f32 %v1465, %v1529
        %1531 = vmatmul.f32.gmra.mxu0 %v1372
        %v1532 = vpop.f32.mrf.mxu0
        %v1533 = vadd.f32 %v1468, %v1532
        %1534 = vmatmul.f32.gmra.mxu0 %v1373
        %v1535 = vpop.f32.mrf.mxu0
        %v1536 = vadd.f32 %v1471, %v1535
        %1537 = vmatmul.f32.gmra.mxu0 %v1374
        %v1538 = vpop.f32.mrf.mxu0
        %v1539 = vadd.f32 %v1474, %v1538
        %1540 = vmatmul.f32.gmra.mxu0 %v1375
        %v1541 = vpop.f32.mrf.mxu0
        %v1542 = vadd.f32 %v1477, %v1541
        %1543 = vmatmul.f32.gmra.mxu0 %v1376
        %v1544 = vpop.f32.mrf.mxu0
        %v1545 = vadd.f32 %v1480, %v1544
        %1546 = vmatmul.f32.gmra.mxu0 %v1377
        %v1547 = vpop.f32.mrf.mxu0
        %v1548 = vadd.f32 %v1483, %v1547
        %1549 = vmatmul.f32.gmra.mxu0 %v1378
        %v1550 = vpop.f32.mrf.mxu0
        %v1551 = vadd.f32 %v1486, %v1550
        %1552 = vmatmul.f32.gmra.mxu0 %v1379
        %v1553 = vpop.f32.mrf.mxu0
        %v1554 = vadd.f32 %v1489, %v1553
        %1555 = vmatmul.f32.gmra.mxu0 %v1380
        %v1556 = vpop.f32.mrf.mxu0
        %v1557 = vadd.f32 %v1492, %v1556
        %1558 = vdwg.mxu0
        %v1559 = vld [vmem:[%s1364 + $0x2] sm:$0xff]
        %v1560 = vld [vmem:[%s1364 + $0xa] sm:$0xff]
        %v1561 = vld [vmem:[%s1364 + $0x1a] sm:$0xff]
        %v1562 = vld [vmem:[%s1364 + $0x22] sm:$0xff]
        %v1563 = vld [vmem:[%s1364 + $0x32] sm:$0xff]
        %v1564 = vld [vmem:[%s1364 + $0x3a] sm:$0xff]
        %v1565 = vld [vmem:[%s1364 + $0x4a] sm:$0xff]
        %v1566 = vld [vmem:[%s1364 + $0x52] sm:$0xff]
        %v1567 = vld [vmem:[%s1364 + $0x62] sm:$0xff]
        %v1568 = vld [vmem:[%s1364 + $0x6a] sm:$0xff]
        %v1569 = vld [vmem:[%s1364 + $0x7a] sm:$0xff]
        %v1570 = vld [vmem:[%s1364 + $0x82] sm:$0xff]
        %v1571 = vld [vmem:[%s1364 + $0x92] sm:$0xff]
        %v1572 = vld [vmem:[%s1364 + $0x9a] sm:$0xff]
        %v1573 = vld [vmem:[%s1364 + $0xaa] sm:$0xff]
        %v1574 = vld [vmem:[%s1364 + $0xb2] sm:$0xff]
        %v1575 = vld [vmem:[%s496] sm:$0xff]
        %v1576 = vld [vmem:[%s496 + $0x8] sm:$0xff]
        %v1577 = vld [vmem:[%s496 + $0x10] sm:$0xff]
        %v1578 = vld [vmem:[%s496 + $0x18] sm:$0xff]
        %v1579 = vld [vmem:[%s496 + $0x20] sm:$0xff]
        %v1580 = vld [vmem:[%s496 + $0x28] sm:$0xff]
        %v1581 = vld [vmem:[%s496 + $0x30] sm:$0xff]
        %v1582 = vld [vmem:[%s496 + $0x38] sm:$0xff]
        %v1583 = vld [vmem:[%s496 + $0x40] sm:$0xff]
        %v1584 = vld [vmem:[%s496 + $0x48] sm:$0xff]
        %v1585 = vld [vmem:[%s496 + $0x50] sm:$0xff]
        %v1586 = vld [vmem:[%s496 + $0x58] sm:$0xff]
        %v1587 = vld [vmem:[%s496 + $0x60] sm:$0xff]
        %v1588 = vld [vmem:[%s496 + $0x68] sm:$0xff]
        %v1589 = vld [vmem:[%s496 + $0x70] sm:$0xff]
        %v1590 = vld [vmem:[%s496 + $0x78] sm:$0xff]
        %1591 = vmatpush.msra.mxu0 %v1590
        %1592 = vmatpush.msra.mxu0 %v1589
        %1593 = vmatpush.msra.mxu0 %v1588
        %1594 = vmatpush.msra.mxu0 %v1587
        %1595 = vmatpush.msra.mxu0 %v1586
        %1596 = vmatpush.msra.mxu0 %v1585
        %1597 = vmatpush.msra.mxu0 %v1584
        %1598 = vmatpush.msra.mxu0 %v1583
        %1599 = vmatpush.msra.mxu0 %v1582
        %1600 = vmatpush.msra.mxu0 %v1581
        %1601 = vmatpush.msra.mxu0 %v1580
        %1602 = vmatpush.msra.mxu0 %v1579
        %1603 = vmatpush.msra.mxu0 %v1578
        %1604 = vmatpush.msra.mxu0 %v1577
        %1605 = vmatpush.msra.mxu0 %v1576
        %1606 = vmatpush.msra.mxu0 %v1575
        %1607 = vmatmul.f32.gmra.mxu0 %v1559
        %v1608 = vpop.f32.mrf.mxu0
        %v1609 = vadd.f32 0.0, %v1608
        %1610 = vmatmul.f32.gmra.mxu0 %v1560
        %v1611 = vpop.f32.mrf.mxu0
        %v1612 = vadd.f32 0.0, %v1611
        %1613 = vmatmul.f32.gmra.mxu0 %v1561
        %v1614 = vpop.f32.mrf.mxu0
        %v1615 = vadd.f32 0.0, %v1614
        %1616 = vmatmul.f32.gmra.mxu0 %v1562
        %v1617 = vpop.f32.mrf.mxu0
        %v1618 = vadd.f32 0.0, %v1617
        %1619 = vmatmul.f32.gmra.mxu0 %v1563
        %v1620 = vpop.f32.mrf.mxu0
        %v1621 = vadd.f32 0.0, %v1620
        %1622 = vmatmul.f32.gmra.mxu0 %v1564
        %v1623 = vpop.f32.mrf.mxu0
        %v1624 = vadd.f32 0.0, %v1623
        %1625 = vmatmul.f32.gmra.mxu0 %v1565
        %v1626 = vpop.f32.mrf.mxu0
        %v1627 = vadd.f32 0.0, %v1626
        %1628 = vmatmul.f32.gmra.mxu0 %v1566
        %v1629 = vpop.f32.mrf.mxu0
        %v1630 = vadd.f32 0.0, %v1629
        %1631 = vmatmul.f32.gmra.mxu0 %v1567
        %v1632 = vpop.f32.mrf.mxu0
        %v1633 = vadd.f32 0.0, %v1632
        %1634 = vmatmul.f32.gmra.mxu0 %v1568
        %v1635 = vpop.f32.mrf.mxu0
        %v1636 = vadd.f32 0.0, %v1635
        %1637 = vmatmul.f32.gmra.mxu0 %v1569
        %v1638 = vpop.f32.mrf.mxu0
        %v1639 = vadd.f32 0.0, %v1638
        %1640 = vmatmul.f32.gmra.mxu0 %v1570
        %v1641 = vpop.f32.mrf.mxu0
        %v1642 = vadd.f32 0.0, %v1641
        %1643 = vmatmul.f32.gmra.mxu0 %v1571
        %v1644 = vpop.f32.mrf.mxu0
        %v1645 = vadd.f32 0.0, %v1644
        %1646 = vmatmul.f32.gmra.mxu0 %v1572
        %v1647 = vpop.f32.mrf.mxu0
        %v1648 = vadd.f32 0.0, %v1647
        %1649 = vmatmul.f32.gmra.mxu0 %v1573
        %v1650 = vpop.f32.mrf.mxu0
        %v1651 = vadd.f32 0.0, %v1650
        %1652 = vmatmul.f32.gmra.mxu0 %v1574
        %v1653 = vpop.f32.mrf.mxu0
        %v1654 = vadd.f32 0.0, %v1653
        %1655 = vdwg.mxu0
        %v1656 = vadd.f32 %v1512, %v1609
        %v1657 = vadd.f32 %v1515, %v1612
        %v1658 = vadd.f32 %v1518, %v1615
        %v1659 = vadd.f32 %v1521, %v1618
        %v1660 = vadd.f32 %v1524, %v1621
        %v1661 = vadd.f32 %v1527, %v1624
        %v1662 = vadd.f32 %v1530, %v1627
        %v1663 = vadd.f32 %v1533, %v1630
        %v1664 = vadd.f32 %v1536, %v1633
        %v1665 = vadd.f32 %v1539, %v1636
        %v1666 = vadd.f32 %v1542, %v1639
        %v1667 = vadd.f32 %v1545, %v1642
        %v1668 = vadd.f32 %v1548, %v1645
        %v1669 = vadd.f32 %v1551, %v1648
        %v1670 = vadd.f32 %v1554, %v1651
        %v1671 = vadd.f32 %v1557, %v1654
        %s1672 = scalar_lea.vmem %s239, 216
        %v1673 = vld [vmem:[%s1672] sm:$0xff]
        %v1674 = vld [vmem:[%s1672 + $0x8] sm:$0xff]
        %v1675 = vld [vmem:[%s1672 + $0x18] sm:$0xff]
        %v1676 = vld [vmem:[%s1672 + $0x20] sm:$0xff]
        %v1677 = vld [vmem:[%s1672 + $0x30] sm:$0xff]
        %v1678 = vld [vmem:[%s1672 + $0x38] sm:$0xff]
        %v1679 = vld [vmem:[%s1672 + $0x48] sm:$0xff]
        %v1680 = vld [vmem:[%s1672 + $0x50] sm:$0xff]
        %v1681 = vld [vmem:[%s1672 + $0x60] sm:$0xff]
        %v1682 = vld [vmem:[%s1672 + $0x68] sm:$0xff]
        %v1683 = vld [vmem:[%s1672 + $0x78] sm:$0xff]
        %v1684 = vld [vmem:[%s1672 + $0x80] sm:$0xff]
        %v1685 = vld [vmem:[%s1672 + $0x90] sm:$0xff]
        %v1686 = vld [vmem:[%s1672 + $0x98] sm:$0xff]
        %v1687 = vld [vmem:[%s1672 + $0xa8] sm:$0xff]
        %v1688 = vld [vmem:[%s1672 + $0xb0] sm:$0xff]
        %v1689 = vld [vmem:[%s611] sm:$0xff]
        %v1690 = vld [vmem:[%s611 + $0x8] sm:$0xff]
        %v1691 = vld [vmem:[%s611 + $0x10] sm:$0xff]
        %v1692 = vld [vmem:[%s611 + $0x18] sm:$0xff]
        %v1693 = vld [vmem:[%s611 + $0x20] sm:$0xff]
        %v1694 = vld [vmem:[%s611 + $0x28] sm:$0xff]
        %v1695 = vld [vmem:[%s611 + $0x30] sm:$0xff]
        %v1696 = vld [vmem:[%s611 + $0x38] sm:$0xff]
        %v1697 = vld [vmem:[%s611 + $0x40] sm:$0xff]
        %v1698 = vld [vmem:[%s611 + $0x48] sm:$0xff]
        %v1699 = vld [vmem:[%s611 + $0x50] sm:$0xff]
        %v1700 = vld [vmem:[%s611 + $0x58] sm:$0xff]
        %v1701 = vld [vmem:[%s611 + $0x60] sm:$0xff]
        %v1702 = vld [vmem:[%s611 + $0x68] sm:$0xff]
        %v1703 = vld [vmem:[%s611 + $0x70] sm:$0xff]
        %v1704 = vld [vmem:[%s611 + $0x78] sm:$0xff]
        %1705 = vmatpush.msra.mxu0 %v1704
        %1706 = vmatpush.msra.mxu0 %v1703
        %1707 = vmatpush.msra.mxu0 %v1702
        %1708 = vmatpush.msra.mxu0 %v1701
        %1709 = vmatpush.msra.mxu0 %v1700
        %1710 = vmatpush.msra.mxu0 %v1699
        %1711 = vmatpush.msra.mxu0 %v1698
        %1712 = vmatpush.msra.mxu0 %v1697
        %1713 = vmatpush.msra.mxu0 %v1696
        %1714 = vmatpush.msra.mxu0 %v1695
        %1715 = vmatpush.msra.mxu0 %v1694
        %1716 = vmatpush.msra.mxu0 %v1693
        %1717 = vmatpush.msra.mxu0 %v1692
        %1718 = vmatpush.msra.mxu0 %v1691
        %1719 = vmatpush.msra.mxu0 %v1690
        %1720 = vmatpush.msra.mxu0 %v1689
        %1721 = vmatmul.f32.gmra.mxu0 %v1673
        %v1722 = vpop.f32.mrf.mxu0
        %v1723 = vadd.f32 0.0, %v1722
        %1724 = vmatmul.f32.gmra.mxu0 %v1674
        %v1725 = vpop.f32.mrf.mxu0
        %v1726 = vadd.f32 0.0, %v1725
        %1727 = vmatmul.f32.gmra.mxu0 %v1675
        %v1728 = vpop.f32.mrf.mxu0
        %v1729 = vadd.f32 0.0, %v1728
        %1730 = vmatmul.f32.gmra.mxu0 %v1676
        %v1731 = vpop.f32.mrf.mxu0
        %v1732 = vadd.f32 0.0, %v1731
        %1733 = vmatmul.f32.gmra.mxu0 %v1677
        %v1734 = vpop.f32.mrf.mxu0
        %v1735 = vadd.f32 0.0, %v1734
        %1736 = vmatmul.f32.gmra.mxu0 %v1678
        %v1737 = vpop.f32.mrf.mxu0
        %v1738 = vadd.f32 0.0, %v1737
        %1739 = vmatmul.f32.gmra.mxu0 %v1679
        %v1740 = vpop.f32.mrf.mxu0
        %v1741 = vadd.f32 0.0, %v1740
        %1742 = vmatmul.f32.gmra.mxu0 %v1680
        %v1743 = vpop.f32.mrf.mxu0
        %v1744 = vadd.f32 0.0, %v1743
        %1745 = vmatmul.f32.gmra.mxu0 %v1681
        %v1746 = vpop.f32.mrf.mxu0
        %v1747 = vadd.f32 0.0, %v1746
        %1748 = vmatmul.f32.gmra.mxu0 %v1682
        %v1749 = vpop.f32.mrf.mxu0
        %v1750 = vadd.f32 0.0, %v1749
        %1751 = vmatmul.f32.gmra.mxu0 %v1683
        %v1752 = vpop.f32.mrf.mxu0
        %v1753 = vadd.f32 0.0, %v1752
        %1754 = vmatmul.f32.gmra.mxu0 %v1684
        %v1755 = vpop.f32.mrf.mxu0
        %v1756 = vadd.f32 0.0, %v1755
        %1757 = vmatmul.f32.gmra.mxu0 %v1685
        %v1758 = vpop.f32.mrf.mxu0
        %v1759 = vadd.f32 0.0, %v1758
        %1760 = vmatmul.f32.gmra.mxu0 %v1686
        %v1761 = vpop.f32.mrf.mxu0
        %v1762 = vadd.f32 0.0, %v1761
        %1763 = vmatmul.f32.gmra.mxu0 %v1687
        %v1764 = vpop.f32.mrf.mxu0
        %v1765 = vadd.f32 0.0, %v1764
        %1766 = vmatmul.f32.gmra.mxu0 %v1688
        %v1767 = vpop.f32.mrf.mxu0
        %v1768 = vadd.f32 0.0, %v1767
        %1769 = vdwg.mxu0
        %v1770 = vadd.f32 %v1656, %v1723
        %v1771 = vadd.f32 %v1657, %v1726
        %v1772 = vadd.f32 %v1658, %v1729
        %v1773 = vadd.f32 %v1659, %v1732
        %v1774 = vadd.f32 %v1660, %v1735
        %v1775 = vadd.f32 %v1661, %v1738
        %v1776 = vadd.f32 %v1662, %v1741
        %v1777 = vadd.f32 %v1663, %v1744
        %v1778 = vadd.f32 %v1664, %v1747
        %v1779 = vadd.f32 %v1665, %v1750
        %v1780 = vadd.f32 %v1666, %v1753
        %v1781 = vadd.f32 %v1667, %v1756
        %v1782 = vadd.f32 %v1668, %v1759
        %v1783 = vadd.f32 %v1669, %v1762
        %v1784 = vadd.f32 %v1670, %v1765
        %v1785 = vadd.f32 %v1671, %v1768
        %v1786 = vld [vmem:[%s1672 + $0x1] sm:$0xff]
        %v1787 = vld [vmem:[%s1672 + $0x9] sm:$0xff]
        %v1788 = vld [vmem:[%s1672 + $0x19] sm:$0xff]
        %v1789 = vld [vmem:[%s1672 + $0x21] sm:$0xff]
        %v1790 = vld [vmem:[%s1672 + $0x31] sm:$0xff]
        %v1791 = vld [vmem:[%s1672 + $0x39] sm:$0xff]
        %v1792 = vld [vmem:[%s1672 + $0x49] sm:$0xff]
        %v1793 = vld [vmem:[%s1672 + $0x51] sm:$0xff]
        %v1794 = vld [vmem:[%s1672 + $0x61] sm:$0xff]
        %v1795 = vld [vmem:[%s1672 + $0x69] sm:$0xff]
        %v1796 = vld [vmem:[%s1672 + $0x79] sm:$0xff]
        %v1797 = vld [vmem:[%s1672 + $0x81] sm:$0xff]
        %v1798 = vld [vmem:[%s1672 + $0x91] sm:$0xff]
        %v1799 = vld [vmem:[%s1672 + $0x99] sm:$0xff]
        %v1800 = vld [vmem:[%s1672 + $0xa9] sm:$0xff]
        %v1801 = vld [vmem:[%s1672 + $0xb1] sm:$0xff]
        %v1802 = vld [vmem:[%s725] sm:$0xff]
        %v1803 = vld [vmem:[%s725 + $0x8] sm:$0xff]
        %v1804 = vld [vmem:[%s725 + $0x10] sm:$0xff]
        %v1805 = vld [vmem:[%s725 + $0x18] sm:$0xff]
        %v1806 = vld [vmem:[%s725 + $0x20] sm:$0xff]
        %v1807 = vld [vmem:[%s725 + $0x28] sm:$0xff]
        %v1808 = vld [vmem:[%s725 + $0x30] sm:$0xff]
        %v1809 = vld [vmem:[%s725 + $0x38] sm:$0xff]
        %v1810 = vld [vmem:[%s725 + $0x40] sm:$0xff]
        %v1811 = vld [vmem:[%s725 + $0x48] sm:$0xff]
        %v1812 = vld [vmem:[%s725 + $0x50] sm:$0xff]
        %v1813 = vld [vmem:[%s725 + $0x58] sm:$0xff]
        %v1814 = vld [vmem:[%s725 + $0x60] sm:$0xff]
        %v1815 = vld [vmem:[%s725 + $0x68] sm:$0xff]
        %v1816 = vld [vmem:[%s725 + $0x70] sm:$0xff]
        %v1817 = vld [vmem:[%s725 + $0x78] sm:$0xff]
        %1818 = vmatpush.msra.mxu0 %v1817
        %1819 = vmatpush.msra.mxu0 %v1816
        %1820 = vmatpush.msra.mxu0 %v1815
        %1821 = vmatpush.msra.mxu0 %v1814
        %1822 = vmatpush.msra.mxu0 %v1813
        %1823 = vmatpush.msra.mxu0 %v1812
        %1824 = vmatpush.msra.mxu0 %v1811
        %1825 = vmatpush.msra.mxu0 %v1810
        %1826 = vmatpush.msra.mxu0 %v1809
        %1827 = vmatpush.msra.mxu0 %v1808
        %1828 = vmatpush.msra.mxu0 %v1807
        %1829 = vmatpush.msra.mxu0 %v1806
        %1830 = vmatpush.msra.mxu0 %v1805
        %1831 = vmatpush.msra.mxu0 %v1804
        %1832 = vmatpush.msra.mxu0 %v1803
        %1833 = vmatpush.msra.mxu0 %v1802
        %1834 = vmatmul.f32.gmra.mxu0 %v1786
        %v1835 = vpop.f32.mrf.mxu0
        %v1836 = vadd.f32 0.0, %v1835
        %1837 = vmatmul.f32.gmra.mxu0 %v1787
        %v1838 = vpop.f32.mrf.mxu0
        %v1839 = vadd.f32 0.0, %v1838
        %1840 = vmatmul.f32.gmra.mxu0 %v1788
        %v1841 = vpop.f32.mrf.mxu0
        %v1842 = vadd.f32 0.0, %v1841
        %1843 = vmatmul.f32.gmra.mxu0 %v1789
        %v1844 = vpop.f32.mrf.mxu0
        %v1845 = vadd.f32 0.0, %v1844
        %1846 = vmatmul.f32.gmra.mxu0 %v1790
        %v1847 = vpop.f32.mrf.mxu0
        %v1848 = vadd.f32 0.0, %v1847
        %1849 = vmatmul.f32.gmra.mxu0 %v1791
        %v1850 = vpop.f32.mrf.mxu0
        %v1851 = vadd.f32 0.0, %v1850
        %1852 = vmatmul.f32.gmra.mxu0 %v1792
        %v1853 = vpop.f32.mrf.mxu0
        %v1854 = vadd.f32 0.0, %v1853
        %1855 = vmatmul.f32.gmra.mxu0 %v1793
        %v1856 = vpop.f32.mrf.mxu0
        %v1857 = vadd.f32 0.0, %v1856
        %1858 = vmatmul.f32.gmra.mxu0 %v1794
        %v1859 = vpop.f32.mrf.mxu0
        %v1860 = vadd.f32 0.0, %v1859
        %1861 = vmatmul.f32.gmra.mxu0 %v1795
        %v1862 = vpop.f32.mrf.mxu0
        %v1863 = vadd.f32 0.0, %v1862
        %1864 = vmatmul.f32.gmra.mxu0 %v1796
        %v1865 = vpop.f32.mrf.mxu0
        %v1866 = vadd.f32 0.0, %v1865
        %1867 = vmatmul.f32.gmra.mxu0 %v1797
        %v1868 = vpop.f32.mrf.mxu0
        %v1869 = vadd.f32 0.0, %v1868
        %1870 = vmatmul.f32.gmra.mxu0 %v1798
        %v1871 = vpop.f32.mrf.mxu0
        %v1872 = vadd.f32 0.0, %v1871
        %1873 = vmatmul.f32.gmra.mxu0 %v1799
        %v1874 = vpop.f32.mrf.mxu0
        %v1875 = vadd.f32 0.0, %v1874
        %1876 = vmatmul.f32.gmra.mxu0 %v1800
        %v1877 = vpop.f32.mrf.mxu0
        %v1878 = vadd.f32 0.0, %v1877
        %1879 = vmatmul.f32.gmra.mxu0 %v1801
        %v1880 = vpop.f32.mrf.mxu0
        %v1881 = vadd.f32 0.0, %v1880
        %1882 = vdwg.mxu0
        %v1883 = vadd.f32 %v1770, %v1836
        %v1884 = vadd.f32 %v1771, %v1839
        %v1885 = vadd.f32 %v1772, %v1842
        %v1886 = vadd.f32 %v1773, %v1845
        %v1887 = vadd.f32 %v1774, %v1848
        %v1888 = vadd.f32 %v1775, %v1851
        %v1889 = vadd.f32 %v1776, %v1854
        %v1890 = vadd.f32 %v1777, %v1857
        %v1891 = vadd.f32 %v1778, %v1860
        %v1892 = vadd.f32 %v1779, %v1863
        %v1893 = vadd.f32 %v1780, %v1866
        %v1894 = vadd.f32 %v1781, %v1869
        %v1895 = vadd.f32 %v1782, %v1872
        %v1896 = vadd.f32 %v1783, %v1875
        %v1897 = vadd.f32 %v1784, %v1878
        %v1898 = vadd.f32 %v1785, %v1881
        %v1899 = vld [vmem:[%s1672 + $0x2] sm:$0xff]
        %v1900 = vld [vmem:[%s1672 + $0xa] sm:$0xff]
        %v1901 = vld [vmem:[%s1672 + $0x1a] sm:$0xff]
        %v1902 = vld [vmem:[%s1672 + $0x22] sm:$0xff]
        %v1903 = vld [vmem:[%s1672 + $0x32] sm:$0xff]
        %v1904 = vld [vmem:[%s1672 + $0x3a] sm:$0xff]
        %v1905 = vld [vmem:[%s1672 + $0x4a] sm:$0xff]
        %v1906 = vld [vmem:[%s1672 + $0x52] sm:$0xff]
        %v1907 = vld [vmem:[%s1672 + $0x62] sm:$0xff]
        %v1908 = vld [vmem:[%s1672 + $0x6a] sm:$0xff]
        %v1909 = vld [vmem:[%s1672 + $0x7a] sm:$0xff]
        %v1910 = vld [vmem:[%s1672 + $0x82] sm:$0xff]
        %v1911 = vld [vmem:[%s1672 + $0x92] sm:$0xff]
        %v1912 = vld [vmem:[%s1672 + $0x9a] sm:$0xff]
        %v1913 = vld [vmem:[%s1672 + $0xaa] sm:$0xff]
        %v1914 = vld [vmem:[%s1672 + $0xb2] sm:$0xff]
        %v1915 = vld [vmem:[%s839] sm:$0xff]
        %v1916 = vld [vmem:[%s839 + $0x8] sm:$0xff]
        %v1917 = vld [vmem:[%s839 + $0x10] sm:$0xff]
        %v1918 = vld [vmem:[%s839 + $0x18] sm:$0xff]
        %v1919 = vld [vmem:[%s839 + $0x20] sm:$0xff]
        %v1920 = vld [vmem:[%s839 + $0x28] sm:$0xff]
        %v1921 = vld [vmem:[%s839 + $0x30] sm:$0xff]
        %v1922 = vld [vmem:[%s839 + $0x38] sm:$0xff]
        %v1923 = vld [vmem:[%s839 + $0x40] sm:$0xff]
        %v1924 = vld [vmem:[%s839 + $0x48] sm:$0xff]
        %v1925 = vld [vmem:[%s839 + $0x50] sm:$0xff]
        %v1926 = vld [vmem:[%s839 + $0x58] sm:$0xff]
        %v1927 = vld [vmem:[%s839 + $0x60] sm:$0xff]
        %v1928 = vld [vmem:[%s839 + $0x68] sm:$0xff]
        %v1929 = vld [vmem:[%s839 + $0x70] sm:$0xff]
        %v1930 = vld [vmem:[%s839 + $0x78] sm:$0xff]
        %1931 = vmatpush.msra.mxu0 %v1930
        %1932 = vmatpush.msra.mxu0 %v1929
        %1933 = vmatpush.msra.mxu0 %v1928
        %1934 = vmatpush.msra.mxu0 %v1927
        %1935 = vmatpush.msra.mxu0 %v1926
        %1936 = vmatpush.msra.mxu0 %v1925
        %1937 = vmatpush.msra.mxu0 %v1924
        %1938 = vmatpush.msra.mxu0 %v1923
        %1939 = vmatpush.msra.mxu0 %v1922
        %1940 = vmatpush.msra.mxu0 %v1921
        %1941 = vmatpush.msra.mxu0 %v1920
        %1942 = vmatpush.msra.mxu0 %v1919
        %1943 = vmatpush.msra.mxu0 %v1918
        %1944 = vmatpush.msra.mxu0 %v1917
        %1945 = vmatpush.msra.mxu0 %v1916
        %1946 = vmatpush.msra.mxu0 %v1915
        %1947 = vmatmul.f32.gmra.mxu0 %v1899
        %v1948 = vpop.f32.mrf.mxu0
        %v1949 = vadd.f32 0.0, %v1948
        %1950 = vmatmul.f32.gmra.mxu0 %v1900
        %v1951 = vpop.f32.mrf.mxu0
        %v1952 = vadd.f32 0.0, %v1951
        %1953 = vmatmul.f32.gmra.mxu0 %v1901
        %v1954 = vpop.f32.mrf.mxu0
        %v1955 = vadd.f32 0.0, %v1954
        %1956 = vmatmul.f32.gmra.mxu0 %v1902
        %v1957 = vpop.f32.mrf.mxu0
        %v1958 = vadd.f32 0.0, %v1957
        %1959 = vmatmul.f32.gmra.mxu0 %v1903
        %v1960 = vpop.f32.mrf.mxu0
        %v1961 = vadd.f32 0.0, %v1960
        %1962 = vmatmul.f32.gmra.mxu0 %v1904
        %v1963 = vpop.f32.mrf.mxu0
        %v1964 = vadd.f32 0.0, %v1963
        %1965 = vmatmul.f32.gmra.mxu0 %v1905
        %v1966 = vpop.f32.mrf.mxu0
        %v1967 = vadd.f32 0.0, %v1966
        %1968 = vmatmul.f32.gmra.mxu0 %v1906
        %v1969 = vpop.f32.mrf.mxu0
        %v1970 = vadd.f32 0.0, %v1969
        %1971 = vmatmul.f32.gmra.mxu0 %v1907
        %v1972 = vpop.f32.mrf.mxu0
        %v1973 = vadd.f32 0.0, %v1972
        %1974 = vmatmul.f32.gmra.mxu0 %v1908
        %v1975 = vpop.f32.mrf.mxu0
        %v1976 = vadd.f32 0.0, %v1975
        %1977 = vmatmul.f32.gmra.mxu0 %v1909
        %v1978 = vpop.f32.mrf.mxu0
        %v1979 = vadd.f32 0.0, %v1978
        %1980 = vmatmul.f32.gmra.mxu0 %v1910
        %v1981 = vpop.f32.mrf.mxu0
        %v1982 = vadd.f32 0.0, %v1981
        %1983 = vmatmul.f32.gmra.mxu0 %v1911
        %v1984 = vpop.f32.mrf.mxu0
        %v1985 = vadd.f32 0.0, %v1984
        %1986 = vmatmul.f32.gmra.mxu0 %v1912
        %v1987 = vpop.f32.mrf.mxu0
        %v1988 = vadd.f32 0.0, %v1987
        %1989 = vmatmul.f32.gmra.mxu0 %v1913
        %v1990 = vpop.f32.mrf.mxu0
        %v1991 = vadd.f32 0.0, %v1990
        %1992 = vmatmul.f32.gmra.mxu0 %v1914
        %v1993 = vpop.f32.mrf.mxu0
        %v1994 = vadd.f32 0.0, %v1993
        %1995 = vdwg.mxu0
        %v1996 = vadd.f32 %v1883, %v1949
        %v1997 = vadd.f32 %v1884, %v1952
        %v1998 = vadd.f32 %v1885, %v1955
        %v1999 = vadd.f32 %v1886, %v1958
        %v2000 = vadd.f32 %v1887, %v1961
        %v2001 = vadd.f32 %v1888, %v1964
        %v2002 = vadd.f32 %v1889, %v1967
        %v2003 = vadd.f32 %v1890, %v1970
        %v2004 = vadd.f32 %v1891, %v1973
        %v2005 = vadd.f32 %v1892, %v1976
        %v2006 = vadd.f32 %v1893, %v1979
        %v2007 = vadd.f32 %v1894, %v1982
        %v2008 = vadd.f32 %v1895, %v1985
        %v2009 = vadd.f32 %v1896, %v1988
        %v2010 = vadd.f32 %v1897, %v1991
        %v2011 = vadd.f32 %v1898, %v1994
        %s2012 = scalar_lea.vmem %s239, 240
        %v2013 = vld [vmem:[%s2012] sm:$0xff]
        %v2014 = vld [vmem:[%s2012 + $0x8] sm:$0xff]
        %v2015 = vld [vmem:[%s2012 + $0x18] sm:$0xff]
        %v2016 = vld [vmem:[%s2012 + $0x20] sm:$0xff]
        %v2017 = vld [vmem:[%s2012 + $0x30] sm:$0xff]
        %v2018 = vld [vmem:[%s2012 + $0x38] sm:$0xff]
        %v2019 = vld [vmem:[%s2012 + $0x48] sm:$0xff]
        %v2020 = vld [vmem:[%s2012 + $0x50] sm:$0xff]
        %v2021 = vld [vmem:[%s2012 + $0x60] sm:$0xff]
        %v2022 = vld [vmem:[%s2012 + $0x68] sm:$0xff]
        %v2023 = vld [vmem:[%s2012 + $0x78] sm:$0xff]
        %v2024 = vld [vmem:[%s2012 + $0x80] sm:$0xff]
        %v2025 = vld [vmem:[%s2012 + $0x90] sm:$0xff]
        %v2026 = vld [vmem:[%s2012 + $0x98] sm:$0xff]
        %v2027 = vld [vmem:[%s2012 + $0xa8] sm:$0xff]
        %v2028 = vld [vmem:[%s2012 + $0xb0] sm:$0xff]
        %v2029 = vld [vmem:[%s954] sm:$0xff]
        %v2030 = vld [vmem:[%s954 + $0x8] sm:$0xff]
        %v2031 = vld [vmem:[%s954 + $0x10] sm:$0xff]
        %v2032 = vld [vmem:[%s954 + $0x18] sm:$0xff]
        %v2033 = vld [vmem:[%s954 + $0x20] sm:$0xff]
        %v2034 = vld [vmem:[%s954 + $0x28] sm:$0xff]
        %v2035 = vld [vmem:[%s954 + $0x30] sm:$0xff]
        %v2036 = vld [vmem:[%s954 + $0x38] sm:$0xff]
        %v2037 = vld [vmem:[%s954 + $0x40] sm:$0xff]
        %v2038 = vld [vmem:[%s954 + $0x48] sm:$0xff]
        %v2039 = vld [vmem:[%s954 + $0x50] sm:$0xff]
        %v2040 = vld [vmem:[%s954 + $0x58] sm:$0xff]
        %v2041 = vld [vmem:[%s954 + $0x60] sm:$0xff]
        %v2042 = vld [vmem:[%s954 + $0x68] sm:$0xff]
        %v2043 = vld [vmem:[%s954 + $0x70] sm:$0xff]
        %v2044 = vld [vmem:[%s954 + $0x78] sm:$0xff]
        %2045 = vmatpush.msra.mxu0 %v2044
        %2046 = vmatpush.msra.mxu0 %v2043
        %2047 = vmatpush.msra.mxu0 %v2042
        %2048 = vmatpush.msra.mxu0 %v2041
        %2049 = vmatpush.msra.mxu0 %v2040
        %2050 = vmatpush.msra.mxu0 %v2039
        %2051 = vmatpush.msra.mxu0 %v2038
        %2052 = vmatpush.msra.mxu0 %v2037
        %2053 = vmatpush.msra.mxu0 %v2036
        %2054 = vmatpush.msra.mxu0 %v2035
        %2055 = vmatpush.msra.mxu0 %v2034
        %2056 = vmatpush.msra.mxu0 %v2033
        %2057 = vmatpush.msra.mxu0 %v2032
        %2058 = vmatpush.msra.mxu0 %v2031
        %2059 = vmatpush.msra.mxu0 %v2030
        %2060 = vmatpush.msra.mxu0 %v2029
        %2061 = vmatmul.f32.gmra.mxu0 %v2013
        %v2062 = vpop.f32.mrf.mxu0
        %v2063 = vadd.f32 0.0, %v2062
        %2064 = vmatmul.f32.gmra.mxu0 %v2014
        %v2065 = vpop.f32.mrf.mxu0
        %v2066 = vadd.f32 0.0, %v2065
        %2067 = vmatmul.f32.gmra.mxu0 %v2015
        %v2068 = vpop.f32.mrf.mxu0
        %v2069 = vadd.f32 0.0, %v2068
        %2070 = vmatmul.f32.gmra.mxu0 %v2016
        %v2071 = vpop.f32.mrf.mxu0
        %v2072 = vadd.f32 0.0, %v2071
        %2073 = vmatmul.f32.gmra.mxu0 %v2017
        %v2074 = vpop.f32.mrf.mxu0
        %v2075 = vadd.f32 0.0, %v2074
        %2076 = vmatmul.f32.gmra.mxu0 %v2018
        %v2077 = vpop.f32.mrf.mxu0
        %v2078 = vadd.f32 0.0, %v2077
        %2079 = vmatmul.f32.gmra.mxu0 %v2019
        %v2080 = vpop.f32.mrf.mxu0
        %v2081 = vadd.f32 0.0, %v2080
        %2082 = vmatmul.f32.gmra.mxu0 %v2020
        %v2083 = vpop.f32.mrf.mxu0
        %v2084 = vadd.f32 0.0, %v2083
        %2085 = vmatmul.f32.gmra.mxu0 %v2021
        %v2086 = vpop.f32.mrf.mxu0
        %v2087 = vadd.f32 0.0, %v2086
        %2088 = vmatmul.f32.gmra.mxu0 %v2022
        %v2089 = vpop.f32.mrf.mxu0
        %v2090 = vadd.f32 0.0, %v2089
        %2091 = vmatmul.f32.gmra.mxu0 %v2023
        %v2092 = vpop.f32.mrf.mxu0
        %v2093 = vadd.f32 0.0, %v2092
        %2094 = vmatmul.f32.gmra.mxu0 %v2024
        %v2095 = vpop.f32.mrf.mxu0
        %v2096 = vadd.f32 0.0, %v2095
        %2097 = vmatmul.f32.gmra.mxu0 %v2025
        %v2098 = vpop.f32.mrf.mxu0
        %v2099 = vadd.f32 0.0, %v2098
        %2100 = vmatmul.f32.gmra.mxu0 %v2026
        %v2101 = vpop.f32.mrf.mxu0
        %v2102 = vadd.f32 0.0, %v2101
        %2103 = vmatmul.f32.gmra.mxu0 %v2027
        %v2104 = vpop.f32.mrf.mxu0
        %v2105 = vadd.f32 0.0, %v2104
        %2106 = vmatmul.f32.gmra.mxu0 %v2028
        %v2107 = vpop.f32.mrf.mxu0
        %v2108 = vadd.f32 0.0, %v2107
        %2109 = vdwg.mxu0
        %v2110 = vadd.f32 %v1996, %v2063
        %v2111 = vadd.f32 %v1997, %v2066
        %v2112 = vadd.f32 %v1998, %v2069
        %v2113 = vadd.f32 %v1999, %v2072
        %v2114 = vadd.f32 %v2000, %v2075
        %v2115 = vadd.f32 %v2001, %v2078
        %v2116 = vadd.f32 %v2002, %v2081
        %v2117 = vadd.f32 %v2003, %v2084
        %v2118 = vadd.f32 %v2004, %v2087
        %v2119 = vadd.f32 %v2005, %v2090
        %v2120 = vadd.f32 %v2006, %v2093
        %v2121 = vadd.f32 %v2007, %v2096
        %v2122 = vadd.f32 %v2008, %v2099
        %v2123 = vadd.f32 %v2009, %v2102
        %v2124 = vadd.f32 %v2010, %v2105
        %v2125 = vadd.f32 %v2011, %v2108
        %v2126 = vld [vmem:[%s2012 + $0x1] sm:$0xff]
        %v2127 = vld [vmem:[%s2012 + $0x9] sm:$0xff]
        %v2128 = vld [vmem:[%s2012 + $0x19] sm:$0xff]
        %v2129 = vld [vmem:[%s2012 + $0x21] sm:$0xff]
        %v2130 = vld [vmem:[%s2012 + $0x31] sm:$0xff]
        %v2131 = vld [vmem:[%s2012 + $0x39] sm:$0xff]
        %v2132 = vld [vmem:[%s2012 + $0x49] sm:$0xff]
        %v2133 = vld [vmem:[%s2012 + $0x51] sm:$0xff]
        %v2134 = vld [vmem:[%s2012 + $0x61] sm:$0xff]
        %v2135 = vld [vmem:[%s2012 + $0x69] sm:$0xff]
        %v2136 = vld [vmem:[%s2012 + $0x79] sm:$0xff]
        %v2137 = vld [vmem:[%s2012 + $0x81] sm:$0xff]
        %v2138 = vld [vmem:[%s2012 + $0x91] sm:$0xff]
        %v2139 = vld [vmem:[%s2012 + $0x99] sm:$0xff]
        %v2140 = vld [vmem:[%s2012 + $0xa9] sm:$0xff]
        %v2141 = vld [vmem:[%s2012 + $0xb1] sm:$0xff]
        %v2142 = vld [vmem:[%s1068] sm:$0xff]
        %v2143 = vld [vmem:[%s1068 + $0x8] sm:$0xff]
        %v2144 = vld [vmem:[%s1068 + $0x10] sm:$0xff]
        %v2145 = vld [vmem:[%s1068 + $0x18] sm:$0xff]
        %v2146 = vld [vmem:[%s1068 + $0x20] sm:$0xff]
        %v2147 = vld [vmem:[%s1068 + $0x28] sm:$0xff]
        %v2148 = vld [vmem:[%s1068 + $0x30] sm:$0xff]
        %v2149 = vld [vmem:[%s1068 + $0x38] sm:$0xff]
        %v2150 = vld [vmem:[%s1068 + $0x40] sm:$0xff]
        %v2151 = vld [vmem:[%s1068 + $0x48] sm:$0xff]
        %v2152 = vld [vmem:[%s1068 + $0x50] sm:$0xff]
        %v2153 = vld [vmem:[%s1068 + $0x58] sm:$0xff]
        %v2154 = vld [vmem:[%s1068 + $0x60] sm:$0xff]
        %v2155 = vld [vmem:[%s1068 + $0x68] sm:$0xff]
        %v2156 = vld [vmem:[%s1068 + $0x70] sm:$0xff]
        %v2157 = vld [vmem:[%s1068 + $0x78] sm:$0xff]
        %2158 = vmatpush.msra.mxu0 %v2157
        %2159 = vmatpush.msra.mxu0 %v2156
        %2160 = vmatpush.msra.mxu0 %v2155
        %2161 = vmatpush.msra.mxu0 %v2154
        %2162 = vmatpush.msra.mxu0 %v2153
        %2163 = vmatpush.msra.mxu0 %v2152
        %2164 = vmatpush.msra.mxu0 %v2151
        %2165 = vmatpush.msra.mxu0 %v2150
        %2166 = vmatpush.msra.mxu0 %v2149
        %2167 = vmatpush.msra.mxu0 %v2148
        %2168 = vmatpush.msra.mxu0 %v2147
        %2169 = vmatpush.msra.mxu0 %v2146
        %2170 = vmatpush.msra.mxu0 %v2145
        %2171 = vmatpush.msra.mxu0 %v2144
        %2172 = vmatpush.msra.mxu0 %v2143
        %2173 = vmatpush.msra.mxu0 %v2142
        %2174 = vmatmul.f32.gmra.mxu0 %v2126
        %v2175 = vpop.f32.mrf.mxu0
        %v2176 = vadd.f32 0.0, %v2175
        %2177 = vmatmul.f32.gmra.mxu0 %v2127
        %v2178 = vpop.f32.mrf.mxu0
        %v2179 = vadd.f32 0.0, %v2178
        %2180 = vmatmul.f32.gmra.mxu0 %v2128
        %v2181 = vpop.f32.mrf.mxu0
        %v2182 = vadd.f32 0.0, %v2181
        %2183 = vmatmul.f32.gmra.mxu0 %v2129
        %v2184 = vpop.f32.mrf.mxu0
        %v2185 = vadd.f32 0.0, %v2184
        %2186 = vmatmul.f32.gmra.mxu0 %v2130
        %v2187 = vpop.f32.mrf.mxu0
        %v2188 = vadd.f32 0.0, %v2187
        %2189 = vmatmul.f32.gmra.mxu0 %v2131
        %v2190 = vpop.f32.mrf.mxu0
        %v2191 = vadd.f32 0.0, %v2190
        %2192 = vmatmul.f32.gmra.mxu0 %v2132
        %v2193 = vpop.f32.mrf.mxu0
        %v2194 = vadd.f32 0.0, %v2193
        %2195 = vmatmul.f32.gmra.mxu0 %v2133
        %v2196 = vpop.f32.mrf.mxu0
        %v2197 = vadd.f32 0.0, %v2196
        %2198 = vmatmul.f32.gmra.mxu0 %v2134
        %v2199 = vpop.f32.mrf.mxu0
        %v2200 = vadd.f32 0.0, %v2199
        %2201 = vmatmul.f32.gmra.mxu0 %v2135
        %v2202 = vpop.f32.mrf.mxu0
        %v2203 = vadd.f32 0.0, %v2202
        %2204 = vmatmul.f32.gmra.mxu0 %v2136
        %v2205 = vpop.f32.mrf.mxu0
        %v2206 = vadd.f32 0.0, %v2205
        %2207 = vmatmul.f32.gmra.mxu0 %v2137
        %v2208 = vpop.f32.mrf.mxu0
        %v2209 = vadd.f32 0.0, %v2208
        %2210 = vmatmul.f32.gmra.mxu0 %v2138
        %v2211 = vpop.f32.mrf.mxu0
        %v2212 = vadd.f32 0.0, %v2211
        %2213 = vmatmul.f32.gmra.mxu0 %v2139
        %v2214 = vpop.f32.mrf.mxu0
        %v2215 = vadd.f32 0.0, %v2214
        %2216 = vmatmul.f32.gmra.mxu0 %v2140
        %v2217 = vpop.f32.mrf.mxu0
        %v2218 = vadd.f32 0.0, %v2217
        %2219 = vmatmul.f32.gmra.mxu0 %v2141
        %v2220 = vpop.f32.mrf.mxu0
        %v2221 = vadd.f32 0.0, %v2220
        %2222 = vdwg.mxu0
        %v2223 = vadd.f32 %v2110, %v2176
        %v2224 = vadd.f32 %v2111, %v2179
        %v2225 = vadd.f32 %v2112, %v2182
        %v2226 = vadd.f32 %v2113, %v2185
        %v2227 = vadd.f32 %v2114, %v2188
        %v2228 = vadd.f32 %v2115, %v2191
        %v2229 = vadd.f32 %v2116, %v2194
        %v2230 = vadd.f32 %v2117, %v2197
        %v2231 = vadd.f32 %v2118, %v2200
        %v2232 = vadd.f32 %v2119, %v2203
        %v2233 = vadd.f32 %v2120, %v2206
        %v2234 = vadd.f32 %v2121, %v2209
        %v2235 = vadd.f32 %v2122, %v2212
        %v2236 = vadd.f32 %v2123, %v2215
        %v2237 = vadd.f32 %v2124, %v2218
        %v2238 = vadd.f32 %v2125, %v2221
        %v2239 = vld [vmem:[%s2012 + $0x2] sm:$0xff]
        %v2240 = vld [vmem:[%s2012 + $0xa] sm:$0xff]
        %v2241 = vld [vmem:[%s2012 + $0x1a] sm:$0xff]
        %v2242 = vld [vmem:[%s2012 + $0x22] sm:$0xff]
        %v2243 = vld [vmem:[%s2012 + $0x32] sm:$0xff]
        %v2244 = vld [vmem:[%s2012 + $0x3a] sm:$0xff]
        %v2245 = vld [vmem:[%s2012 + $0x4a] sm:$0xff]
        %v2246 = vld [vmem:[%s2012 + $0x52] sm:$0xff]
        %v2247 = vld [vmem:[%s2012 + $0x62] sm:$0xff]
        %v2248 = vld [vmem:[%s2012 + $0x6a] sm:$0xff]
        %v2249 = vld [vmem:[%s2012 + $0x7a] sm:$0xff]
        %v2250 = vld [vmem:[%s2012 + $0x82] sm:$0xff]
        %v2251 = vld [vmem:[%s2012 + $0x92] sm:$0xff]
        %v2252 = vld [vmem:[%s2012 + $0x9a] sm:$0xff]
        %v2253 = vld [vmem:[%s2012 + $0xaa] sm:$0xff]
        %v2254 = vld [vmem:[%s2012 + $0xb2] sm:$0xff]
        %v2255 = vld [vmem:[%s1182] sm:$0xff]
        %v2256 = vld [vmem:[%s1182 + $0x8] sm:$0xff]
        %v2257 = vld [vmem:[%s1182 + $0x10] sm:$0xff]
        %v2258 = vld [vmem:[%s1182 + $0x18] sm:$0xff]
        %v2259 = vld [vmem:[%s1182 + $0x20] sm:$0xff]
        %v2260 = vld [vmem:[%s1182 + $0x28] sm:$0xff]
        %v2261 = vld [vmem:[%s1182 + $0x30] sm:$0xff]
        %v2262 = vld [vmem:[%s1182 + $0x38] sm:$0xff]
        %v2263 = vld [vmem:[%s1182 + $0x40] sm:$0xff]
        %v2264 = vld [vmem:[%s1182 + $0x48] sm:$0xff]
        %v2265 = vld [vmem:[%s1182 + $0x50] sm:$0xff]
        %v2266 = vld [vmem:[%s1182 + $0x58] sm:$0xff]
        %v2267 = vld [vmem:[%s1182 + $0x60] sm:$0xff]
        %v2268 = vld [vmem:[%s1182 + $0x68] sm:$0xff]
        %v2269 = vld [vmem:[%s1182 + $0x70] sm:$0xff]
        %v2270 = vld [vmem:[%s1182 + $0x78] sm:$0xff]
        %2271 = vmatpush.msra.mxu0 %v2270
        %2272 = vmatpush.msra.mxu0 %v2269
        %2273 = vmatpush.msra.mxu0 %v2268
        %2274 = vmatpush.msra.mxu0 %v2267
        %2275 = vmatpush.msra.mxu0 %v2266
        %2276 = vmatpush.msra.mxu0 %v2265
        %2277 = vmatpush.msra.mxu0 %v2264
        %2278 = vmatpush.msra.mxu0 %v2263
        %2279 = vmatpush.msra.mxu0 %v2262
        %2280 = vmatpush.msra.mxu0 %v2261
        %2281 = vmatpush.msra.mxu0 %v2260
        %2282 = vmatpush.msra.mxu0 %v2259
        %2283 = vmatpush.msra.mxu0 %v2258
        %2284 = vmatpush.msra.mxu0 %v2257
        %2285 = vmatpush.msra.mxu0 %v2256
        %2286 = vmatpush.msra.mxu0 %v2255
        %2287 = vmatmul.f32.gmra.mxu0 %v2239
        %v2288 = vpop.f32.mrf.mxu0
        %v2289 = vadd.f32 0.0, %v2288
        %2290 = vmatmul.f32.gmra.mxu0 %v2240
        %v2291 = vpop.f32.mrf.mxu0
        %v2292 = vadd.f32 0.0, %v2291
        %2293 = vmatmul.f32.gmra.mxu0 %v2241
        %v2294 = vpop.f32.mrf.mxu0
        %v2295 = vadd.f32 0.0, %v2294
        %2296 = vmatmul.f32.gmra.mxu0 %v2242
        %v2297 = vpop.f32.mrf.mxu0
        %v2298 = vadd.f32 0.0, %v2297
        %2299 = vmatmul.f32.gmra.mxu0 %v2243
        %v2300 = vpop.f32.mrf.mxu0
        %v2301 = vadd.f32 0.0, %v2300
        %2302 = vmatmul.f32.gmra.mxu0 %v2244
        %v2303 = vpop.f32.mrf.mxu0
        %v2304 = vadd.f32 0.0, %v2303
        %2305 = vmatmul.f32.gmra.mxu0 %v2245
        %v2306 = vpop.f32.mrf.mxu0
        %v2307 = vadd.f32 0.0, %v2306
        %2308 = vmatmul.f32.gmra.mxu0 %v2246
        %v2309 = vpop.f32.mrf.mxu0
        %v2310 = vadd.f32 0.0, %v2309
        %2311 = vmatmul.f32.gmra.mxu0 %v2247
        %v2312 = vpop.f32.mrf.mxu0
        %v2313 = vadd.f32 0.0, %v2312
        %2314 = vmatmul.f32.gmra.mxu0 %v2248
        %v2315 = vpop.f32.mrf.mxu0
        %v2316 = vadd.f32 0.0, %v2315
        %2317 = vmatmul.f32.gmra.mxu0 %v2249
        %v2318 = vpop.f32.mrf.mxu0
        %v2319 = vadd.f32 0.0, %v2318
        %2320 = vmatmul.f32.gmra.mxu0 %v2250
        %v2321 = vpop.f32.mrf.mxu0
        %v2322 = vadd.f32 0.0, %v2321
        %2323 = vmatmul.f32.gmra.mxu0 %v2251
        %v2324 = vpop.f32.mrf.mxu0
        %v2325 = vadd.f32 0.0, %v2324
        %2326 = vmatmul.f32.gmra.mxu0 %v2252
        %v2327 = vpop.f32.mrf.mxu0
        %v2328 = vadd.f32 0.0, %v2327
        %2329 = vmatmul.f32.gmra.mxu0 %v2253
        %v2330 = vpop.f32.mrf.mxu0
        %v2331 = vadd.f32 0.0, %v2330
        %2332 = vmatmul.f32.gmra.mxu0 %v2254
        %v2333 = vpop.f32.mrf.mxu0
        %v2334 = vadd.f32 0.0, %v2333
        %2335 = vdwg.mxu0
        %v2336 = vadd.f32 %v2223, %v2289
        %v2337 = vadd.f32 %v2224, %v2292
        %v2338 = vadd.f32 %v2225, %v2295
        %v2339 = vadd.f32 %v2226, %v2298
        %v2340 = vadd.f32 %v2227, %v2301
        %v2341 = vadd.f32 %v2228, %v2304
        %v2342 = vadd.f32 %v2229, %v2307
        %v2343 = vadd.f32 %v2230, %v2310
        %v2344 = vadd.f32 %v2231, %v2313
        %v2345 = vadd.f32 %v2232, %v2316
        %v2346 = vadd.f32 %v2233, %v2319
        %v2347 = vadd.f32 %v2234, %v2322
        %v2348 = vadd.f32 %v2235, %v2325
        %v2349 = vadd.f32 %v2236, %v2328
        %v2350 = vadd.f32 %v2237, %v2331
        %v2351 = vadd.f32 %v2238, %v2334
        %v2352 = vadd.f32 %v2336, %v1281
        %v2353 = vadd.f32 %v2337, %v1281
        %v2354 = vadd.f32 %v2338, %v1281
        %v2355 = vadd.f32 %v2339, %v1281
        %v2356 = vadd.f32 %v2340, %v1281
        %v2357 = vadd.f32 %v2341, %v1281
        %v2358 = vadd.f32 %v2342, %v1281
        %v2359 = vadd.f32 %v2343, %v1281
        %v2360 = vadd.f32 %v2344, %v1281
        %v2361 = vadd.f32 %v2345, %v1281
        %v2362 = vadd.f32 %v2346, %v1281
        %v2363 = vadd.f32 %v2347, %v1281
        %v2364 = vadd.f32 %v2348, %v1281
        %v2365 = vadd.f32 %v2349, %v1281
        %v2366 = vadd.f32 %v2350, %v1281
        %v2367 = vadd.f32 %v2351, %v1281
        %vm2368 = vcmp.gt.f32.partialorder %v2352, 0.0
        %vm2369 = vcmp.gt.f32.partialorder %v2353, 0.0
        %vm2370 = vcmp.gt.f32.partialorder %v2354, 0.0
        %vm2371 = vcmp.gt.f32.partialorder %v2355, 0.0
        %vm2372 = vcmp.gt.f32.partialorder %v2356, 0.0
        %vm2373 = vcmp.gt.f32.partialorder %v2357, 0.0
        %vm2374 = vcmp.gt.f32.partialorder %v2358, 0.0
        %vm2375 = vcmp.gt.f32.partialorder %v2359, 0.0
        %vm2376 = vcmp.gt.f32.partialorder %v2360, 0.0
        %vm2377 = vcmp.gt.f32.partialorder %v2361, 0.0
        %vm2378 = vcmp.gt.f32.partialorder %v2362, 0.0
        %vm2379 = vcmp.gt.f32.partialorder %v2363, 0.0
        %vm2380 = vcmp.gt.f32.partialorder %v2364, 0.0
        %vm2381 = vcmp.gt.f32.partialorder %v2365, 0.0
        %vm2382 = vcmp.gt.f32.partialorder %v2366, 0.0
        %vm2383 = vcmp.gt.f32.partialorder %v2367, 0.0
        %v2384 = vmul.f32 %v2352, 0.01
        %v2385 = vmul.f32 %v2353, 0.01
        %v2386 = vmul.f32 %v2354, 0.01
        %v2387 = vmul.f32 %v2355, 0.01
        %v2388 = vmul.f32 %v2356, 0.01
        %v2389 = vmul.f32 %v2357, 0.01
        %v2390 = vmul.f32 %v2358, 0.01
        %v2391 = vmul.f32 %v2359, 0.01
        %v2392 = vmul.f32 %v2360, 0.01
        %v2393 = vmul.f32 %v2361, 0.01
        %v2394 = vmul.f32 %v2362, 0.01
        %v2395 = vmul.f32 %v2363, 0.01
        %v2396 = vmul.f32 %v2364, 0.01
        %v2397 = vmul.f32 %v2365, 0.01
        %v2398 = vmul.f32 %v2366, 0.01
        %v2399 = vmul.f32 %v2367, 0.01
        %v2400 = vsel %vm2368, %v2352, %v2384
        %v2401 = vsel %vm2369, %v2353, %v2385
        %v2402 = vsel %vm2370, %v2354, %v2386
        %v2403 = vsel %vm2371, %v2355, %v2387
        %v2404 = vsel %vm2372, %v2356, %v2388
        %v2405 = vsel %vm2373, %v2357, %v2389
        %v2406 = vsel %vm2374, %v2358, %v2390
        %v2407 = vsel %vm2375, %v2359, %v2391
        %v2408 = vsel %vm2376, %v2360, %v2392
        %v2409 = vsel %vm2377, %v2361, %v2393
        %v2410 = vsel %vm2378, %v2362, %v2394
        %v2411 = vsel %vm2379, %v2363, %v2395
        %v2412 = vsel %vm2380, %v2364, %v2396
        %v2413 = vsel %vm2381, %v2365, %v2397
        %v2414 = vsel %vm2382, %v2366, %v2398
        %v2415 = vsel %vm2383, %v2367, %v2399
        %s2416 = scalar_lea.vmem [#allocation2], 216
        %2417 = vst [vmem:[%s2416 + $0x1] sm:$0xff] %v2400
        %2418 = vst [vmem:[%s2416 + $0x9] sm:$0xff] %v2401
        %2419 = vst [vmem:[%s2416 + $0x19] sm:$0xff] %v2402
        %2420 = vst [vmem:[%s2416 + $0x21] sm:$0xff] %v2403
        %2421 = vst [vmem:[%s2416 + $0x31] sm:$0xff] %v2404
        %2422 = vst [vmem:[%s2416 + $0x39] sm:$0xff] %v2405
        %2423 = vst [vmem:[%s2416 + $0x49] sm:$0xff] %v2406
        %2424 = vst [vmem:[%s2416 + $0x51] sm:$0xff] %v2407
        %2425 = vst [vmem:[%s2416 + $0x61] sm:$0xff] %v2408
        %2426 = vst [vmem:[%s2416 + $0x69] sm:$0xff] %v2409
        %2427 = vst [vmem:[%s2416 + $0x79] sm:$0xff] %v2410
        %2428 = vst [vmem:[%s2416 + $0x81] sm:$0xff] %v2411
        %2429 = vst [vmem:[%s2416 + $0x91] sm:$0xff] %v2412
        %2430 = vst [vmem:[%s2416 + $0x99] sm:$0xff] %v2413
        %2431 = vst [vmem:[%s2416 + $0xa9] sm:$0xff] %v2414
        %2432 = vst [vmem:[%s2416 + $0xb1] sm:$0xff] %v2415
        %v2433 = vld [vmem:[#allocation2] sm:$0xff]
        %v2434 = vld [vmem:[#allocation2 + $0x8] sm:$0xff]
        %v2435 = vld [vmem:[#allocation2 + $0x18] sm:$0xff]
        %v2436 = vld [vmem:[#allocation2 + $0x20] sm:$0xff]
        %v2437 = vld [vmem:[#allocation2 + $0x30] sm:$0xff]
        %v2438 = vld [vmem:[#allocation2 + $0x38] sm:$0xff]
        %v2439 = vld [vmem:[#allocation2 + $0x48] sm:$0xff]
        %v2440 = vld [vmem:[#allocation2 + $0x50] sm:$0xff]
        %v2441 = vld [vmem:[#allocation2 + $0x60] sm:$0xff]
        %v2442 = vld [vmem:[#allocation2 + $0x68] sm:$0xff]
        %v2443 = vld [vmem:[#allocation2 + $0x78] sm:$0xff]
        %v2444 = vld [vmem:[#allocation2 + $0x80] sm:$0xff]
        %v2445 = vld [vmem:[#allocation2 + $0x90] sm:$0xff]
        %v2446 = vld [vmem:[#allocation2 + $0x98] sm:$0xff]
        %v2447 = vld [vmem:[#allocation2 + $0xa8] sm:$0xff]
        %v2448 = vld [vmem:[#allocation2 + $0xb0] sm:$0xff]
        %v2449 = vld [vmem:[#allocation3] sm:$0xff]
        %v2450 = vld [vmem:[#allocation3 + $0x8] sm:$0xff]
        %v2451 = vld [vmem:[#allocation3 + $0x10] sm:$0xff]
        %v2452 = vld [vmem:[#allocation3 + $0x18] sm:$0xff]
        %v2453 = vld [vmem:[#allocation3 + $0x20] sm:$0xff]
        %v2454 = vld [vmem:[#allocation3 + $0x28] sm:$0xff]
        %v2455 = vld [vmem:[#allocation3 + $0x30] sm:$0xff]
        %v2456 = vld [vmem:[#allocation3 + $0x38] sm:$0xff]
        %v2457 = vld [vmem:[#allocation3 + $0x40] sm:$0xff]
        %v2458 = vld [vmem:[#allocation3 + $0x48] sm:$0xff]
        %v2459 = vld [vmem:[#allocation3 + $0x50] sm:$0xff]
        %v2460 = vld [vmem:[#allocation3 + $0x58] sm:$0xff]
        %v2461 = vld [vmem:[#allocation3 + $0x60] sm:$0xff]
        %v2462 = vld [vmem:[#allocation3 + $0x68] sm:$0xff]
        %v2463 = vld [vmem:[#allocation3 + $0x70] sm:$0xff]
        %v2464 = vld [vmem:[#allocation3 + $0x78] sm:$0xff]
        %v2465 = vld [vmem:[#allocation2 + $0x1] sm:$0xff]
        %v2466 = vld [vmem:[#allocation2 + $0x9] sm:$0xff]
        %v2467 = vld [vmem:[#allocation2 + $0x19] sm:$0xff]
        %v2468 = vld [vmem:[#allocation2 + $0x21] sm:$0xff]
        %v2469 = vld [vmem:[#allocation2 + $0x31] sm:$0xff]
        %v2470 = vld [vmem:[#allocation2 + $0x39] sm:$0xff]
        %v2471 = vld [vmem:[#allocation2 + $0x49] sm:$0xff]
        %v2472 = vld [vmem:[#allocation2 + $0x51] sm:$0xff]
        %v2473 = vld [vmem:[#allocation2 + $0x61] sm:$0xff]
        %v2474 = vld [vmem:[#allocation2 + $0x69] sm:$0xff]
        %v2475 = vld [vmem:[#allocation2 + $0x79] sm:$0xff]
        %v2476 = vld [vmem:[#allocation2 + $0x81] sm:$0xff]
        %v2477 = vld [vmem:[#allocation2 + $0x91] sm:$0xff]
        %v2478 = vld [vmem:[#allocation2 + $0x99] sm:$0xff]
        %v2479 = vld [vmem:[#allocation2 + $0xa9] sm:$0xff]
        %v2480 = vld [vmem:[#allocation2 + $0xb1] sm:$0xff]
        %s2481 = scalar_lea.vmem [#allocation3], 128
        %v2482 = vld [vmem:[%s2481] sm:$0xff]
        %v2483 = vld [vmem:[%s2481 + $0x8] sm:$0xff]
        %v2484 = vld [vmem:[%s2481 + $0x10] sm:$0xff]
        %v2485 = vld [vmem:[%s2481 + $0x18] sm:$0xff]
        %v2486 = vld [vmem:[%s2481 + $0x20] sm:$0xff]
        %v2487 = vld [vmem:[%s2481 + $0x28] sm:$0xff]
        %v2488 = vld [vmem:[%s2481 + $0x30] sm:$0xff]
        %v2489 = vld [vmem:[%s2481 + $0x38] sm:$0xff]
        %v2490 = vld [vmem:[%s2481 + $0x40] sm:$0xff]
        %v2491 = vld [vmem:[%s2481 + $0x48] sm:$0xff]
        %v2492 = vld [vmem:[%s2481 + $0x50] sm:$0xff]
        %v2493 = vld [vmem:[%s2481 + $0x58] sm:$0xff]
        %v2494 = vld [vmem:[%s2481 + $0x60] sm:$0xff]
        %v2495 = vld [vmem:[%s2481 + $0x68] sm:$0xff]
        %v2496 = vld [vmem:[%s2481 + $0x70] sm:$0xff]
        %v2497 = vld [vmem:[%s2481 + $0x78] sm:$0xff]
        %2498 = vmatpush.msra.mxu0 %v2497
        %2499 = vmatpush.msra.mxu0 %v2496
        %2500 = vmatpush.msra.mxu0 %v2495
        %2501 = vmatpush.msra.mxu0 %v2494
        %2502 = vmatpush.msra.mxu0 %v2493
        %2503 = vmatpush.msra.mxu0 %v2492
        %2504 = vmatpush.msra.mxu0 %v2491
        %2505 = vmatpush.msra.mxu0 %v2490
        %2506 = vmatpush.msra.mxu0 %v2489
        %2507 = vmatpush.msra.mxu0 %v2488
        %2508 = vmatpush.msra.mxu0 %v2487
        %2509 = vmatpush.msra.mxu0 %v2486
        %2510 = vmatpush.msra.mxu0 %v2485
        %2511 = vmatpush.msra.mxu0 %v2484
        %2512 = vmatpush.msra.mxu0 %v2483
        %2513 = vmatpush.msra.mxu0 %v2482
        %2514 = vmatmul.f32.gmra.mxu0 %v2465
        %v2515 = vpop.f32.mrf.mxu0
        %v2516 = vadd.f32 0.0, %v2515
        %2517 = vmatmul.f32.gmra.mxu0 %v2466
        %v2518 = vpop.f32.mrf.mxu0
        %v2519 = vadd.f32 0.0, %v2518
        %2520 = vmatmul.f32.gmra.mxu0 %v2467
        %v2521 = vpop.f32.mrf.mxu0
        %v2522 = vadd.f32 0.0, %v2521
        %2523 = vmatmul.f32.gmra.mxu0 %v2468
        %v2524 = vpop.f32.mrf.mxu0
        %v2525 = vadd.f32 0.0, %v2524
        %2526 = vmatmul.f32.gmra.mxu0 %v2469
        %v2527 = vpop.f32.mrf.mxu0
        %v2528 = vadd.f32 0.0, %v2527
        %2529 = vmatmul.f32.gmra.mxu0 %v2470
        %v2530 = vpop.f32.mrf.mxu0
        %v2531 = vadd.f32 0.0, %v2530
        %2532 = vmatmul.f32.gmra.mxu0 %v2471
        %v2533 = vpop.f32.mrf.mxu0
        %v2534 = vadd.f32 0.0, %v2533
        %2535 = vmatmul.f32.gmra.mxu0 %v2472
        %v2536 = vpop.f32.mrf.mxu0
        %v2537 = vadd.f32 0.0, %v2536
        %2538 = vmatmul.f32.gmra.mxu0 %v2473
        %v2539 = vpop.f32.mrf.mxu0
        %v2540 = vadd.f32 0.0, %v2539
        %2541 = vmatmul.f32.gmra.mxu0 %v2474
        %v2542 = vpop.f32.mrf.mxu0
        %v2543 = vadd.f32 0.0, %v2542
        %2544 = vmatmul.f32.gmra.mxu0 %v2475
        %v2545 = vpop.f32.mrf.mxu0
        %v2546 = vadd.f32 0.0, %v2545
        %2547 = vmatmul.f32.gmra.mxu0 %v2476
        %v2548 = vpop.f32.mrf.mxu0
        %v2549 = vadd.f32 0.0, %v2548
        %2550 = vmatmul.f32.gmra.mxu0 %v2477
        %v2551 = vpop.f32.mrf.mxu0
        %v2552 = vadd.f32 0.0, %v2551
        %2553 = vmatmul.f32.gmra.mxu0 %v2478
        %v2554 = vpop.f32.mrf.mxu0
        %v2555 = vadd.f32 0.0, %v2554
        %2556 = vmatmul.f32.gmra.mxu0 %v2479
        %v2557 = vpop.f32.mrf.mxu0
        %v2558 = vadd.f32 0.0, %v2557
        %2559 = vmatmul.f32.gmra.mxu0 %v2480
        %v2560 = vpop.f32.mrf.mxu0
        %v2561 = vadd.f32 0.0, %v2560
        %2562 = vdwg.mxu0
        %2563 = vmatpush.msra.mxu0 %v2464
        %2564 = vmatpush.msra.mxu0 %v2463
        %2565 = vmatpush.msra.mxu0 %v2462
        %2566 = vmatpush.msra.mxu0 %v2461
        %2567 = vmatpush.msra.mxu0 %v2460
        %2568 = vmatpush.msra.mxu0 %v2459
        %2569 = vmatpush.msra.mxu0 %v2458
        %2570 = vmatpush.msra.mxu0 %v2457
        %2571 = vmatpush.msra.mxu0 %v2456
        %2572 = vmatpush.msra.mxu0 %v2455
        %2573 = vmatpush.msra.mxu0 %v2454
        %2574 = vmatpush.msra.mxu0 %v2453
        %2575 = vmatpush.msra.mxu0 %v2452
        %2576 = vmatpush.msra.mxu0 %v2451
        %2577 = vmatpush.msra.mxu0 %v2450
        %2578 = vmatpush.msra.mxu0 %v2449
        %2579 = vmatmul.f32.gmra.mxu0 %v2433
        %v2580 = vpop.f32.mrf.mxu0
        %v2581 = vadd.f32 %v2516, %v2580
        %2582 = vmatmul.f32.gmra.mxu0 %v2434
        %v2583 = vpop.f32.mrf.mxu0
        %v2584 = vadd.f32 %v2519, %v2583
        %2585 = vmatmul.f32.gmra.mxu0 %v2435
        %v2586 = vpop.f32.mrf.mxu0
        %v2587 = vadd.f32 %v2522, %v2586
        %2588 = vmatmul.f32.gmra.mxu0 %v2436
        %v2589 = vpop.f32.mrf.mxu0
        %v2590 = vadd.f32 %v2525, %v2589
        %2591 = vmatmul.f32.gmra.mxu0 %v2437
        %v2592 = vpop.f32.mrf.mxu0
        %v2593 = vadd.f32 %v2528, %v2592
        %2594 = vmatmul.f32.gmra.mxu0 %v2438
        %v2595 = vpop.f32.mrf.mxu0
        %v2596 = vadd.f32 %v2531, %v2595
        %2597 = vmatmul.f32.gmra.mxu0 %v2439
        %v2598 = vpop.f32.mrf.mxu0
        %v2599 = vadd.f32 %v2534, %v2598
        %2600 = vmatmul.f32.gmra.mxu0 %v2440
        %v2601 = vpop.f32.mrf.mxu0
        %v2602 = vadd.f32 %v2537, %v2601
        %2603 = vmatmul.f32.gmra.mxu0 %v2441
        %v2604 = vpop.f32.mrf.mxu0
        %v2605 = vadd.f32 %v2540, %v2604
        %2606 = vmatmul.f32.gmra.mxu0 %v2442
        %v2607 = vpop.f32.mrf.mxu0
        %v2608 = vadd.f32 %v2543, %v2607
        %2609 = vmatmul.f32.gmra.mxu0 %v2443
        %v2610 = vpop.f32.mrf.mxu0
        %v2611 = vadd.f32 %v2546, %v2610
        %2612 = vmatmul.f32.gmra.mxu0 %v2444
        %v2613 = vpop.f32.mrf.mxu0
        %v2614 = vadd.f32 %v2549, %v2613
        %2615 = vmatmul.f32.gmra.mxu0 %v2445
        %v2616 = vpop.f32.mrf.mxu0
        %v2617 = vadd.f32 %v2552, %v2616
        %2618 = vmatmul.f32.gmra.mxu0 %v2446
        %v2619 = vpop.f32.mrf.mxu0
        %v2620 = vadd.f32 %v2555, %v2619
        %2621 = vmatmul.f32.gmra.mxu0 %v2447
        %v2622 = vpop.f32.mrf.mxu0
        %v2623 = vadd.f32 %v2558, %v2622
        %2624 = vmatmul.f32.gmra.mxu0 %v2448
        %v2625 = vpop.f32.mrf.mxu0
        %v2626 = vadd.f32 %v2561, %v2625
        %2627 = vdwg.mxu0
        %v2628 = vld [vmem:[#allocation2 + $0x2] sm:$0xff]
        %v2629 = vld [vmem:[#allocation2 + $0xa] sm:$0xff]
        %v2630 = vld [vmem:[#allocation2 + $0x1a] sm:$0xff]
        %v2631 = vld [vmem:[#allocation2 + $0x22] sm:$0xff]
        %v2632 = vld [vmem:[#allocation2 + $0x32] sm:$0xff]
        %v2633 = vld [vmem:[#allocation2 + $0x3a] sm:$0xff]
        %v2634 = vld [vmem:[#allocation2 + $0x4a] sm:$0xff]
        %v2635 = vld [vmem:[#allocation2 + $0x52] sm:$0xff]
        %v2636 = vld [vmem:[#allocation2 + $0x62] sm:$0xff]
        %v2637 = vld [vmem:[#allocation2 + $0x6a] sm:$0xff]
        %v2638 = vld [vmem:[#allocation2 + $0x7a] sm:$0xff]
        %v2639 = vld [vmem:[#allocation2 + $0x82] sm:$0xff]
        %v2640 = vld [vmem:[#allocation2 + $0x92] sm:$0xff]
        %v2641 = vld [vmem:[#allocation2 + $0x9a] sm:$0xff]
        %v2642 = vld [vmem:[#allocation2 + $0xaa] sm:$0xff]
        %v2643 = vld [vmem:[#allocation2 + $0xb2] sm:$0xff]
        %s2644 = scalar_lea.vmem [#allocation3], 256
        %v2645 = vld [vmem:[%s2644] sm:$0xff]
        %v2646 = vld [vmem:[%s2644 + $0x8] sm:$0xff]
        %v2647 = vld [vmem:[%s2644 + $0x10] sm:$0xff]
        %v2648 = vld [vmem:[%s2644 + $0x18] sm:$0xff]
        %v2649 = vld [vmem:[%s2644 + $0x20] sm:$0xff]
        %v2650 = vld [vmem:[%s2644 + $0x28] sm:$0xff]
        %v2651 = vld [vmem:[%s2644 + $0x30] sm:$0xff]
        %v2652 = vld [vmem:[%s2644 + $0x38] sm:$0xff]
        %v2653 = vld [vmem:[%s2644 + $0x40] sm:$0xff]
        %v2654 = vld [vmem:[%s2644 + $0x48] sm:$0xff]
        %v2655 = vld [vmem:[%s2644 + $0x50] sm:$0xff]
        %v2656 = vld [vmem:[%s2644 + $0x58] sm:$0xff]
        %v2657 = vld [vmem:[%s2644 + $0x60] sm:$0xff]
        %v2658 = vld [vmem:[%s2644 + $0x68] sm:$0xff]
        %v2659 = vld [vmem:[%s2644 + $0x70] sm:$0xff]
        %v2660 = vld [vmem:[%s2644 + $0x78] sm:$0xff]
        %2661 = vmatpush.msra.mxu0 %v2660
        %2662 = vmatpush.msra.mxu0 %v2659
        %2663 = vmatpush.msra.mxu0 %v2658
        %2664 = vmatpush.msra.mxu0 %v2657
        %2665 = vmatpush.msra.mxu0 %v2656
        %2666 = vmatpush.msra.mxu0 %v2655
        %2667 = vmatpush.msra.mxu0 %v2654
        %2668 = vmatpush.msra.mxu0 %v2653
        %2669 = vmatpush.msra.mxu0 %v2652
        %2670 = vmatpush.msra.mxu0 %v2651
        %2671 = vmatpush.msra.mxu0 %v2650
        %2672 = vmatpush.msra.mxu0 %v2649
        %2673 = vmatpush.msra.mxu0 %v2648
        %2674 = vmatpush.msra.mxu0 %v2647
        %2675 = vmatpush.msra.mxu0 %v2646
        %2676 = vmatpush.msra.mxu0 %v2645
        %2677 = vmatmul.f32.gmra.mxu0 %v2628
        %v2678 = vpop.f32.mrf.mxu0
        %v2679 = vadd.f32 0.0, %v2678
        %2680 = vmatmul.f32.gmra.mxu0 %v2629
        %v2681 = vpop.f32.mrf.mxu0
        %v2682 = vadd.f32 0.0, %v2681
        %2683 = vmatmul.f32.gmra.mxu0 %v2630
        %v2684 = vpop.f32.mrf.mxu0
        %v2685 = vadd.f32 0.0, %v2684
        %2686 = vmatmul.f32.gmra.mxu0 %v2631
        %v2687 = vpop.f32.mrf.mxu0
        %v2688 = vadd.f32 0.0, %v2687
        %2689 = vmatmul.f32.gmra.mxu0 %v2632
        %v2690 = vpop.f32.mrf.mxu0
        %v2691 = vadd.f32 0.0, %v2690
        %2692 = vmatmul.f32.gmra.mxu0 %v2633
        %v2693 = vpop.f32.mrf.mxu0
        %v2694 = vadd.f32 0.0, %v2693
        %2695 = vmatmul.f32.gmra.mxu0 %v2634
        %v2696 = vpop.f32.mrf.mxu0
        %v2697 = vadd.f32 0.0, %v2696
        %2698 = vmatmul.f32.gmra.mxu0 %v2635
        %v2699 = vpop.f32.mrf.mxu0
        %v2700 = vadd.f32 0.0, %v2699
        %2701 = vmatmul.f32.gmra.mxu0 %v2636
        %v2702 = vpop.f32.mrf.mxu0
        %v2703 = vadd.f32 0.0, %v2702
        %2704 = vmatmul.f32.gmra.mxu0 %v2637
        %v2705 = vpop.f32.mrf.mxu0
        %v2706 = vadd.f32 0.0, %v2705
        %2707 = vmatmul.f32.gmra.mxu0 %v2638
        %v2708 = vpop.f32.mrf.mxu0
        %v2709 = vadd.f32 0.0, %v2708
        %2710 = vmatmul.f32.gmra.mxu0 %v2639
        %v2711 = vpop.f32.mrf.mxu0
        %v2712 = vadd.f32 0.0, %v2711
        %2713 = vmatmul.f32.gmra.mxu0 %v2640
        %v2714 = vpop.f32.mrf.mxu0
        %v2715 = vadd.f32 0.0, %v2714
        %2716 = vmatmul.f32.gmra.mxu0 %v2641
        %v2717 = vpop.f32.mrf.mxu0
        %v2718 = vadd.f32 0.0, %v2717
        %2719 = vmatmul.f32.gmra.mxu0 %v2642
        %v2720 = vpop.f32.mrf.mxu0
        %v2721 = vadd.f32 0.0, %v2720
        %2722 = vmatmul.f32.gmra.mxu0 %v2643
        %v2723 = vpop.f32.mrf.mxu0
        %v2724 = vadd.f32 0.0, %v2723
        %2725 = vdwg.mxu0
        %v2726 = vadd.f32 %v2581, %v2679
        %v2727 = vadd.f32 %v2584, %v2682
        %v2728 = vadd.f32 %v2587, %v2685
        %v2729 = vadd.f32 %v2590, %v2688
        %v2730 = vadd.f32 %v2593, %v2691
        %v2731 = vadd.f32 %v2596, %v2694
        %v2732 = vadd.f32 %v2599, %v2697
        %v2733 = vadd.f32 %v2602, %v2700
        %v2734 = vadd.f32 %v2605, %v2703
        %v2735 = vadd.f32 %v2608, %v2706
        %v2736 = vadd.f32 %v2611, %v2709
        %v2737 = vadd.f32 %v2614, %v2712
        %v2738 = vadd.f32 %v2617, %v2715
        %v2739 = vadd.f32 %v2620, %v2718
        %v2740 = vadd.f32 %v2623, %v2721
        %v2741 = vadd.f32 %v2626, %v2724
        %v2742 = vld [vmem:[%s1347] sm:$0xff]
        %v2743 = vld [vmem:[%s1347 + $0x8] sm:$0xff]
        %v2744 = vld [vmem:[%s1347 + $0x18] sm:$0xff]
        %v2745 = vld [vmem:[%s1347 + $0x20] sm:$0xff]
        %v2746 = vld [vmem:[%s1347 + $0x30] sm:$0xff]
        %v2747 = vld [vmem:[%s1347 + $0x38] sm:$0xff]
        %v2748 = vld [vmem:[%s1347 + $0x48] sm:$0xff]
        %v2749 = vld [vmem:[%s1347 + $0x50] sm:$0xff]
        %v2750 = vld [vmem:[%s1347 + $0x60] sm:$0xff]
        %v2751 = vld [vmem:[%s1347 + $0x68] sm:$0xff]
        %v2752 = vld [vmem:[%s1347 + $0x78] sm:$0xff]
        %v2753 = vld [vmem:[%s1347 + $0x80] sm:$0xff]
        %v2754 = vld [vmem:[%s1347 + $0x90] sm:$0xff]
        %v2755 = vld [vmem:[%s1347 + $0x98] sm:$0xff]
        %v2756 = vld [vmem:[%s1347 + $0xa8] sm:$0xff]
        %v2757 = vld [vmem:[%s1347 + $0xb0] sm:$0xff]
        %s2758 = scalar_lea.vmem [#allocation3], 384
        %v2759 = vld [vmem:[%s2758] sm:$0xff]
        %v2760 = vld [vmem:[%s2758 + $0x8] sm:$0xff]
        %v2761 = vld [vmem:[%s2758 + $0x10] sm:$0xff]
        %v2762 = vld [vmem:[%s2758 + $0x18] sm:$0xff]
        %v2763 = vld [vmem:[%s2758 + $0x20] sm:$0xff]
        %v2764 = vld [vmem:[%s2758 + $0x28] sm:$0xff]
        %v2765 = vld [vmem:[%s2758 + $0x30] sm:$0xff]
        %v2766 = vld [vmem:[%s2758 + $0x38] sm:$0xff]
        %v2767 = vld [vmem:[%s2758 + $0x40] sm:$0xff]
        %v2768 = vld [vmem:[%s2758 + $0x48] sm:$0xff]
        %v2769 = vld [vmem:[%s2758 + $0x50] sm:$0xff]
        %v2770 = vld [vmem:[%s2758 + $0x58] sm:$0xff]
        %v2771 = vld [vmem:[%s2758 + $0x60] sm:$0xff]
        %v2772 = vld [vmem:[%s2758 + $0x68] sm:$0xff]
        %v2773 = vld [vmem:[%s2758 + $0x70] sm:$0xff]
        %v2774 = vld [vmem:[%s2758 + $0x78] sm:$0xff]
        %2775 = vmatpush.msra.mxu0 %v2774
        %2776 = vmatpush.msra.mxu0 %v2773
        %2777 = vmatpush.msra.mxu0 %v2772
        %2778 = vmatpush.msra.mxu0 %v2771
        %2779 = vmatpush.msra.mxu0 %v2770
        %2780 = vmatpush.msra.mxu0 %v2769
        %2781 = vmatpush.msra.mxu0 %v2768
        %2782 = vmatpush.msra.mxu0 %v2767
        %2783 = vmatpush.msra.mxu0 %v2766
        %2784 = vmatpush.msra.mxu0 %v2765
        %2785 = vmatpush.msra.mxu0 %v2764
        %2786 = vmatpush.msra.mxu0 %v2763
        %2787 = vmatpush.msra.mxu0 %v2762
        %2788 = vmatpush.msra.mxu0 %v2761
        %2789 = vmatpush.msra.mxu0 %v2760
        %2790 = vmatpush.msra.mxu0 %v2759
        %2791 = vmatmul.f32.gmra.mxu0 %v2742
        %v2792 = vpop.f32.mrf.mxu0
        %v2793 = vadd.f32 0.0, %v2792
        %2794 = vmatmul.f32.gmra.mxu0 %v2743
        %v2795 = vpop.f32.mrf.mxu0
        %v2796 = vadd.f32 0.0, %v2795
        %2797 = vmatmul.f32.gmra.mxu0 %v2744
        %v2798 = vpop.f32.mrf.mxu0
        %v2799 = vadd.f32 0.0, %v2798
        %2800 = vmatmul.f32.gmra.mxu0 %v2745
        %v2801 = vpop.f32.mrf.mxu0
        %v2802 = vadd.f32 0.0, %v2801
        %2803 = vmatmul.f32.gmra.mxu0 %v2746
        %v2804 = vpop.f32.mrf.mxu0
        %v2805 = vadd.f32 0.0, %v2804
        %2806 = vmatmul.f32.gmra.mxu0 %v2747
        %v2807 = vpop.f32.mrf.mxu0
        %v2808 = vadd.f32 0.0, %v2807
        %2809 = vmatmul.f32.gmra.mxu0 %v2748
        %v2810 = vpop.f32.mrf.mxu0
        %v2811 = vadd.f32 0.0, %v2810
        %2812 = vmatmul.f32.gmra.mxu0 %v2749
        %v2813 = vpop.f32.mrf.mxu0
        %v2814 = vadd.f32 0.0, %v2813
        %2815 = vmatmul.f32.gmra.mxu0 %v2750
        %v2816 = vpop.f32.mrf.mxu0
        %v2817 = vadd.f32 0.0, %v2816
        %2818 = vmatmul.f32.gmra.mxu0 %v2751
        %v2819 = vpop.f32.mrf.mxu0
        %v2820 = vadd.f32 0.0, %v2819
        %2821 = vmatmul.f32.gmra.mxu0 %v2752
        %v2822 = vpop.f32.mrf.mxu0
        %v2823 = vadd.f32 0.0, %v2822
        %2824 = vmatmul.f32.gmra.mxu0 %v2753
        %v2825 = vpop.f32.mrf.mxu0
        %v2826 = vadd.f32 0.0, %v2825
        %2827 = vmatmul.f32.gmra.mxu0 %v2754
        %v2828 = vpop.f32.mrf.mxu0
        %v2829 = vadd.f32 0.0, %v2828
        %2830 = vmatmul.f32.gmra.mxu0 %v2755
        %v2831 = vpop.f32.mrf.mxu0
        %v2832 = vadd.f32 0.0, %v2831
        %2833 = vmatmul.f32.gmra.mxu0 %v2756
        %v2834 = vpop.f32.mrf.mxu0
        %v2835 = vadd.f32 0.0, %v2834
        %2836 = vmatmul.f32.gmra.mxu0 %v2757
        %v2837 = vpop.f32.mrf.mxu0
        %v2838 = vadd.f32 0.0, %v2837
        %2839 = vdwg.mxu0
        %v2840 = vadd.f32 %v2726, %v2793
        %v2841 = vadd.f32 %v2727, %v2796
        %v2842 = vadd.f32 %v2728, %v2799
        %v2843 = vadd.f32 %v2729, %v2802
        %v2844 = vadd.f32 %v2730, %v2805
        %v2845 = vadd.f32 %v2731, %v2808
        %v2846 = vadd.f32 %v2732, %v2811
        %v2847 = vadd.f32 %v2733, %v2814
        %v2848 = vadd.f32 %v2734, %v2817
        %v2849 = vadd.f32 %v2735, %v2820
        %v2850 = vadd.f32 %v2736, %v2823
        %v2851 = vadd.f32 %v2737, %v2826
        %v2852 = vadd.f32 %v2738, %v2829
        %v2853 = vadd.f32 %v2739, %v2832
        %v2854 = vadd.f32 %v2740, %v2835
        %v2855 = vadd.f32 %v2741, %v2838
        %v2856 = vld [vmem:[%s1347 + $0x1] sm:$0xff]
        %v2857 = vld [vmem:[%s1347 + $0x9] sm:$0xff]
        %v2858 = vld [vmem:[%s1347 + $0x19] sm:$0xff]
        %v2859 = vld [vmem:[%s1347 + $0x21] sm:$0xff]
        %v2860 = vld [vmem:[%s1347 + $0x31] sm:$0xff]
        %v2861 = vld [vmem:[%s1347 + $0x39] sm:$0xff]
        %v2862 = vld [vmem:[%s1347 + $0x49] sm:$0xff]
        %v2863 = vld [vmem:[%s1347 + $0x51] sm:$0xff]
        %v2864 = vld [vmem:[%s1347 + $0x61] sm:$0xff]
        %v2865 = vld [vmem:[%s1347 + $0x69] sm:$0xff]
        %v2866 = vld [vmem:[%s1347 + $0x79] sm:$0xff]
        %v2867 = vld [vmem:[%s1347 + $0x81] sm:$0xff]
        %v2868 = vld [vmem:[%s1347 + $0x91] sm:$0xff]
        %v2869 = vld [vmem:[%s1347 + $0x99] sm:$0xff]
        %v2870 = vld [vmem:[%s1347 + $0xa9] sm:$0xff]
        %v2871 = vld [vmem:[%s1347 + $0xb1] sm:$0xff]
        %s2872 = scalar_lea.vmem [#allocation3], 512
        %v2873 = vld [vmem:[%s2872] sm:$0xff]
        %v2874 = vld [vmem:[%s2872 + $0x8] sm:$0xff]
        %v2875 = vld [vmem:[%s2872 + $0x10] sm:$0xff]
        %v2876 = vld [vmem:[%s2872 + $0x18] sm:$0xff]
        %v2877 = vld [vmem:[%s2872 + $0x20] sm:$0xff]
        %v2878 = vld [vmem:[%s2872 + $0x28] sm:$0xff]
        %v2879 = vld [vmem:[%s2872 + $0x30] sm:$0xff]
        %v2880 = vld [vmem:[%s2872 + $0x38] sm:$0xff]
        %v2881 = vld [vmem:[%s2872 + $0x40] sm:$0xff]
        %v2882 = vld [vmem:[%s2872 + $0x48] sm:$0xff]
        %v2883 = vld [vmem:[%s2872 + $0x50] sm:$0xff]
        %v2884 = vld [vmem:[%s2872 + $0x58] sm:$0xff]
        %v2885 = vld [vmem:[%s2872 + $0x60] sm:$0xff]
        %v2886 = vld [vmem:[%s2872 + $0x68] sm:$0xff]
        %v2887 = vld [vmem:[%s2872 + $0x70] sm:$0xff]
        %v2888 = vld [vmem:[%s2872 + $0x78] sm:$0xff]
        %2889 = vmatpush.msra.mxu0 %v2888
        %2890 = vmatpush.msra.mxu0 %v2887
        %2891 = vmatpush.msra.mxu0 %v2886
        %2892 = vmatpush.msra.mxu0 %v2885
        %2893 = vmatpush.msra.mxu0 %v2884
        %2894 = vmatpush.msra.mxu0 %v2883
        %2895 = vmatpush.msra.mxu0 %v2882
        %2896 = vmatpush.msra.mxu0 %v2881
        %2897 = vmatpush.msra.mxu0 %v2880
        %2898 = vmatpush.msra.mxu0 %v2879
        %2899 = vmatpush.msra.mxu0 %v2878
        %2900 = vmatpush.msra.mxu0 %v2877
        %2901 = vmatpush.msra.mxu0 %v2876
        %2902 = vmatpush.msra.mxu0 %v2875
        %2903 = vmatpush.msra.mxu0 %v2874
        %2904 = vmatpush.msra.mxu0 %v2873
        %2905 = vmatmul.f32.gmra.mxu0 %v2856
        %v2906 = vpop.f32.mrf.mxu0
        %v2907 = vadd.f32 0.0, %v2906
        %2908 = vmatmul.f32.gmra.mxu0 %v2857
        %v2909 = vpop.f32.mrf.mxu0
        %v2910 = vadd.f32 0.0, %v2909
        %2911 = vmatmul.f32.gmra.mxu0 %v2858
        %v2912 = vpop.f32.mrf.mxu0
        %v2913 = vadd.f32 0.0, %v2912
        %2914 = vmatmul.f32.gmra.mxu0 %v2859
        %v2915 = vpop.f32.mrf.mxu0
        %v2916 = vadd.f32 0.0, %v2915
        %2917 = vmatmul.f32.gmra.mxu0 %v2860
        %v2918 = vpop.f32.mrf.mxu0
        %v2919 = vadd.f32 0.0, %v2918
        %2920 = vmatmul.f32.gmra.mxu0 %v2861
        %v2921 = vpop.f32.mrf.mxu0
        %v2922 = vadd.f32 0.0, %v2921
        %2923 = vmatmul.f32.gmra.mxu0 %v2862
        %v2924 = vpop.f32.mrf.mxu0
        %v2925 = vadd.f32 0.0, %v2924
        %2926 = vmatmul.f32.gmra.mxu0 %v2863
        %v2927 = vpop.f32.mrf.mxu0
        %v2928 = vadd.f32 0.0, %v2927
        %2929 = vmatmul.f32.gmra.mxu0 %v2864
        %v2930 = vpop.f32.mrf.mxu0
        %v2931 = vadd.f32 0.0, %v2930
        %2932 = vmatmul.f32.gmra.mxu0 %v2865
        %v2933 = vpop.f32.mrf.mxu0
        %v2934 = vadd.f32 0.0, %v2933
        %2935 = vmatmul.f32.gmra.mxu0 %v2866
        %v2936 = vpop.f32.mrf.mxu0
        %v2937 = vadd.f32 0.0, %v2936
        %2938 = vmatmul.f32.gmra.mxu0 %v2867
        %v2939 = vpop.f32.mrf.mxu0
        %v2940 = vadd.f32 0.0, %v2939
        %2941 = vmatmul.f32.gmra.mxu0 %v2868
        %v2942 = vpop.f32.mrf.mxu0
        %v2943 = vadd.f32 0.0, %v2942
        %2944 = vmatmul.f32.gmra.mxu0 %v2869
        %v2945 = vpop.f32.mrf.mxu0
        %v2946 = vadd.f32 0.0, %v2945
        %2947 = vmatmul.f32.gmra.mxu0 %v2870
        %v2948 = vpop.f32.mrf.mxu0
        %v2949 = vadd.f32 0.0, %v2948
        %2950 = vmatmul.f32.gmra.mxu0 %v2871
        %v2951 = vpop.f32.mrf.mxu0
        %v2952 = vadd.f32 0.0, %v2951
        %2953 = vdwg.mxu0
        %v2954 = vadd.f32 %v2840, %v2907
        %v2955 = vadd.f32 %v2841, %v2910
        %v2956 = vadd.f32 %v2842, %v2913
        %v2957 = vadd.f32 %v2843, %v2916
        %v2958 = vadd.f32 %v2844, %v2919
        %v2959 = vadd.f32 %v2845, %v2922
        %v2960 = vadd.f32 %v2846, %v2925
        %v2961 = vadd.f32 %v2847, %v2928
        %v2962 = vadd.f32 %v2848, %v2931
        %v2963 = vadd.f32 %v2849, %v2934
        %v2964 = vadd.f32 %v2850, %v2937
        %v2965 = vadd.f32 %v2851, %v2940
        %v2966 = vadd.f32 %v2852, %v2943
        %v2967 = vadd.f32 %v2853, %v2946
        %v2968 = vadd.f32 %v2854, %v2949
        %v2969 = vadd.f32 %v2855, %v2952
        %v2970 = vld [vmem:[%s1347 + $0x2] sm:$0xff]
        %v2971 = vld [vmem:[%s1347 + $0xa] sm:$0xff]
        %v2972 = vld [vmem:[%s1347 + $0x1a] sm:$0xff]
        %v2973 = vld [vmem:[%s1347 + $0x22] sm:$0xff]
        %v2974 = vld [vmem:[%s1347 + $0x32] sm:$0xff]
        %v2975 = vld [vmem:[%s1347 + $0x3a] sm:$0xff]
        %v2976 = vld [vmem:[%s1347 + $0x4a] sm:$0xff]
        %v2977 = vld [vmem:[%s1347 + $0x52] sm:$0xff]
        %v2978 = vld [vmem:[%s1347 + $0x62] sm:$0xff]
        %v2979 = vld [vmem:[%s1347 + $0x6a] sm:$0xff]
        %v2980 = vld [vmem:[%s1347 + $0x7a] sm:$0xff]
        %v2981 = vld [vmem:[%s1347 + $0x82] sm:$0xff]
        %v2982 = vld [vmem:[%s1347 + $0x92] sm:$0xff]
        %v2983 = vld [vmem:[%s1347 + $0x9a] sm:$0xff]
        %v2984 = vld [vmem:[%s1347 + $0xaa] sm:$0xff]
        %v2985 = vld [vmem:[%s1347 + $0xb2] sm:$0xff]
        %s2986 = scalar_lea.vmem [#allocation3], 640
        %v2987 = vld [vmem:[%s2986] sm:$0xff]
        %v2988 = vld [vmem:[%s2986 + $0x8] sm:$0xff]
        %v2989 = vld [vmem:[%s2986 + $0x10] sm:$0xff]
        %v2990 = vld [vmem:[%s2986 + $0x18] sm:$0xff]
        %v2991 = vld [vmem:[%s2986 + $0x20] sm:$0xff]
        %v2992 = vld [vmem:[%s2986 + $0x28] sm:$0xff]
        %v2993 = vld [vmem:[%s2986 + $0x30] sm:$0xff]
        %v2994 = vld [vmem:[%s2986 + $0x38] sm:$0xff]
        %v2995 = vld [vmem:[%s2986 + $0x40] sm:$0xff]
        %v2996 = vld [vmem:[%s2986 + $0x48] sm:$0xff]
        %v2997 = vld [vmem:[%s2986 + $0x50] sm:$0xff]
        %v2998 = vld [vmem:[%s2986 + $0x58] sm:$0xff]
        %v2999 = vld [vmem:[%s2986 + $0x60] sm:$0xff]
        %v3000 = vld [vmem:[%s2986 + $0x68] sm:$0xff]
        %v3001 = vld [vmem:[%s2986 + $0x70] sm:$0xff]
        %v3002 = vld [vmem:[%s2986 + $0x78] sm:$0xff]
        %3003 = vmatpush.msra.mxu0 %v3002
        %3004 = vmatpush.msra.mxu0 %v3001
        %3005 = vmatpush.msra.mxu0 %v3000
        %3006 = vmatpush.msra.mxu0 %v2999
        %3007 = vmatpush.msra.mxu0 %v2998
        %3008 = vmatpush.msra.mxu0 %v2997
        %3009 = vmatpush.msra.mxu0 %v2996
        %3010 = vmatpush.msra.mxu0 %v2995
        %3011 = vmatpush.msra.mxu0 %v2994
        %3012 = vmatpush.msra.mxu0 %v2993
        %3013 = vmatpush.msra.mxu0 %v2992
        %3014 = vmatpush.msra.mxu0 %v2991
        %3015 = vmatpush.msra.mxu0 %v2990
        %3016 = vmatpush.msra.mxu0 %v2989
        %3017 = vmatpush.msra.mxu0 %v2988
        %3018 = vmatpush.msra.mxu0 %v2987
        %3019 = vmatmul.f32.gmra.mxu0 %v2970
        %v3020 = vpop.f32.mrf.mxu0
        %v3021 = vadd.f32 0.0, %v3020
        %3022 = vmatmul.f32.gmra.mxu0 %v2971
        %v3023 = vpop.f32.mrf.mxu0
        %v3024 = vadd.f32 0.0, %v3023
        %3025 = vmatmul.f32.gmra.mxu0 %v2972
        %v3026 = vpop.f32.mrf.mxu0
        %v3027 = vadd.f32 0.0, %v3026
        %3028 = vmatmul.f32.gmra.mxu0 %v2973
        %v3029 = vpop.f32.mrf.mxu0
        %v3030 = vadd.f32 0.0, %v3029
        %3031 = vmatmul.f32.gmra.mxu0 %v2974
        %v3032 = vpop.f32.mrf.mxu0
        %v3033 = vadd.f32 0.0, %v3032
        %3034 = vmatmul.f32.gmra.mxu0 %v2975
        %v3035 = vpop.f32.mrf.mxu0
        %v3036 = vadd.f32 0.0, %v3035
        %3037 = vmatmul.f32.gmra.mxu0 %v2976
        %v3038 = vpop.f32.mrf.mxu0
        %v3039 = vadd.f32 0.0, %v3038
        %3040 = vmatmul.f32.gmra.mxu0 %v2977
        %v3041 = vpop.f32.mrf.mxu0
        %v3042 = vadd.f32 0.0, %v3041
        %3043 = vmatmul.f32.gmra.mxu0 %v2978
        %v3044 = vpop.f32.mrf.mxu0
        %v3045 = vadd.f32 0.0, %v3044
        %3046 = vmatmul.f32.gmra.mxu0 %v2979
        %v3047 = vpop.f32.mrf.mxu0
        %v3048 = vadd.f32 0.0, %v3047
        %3049 = vmatmul.f32.gmra.mxu0 %v2980
        %v3050 = vpop.f32.mrf.mxu0
        %v3051 = vadd.f32 0.0, %v3050
        %3052 = vmatmul.f32.gmra.mxu0 %v2981
        %v3053 = vpop.f32.mrf.mxu0
        %v3054 = vadd.f32 0.0, %v3053
        %3055 = vmatmul.f32.gmra.mxu0 %v2982
        %v3056 = vpop.f32.mrf.mxu0
        %v3057 = vadd.f32 0.0, %v3056
        %3058 = vmatmul.f32.gmra.mxu0 %v2983
        %v3059 = vpop.f32.mrf.mxu0
        %v3060 = vadd.f32 0.0, %v3059
        %3061 = vmatmul.f32.gmra.mxu0 %v2984
        %v3062 = vpop.f32.mrf.mxu0
        %v3063 = vadd.f32 0.0, %v3062
        %3064 = vmatmul.f32.gmra.mxu0 %v2985
        %v3065 = vpop.f32.mrf.mxu0
        %v3066 = vadd.f32 0.0, %v3065
        %3067 = vdwg.mxu0
        %v3068 = vadd.f32 %v2954, %v3021
        %v3069 = vadd.f32 %v2955, %v3024
        %v3070 = vadd.f32 %v2956, %v3027
        %v3071 = vadd.f32 %v2957, %v3030
        %v3072 = vadd.f32 %v2958, %v3033
        %v3073 = vadd.f32 %v2959, %v3036
        %v3074 = vadd.f32 %v2960, %v3039
        %v3075 = vadd.f32 %v2961, %v3042
        %v3076 = vadd.f32 %v2962, %v3045
        %v3077 = vadd.f32 %v2963, %v3048
        %v3078 = vadd.f32 %v2964, %v3051
        %v3079 = vadd.f32 %v2965, %v3054
        %v3080 = vadd.f32 %v2966, %v3057
        %v3081 = vadd.f32 %v2967, %v3060
        %v3082 = vadd.f32 %v2968, %v3063
        %v3083 = vadd.f32 %v2969, %v3066
        %s3084 = scalar_lea.vmem [#allocation2], 48
        %v3085 = vld [vmem:[%s3084] sm:$0xff]
        %v3086 = vld [vmem:[%s3084 + $0x8] sm:$0xff]
        %v3087 = vld [vmem:[%s3084 + $0x18] sm:$0xff]
        %v3088 = vld [vmem:[%s3084 + $0x20] sm:$0xff]
        %v3089 = vld [vmem:[%s3084 + $0x30] sm:$0xff]
        %v3090 = vld [vmem:[%s3084 + $0x38] sm:$0xff]
        %v3091 = vld [vmem:[%s3084 + $0x48] sm:$0xff]
        %v3092 = vld [vmem:[%s3084 + $0x50] sm:$0xff]
        %v3093 = vld [vmem:[%s3084 + $0x60] sm:$0xff]
        %v3094 = vld [vmem:[%s3084 + $0x68] sm:$0xff]
        %v3095 = vld [vmem:[%s3084 + $0x78] sm:$0xff]
        %v3096 = vld [vmem:[%s3084 + $0x80] sm:$0xff]
        %v3097 = vld [vmem:[%s3084 + $0x90] sm:$0xff]
        %v3098 = vld [vmem:[%s3084 + $0x98] sm:$0xff]
        %v3099 = vld [vmem:[%s3084 + $0xa8] sm:$0xff]
        %v3100 = vld [vmem:[%s3084 + $0xb0] sm:$0xff]
        %s3101 = scalar_lea.vmem [#allocation3], 768
        %v3102 = vld [vmem:[%s3101] sm:$0xff]
        %v3103 = vld [vmem:[%s3101 + $0x8] sm:$0xff]
        %v3104 = vld [vmem:[%s3101 + $0x10] sm:$0xff]
        %v3105 = vld [vmem:[%s3101 + $0x18] sm:$0xff]
        %v3106 = vld [vmem:[%s3101 + $0x20] sm:$0xff]
        %v3107 = vld [vmem:[%s3101 + $0x28] sm:$0xff]
        %v3108 = vld [vmem:[%s3101 + $0x30] sm:$0xff]
        %v3109 = vld [vmem:[%s3101 + $0x38] sm:$0xff]
        %v3110 = vld [vmem:[%s3101 + $0x40] sm:$0xff]
        %v3111 = vld [vmem:[%s3101 + $0x48] sm:$0xff]
        %v3112 = vld [vmem:[%s3101 + $0x50] sm:$0xff]
        %v3113 = vld [vmem:[%s3101 + $0x58] sm:$0xff]
        %v3114 = vld [vmem:[%s3101 + $0x60] sm:$0xff]
        %v3115 = vld [vmem:[%s3101 + $0x68] sm:$0xff]
        %v3116 = vld [vmem:[%s3101 + $0x70] sm:$0xff]
        %v3117 = vld [vmem:[%s3101 + $0x78] sm:$0xff]
        %3118 = vmatpush.msra.mxu0 %v3117
        %3119 = vmatpush.msra.mxu0 %v3116
        %3120 = vmatpush.msra.mxu0 %v3115
        %3121 = vmatpush.msra.mxu0 %v3114
        %3122 = vmatpush.msra.mxu0 %v3113
        %3123 = vmatpush.msra.mxu0 %v3112
        %3124 = vmatpush.msra.mxu0 %v3111
        %3125 = vmatpush.msra.mxu0 %v3110
        %3126 = vmatpush.msra.mxu0 %v3109
        %3127 = vmatpush.msra.mxu0 %v3108
        %3128 = vmatpush.msra.mxu0 %v3107
        %3129 = vmatpush.msra.mxu0 %v3106
        %3130 = vmatpush.msra.mxu0 %v3105
        %3131 = vmatpush.msra.mxu0 %v3104
        %3132 = vmatpush.msra.mxu0 %v3103
        %3133 = vmatpush.msra.mxu0 %v3102
        %3134 = vmatmul.f32.gmra.mxu0 %v3085
        %v3135 = vpop.f32.mrf.mxu0
        %v3136 = vadd.f32 0.0, %v3135
        %3137 = vmatmul.f32.gmra.mxu0 %v3086
        %v3138 = vpop.f32.mrf.mxu0
        %v3139 = vadd.f32 0.0, %v3138
        %3140 = vmatmul.f32.gmra.mxu0 %v3087
        %v3141 = vpop.f32.mrf.mxu0
        %v3142 = vadd.f32 0.0, %v3141
        %3143 = vmatmul.f32.gmra.mxu0 %v3088
        %v3144 = vpop.f32.mrf.mxu0
        %v3145 = vadd.f32 0.0, %v3144
        %3146 = vmatmul.f32.gmra.mxu0 %v3089
        %v3147 = vpop.f32.mrf.mxu0
        %v3148 = vadd.f32 0.0, %v3147
        %3149 = vmatmul.f32.gmra.mxu0 %v3090
        %v3150 = vpop.f32.mrf.mxu0
        %v3151 = vadd.f32 0.0, %v3150
        %3152 = vmatmul.f32.gmra.mxu0 %v3091
        %v3153 = vpop.f32.mrf.mxu0
        %v3154 = vadd.f32 0.0, %v3153
        %3155 = vmatmul.f32.gmra.mxu0 %v3092
        %v3156 = vpop.f32.mrf.mxu0
        %v3157 = vadd.f32 0.0, %v3156
        %3158 = vmatmul.f32.gmra.mxu0 %v3093
        %v3159 = vpop.f32.mrf.mxu0
        %v3160 = vadd.f32 0.0, %v3159
        %3161 = vmatmul.f32.gmra.mxu0 %v3094
        %v3162 = vpop.f32.mrf.mxu0
        %v3163 = vadd.f32 0.0, %v3162
        %3164 = vmatmul.f32.gmra.mxu0 %v3095
        %v3165 = vpop.f32.mrf.mxu0
        %v3166 = vadd.f32 0.0, %v3165
        %3167 = vmatmul.f32.gmra.mxu0 %v3096
        %v3168 = vpop.f32.mrf.mxu0
        %v3169 = vadd.f32 0.0, %v3168
        %3170 = vmatmul.f32.gmra.mxu0 %v3097
        %v3171 = vpop.f32.mrf.mxu0
        %v3172 = vadd.f32 0.0, %v3171
        %3173 = vmatmul.f32.gmra.mxu0 %v3098
        %v3174 = vpop.f32.mrf.mxu0
        %v3175 = vadd.f32 0.0, %v3174
        %3176 = vmatmul.f32.gmra.mxu0 %v3099
        %v3177 = vpop.f32.mrf.mxu0
        %v3178 = vadd.f32 0.0, %v3177
        %3179 = vmatmul.f32.gmra.mxu0 %v3100
        %v3180 = vpop.f32.mrf.mxu0
        %v3181 = vadd.f32 0.0, %v3180
        %3182 = vdwg.mxu0
        %v3183 = vadd.f32 %v3068, %v3136
        %v3184 = vadd.f32 %v3069, %v3139
        %v3185 = vadd.f32 %v3070, %v3142
        %v3186 = vadd.f32 %v3071, %v3145
        %v3187 = vadd.f32 %v3072, %v3148
        %v3188 = vadd.f32 %v3073, %v3151
        %v3189 = vadd.f32 %v3074, %v3154
        %v3190 = vadd.f32 %v3075, %v3157
        %v3191 = vadd.f32 %v3076, %v3160
        %v3192 = vadd.f32 %v3077, %v3163
        %v3193 = vadd.f32 %v3078, %v3166
        %v3194 = vadd.f32 %v3079, %v3169
        %v3195 = vadd.f32 %v3080, %v3172
        %v3196 = vadd.f32 %v3081, %v3175
        %v3197 = vadd.f32 %v3082, %v3178
        %v3198 = vadd.f32 %v3083, %v3181
        %v3199 = vld [vmem:[%s3084 + $0x1] sm:$0xff]
        %v3200 = vld [vmem:[%s3084 + $0x9] sm:$0xff]
        %v3201 = vld [vmem:[%s3084 + $0x19] sm:$0xff]
        %v3202 = vld [vmem:[%s3084 + $0x21] sm:$0xff]
        %v3203 = vld [vmem:[%s3084 + $0x31] sm:$0xff]
        %v3204 = vld [vmem:[%s3084 + $0x39] sm:$0xff]
        %v3205 = vld [vmem:[%s3084 + $0x49] sm:$0xff]
        %v3206 = vld [vmem:[%s3084 + $0x51] sm:$0xff]
        %v3207 = vld [vmem:[%s3084 + $0x61] sm:$0xff]
        %v3208 = vld [vmem:[%s3084 + $0x69] sm:$0xff]
        %v3209 = vld [vmem:[%s3084 + $0x79] sm:$0xff]
        %v3210 = vld [vmem:[%s3084 + $0x81] sm:$0xff]
        %v3211 = vld [vmem:[%s3084 + $0x91] sm:$0xff]
        %v3212 = vld [vmem:[%s3084 + $0x99] sm:$0xff]
        %v3213 = vld [vmem:[%s3084 + $0xa9] sm:$0xff]
        %v3214 = vld [vmem:[%s3084 + $0xb1] sm:$0xff]
        %s3215 = scalar_lea.vmem [#allocation3], 896
        %v3216 = vld [vmem:[%s3215] sm:$0xff]
        %v3217 = vld [vmem:[%s3215 + $0x8] sm:$0xff]
        %v3218 = vld [vmem:[%s3215 + $0x10] sm:$0xff]
        %v3219 = vld [vmem:[%s3215 + $0x18] sm:$0xff]
        %v3220 = vld [vmem:[%s3215 + $0x20] sm:$0xff]
        %v3221 = vld [vmem:[%s3215 + $0x28] sm:$0xff]
        %v3222 = vld [vmem:[%s3215 + $0x30] sm:$0xff]
        %v3223 = vld [vmem:[%s3215 + $0x38] sm:$0xff]
        %v3224 = vld [vmem:[%s3215 + $0x40] sm:$0xff]
        %v3225 = vld [vmem:[%s3215 + $0x48] sm:$0xff]
        %v3226 = vld [vmem:[%s3215 + $0x50] sm:$0xff]
        %v3227 = vld [vmem:[%s3215 + $0x58] sm:$0xff]
        %v3228 = vld [vmem:[%s3215 + $0x60] sm:$0xff]
        %v3229 = vld [vmem:[%s3215 + $0x68] sm:$0xff]
        %v3230 = vld [vmem:[%s3215 + $0x70] sm:$0xff]
        %v3231 = vld [vmem:[%s3215 + $0x78] sm:$0xff]
        %3232 = vmatpush.msra.mxu0 %v3231
        %3233 = vmatpush.msra.mxu0 %v3230
        %3234 = vmatpush.msra.mxu0 %v3229
        %3235 = vmatpush.msra.mxu0 %v3228
        %3236 = vmatpush.msra.mxu0 %v3227
        %3237 = vmatpush.msra.mxu0 %v3226
        %3238 = vmatpush.msra.mxu0 %v3225
        %3239 = vmatpush.msra.mxu0 %v3224
        %3240 = vmatpush.msra.mxu0 %v3223
        %3241 = vmatpush.msra.mxu0 %v3222
        %3242 = vmatpush.msra.mxu0 %v3221
        %3243 = vmatpush.msra.mxu0 %v3220
        %3244 = vmatpush.msra.mxu0 %v3219
        %3245 = vmatpush.msra.mxu0 %v3218
        %3246 = vmatpush.msra.mxu0 %v3217
        %3247 = vmatpush.msra.mxu0 %v3216
        %3248 = vmatmul.f32.gmra.mxu0 %v3199
        %v3249 = vpop.f32.mrf.mxu0
        %v3250 = vadd.f32 0.0, %v3249
        %3251 = vmatmul.f32.gmra.mxu0 %v3200
        %v3252 = vpop.f32.mrf.mxu0
        %v3253 = vadd.f32 0.0, %v3252
        %3254 = vmatmul.f32.gmra.mxu0 %v3201
        %v3255 = vpop.f32.mrf.mxu0
        %v3256 = vadd.f32 0.0, %v3255
        %3257 = vmatmul.f32.gmra.mxu0 %v3202
        %v3258 = vpop.f32.mrf.mxu0
        %v3259 = vadd.f32 0.0, %v3258
        %3260 = vmatmul.f32.gmra.mxu0 %v3203
        %v3261 = vpop.f32.mrf.mxu0
        %v3262 = vadd.f32 0.0, %v3261
        %3263 = vmatmul.f32.gmra.mxu0 %v3204
        %v3264 = vpop.f32.mrf.mxu0
        %v3265 = vadd.f32 0.0, %v3264
        %3266 = vmatmul.f32.gmra.mxu0 %v3205
        %v3267 = vpop.f32.mrf.mxu0
        %v3268 = vadd.f32 0.0, %v3267
        %3269 = vmatmul.f32.gmra.mxu0 %v3206
        %v3270 = vpop.f32.mrf.mxu0
        %v3271 = vadd.f32 0.0, %v3270
        %3272 = vmatmul.f32.gmra.mxu0 %v3207
        %v3273 = vpop.f32.mrf.mxu0
        %v3274 = vadd.f32 0.0, %v3273
        %3275 = vmatmul.f32.gmra.mxu0 %v3208
        %v3276 = vpop.f32.mrf.mxu0
        %v3277 = vadd.f32 0.0, %v3276
        %3278 = vmatmul.f32.gmra.mxu0 %v3209
        %v3279 = vpop.f32.mrf.mxu0
        %v3280 = vadd.f32 0.0, %v3279
        %3281 = vmatmul.f32.gmra.mxu0 %v3210
        %v3282 = vpop.f32.mrf.mxu0
        %v3283 = vadd.f32 0.0, %v3282
        %3284 = vmatmul.f32.gmra.mxu0 %v3211
        %v3285 = vpop.f32.mrf.mxu0
        %v3286 = vadd.f32 0.0, %v3285
        %3287 = vmatmul.f32.gmra.mxu0 %v3212
        %v3288 = vpop.f32.mrf.mxu0
        %v3289 = vadd.f32 0.0, %v3288
        %3290 = vmatmul.f32.gmra.mxu0 %v3213
        %v3291 = vpop.f32.mrf.mxu0
        %v3292 = vadd.f32 0.0, %v3291
        %3293 = vmatmul.f32.gmra.mxu0 %v3214
        %v3294 = vpop.f32.mrf.mxu0
        %v3295 = vadd.f32 0.0, %v3294
        %3296 = vdwg.mxu0
        %v3297 = vadd.f32 %v3183, %v3250
        %v3298 = vadd.f32 %v3184, %v3253
        %v3299 = vadd.f32 %v3185, %v3256
        %v3300 = vadd.f32 %v3186, %v3259
        %v3301 = vadd.f32 %v3187, %v3262
        %v3302 = vadd.f32 %v3188, %v3265
        %v3303 = vadd.f32 %v3189, %v3268
        %v3304 = vadd.f32 %v3190, %v3271
        %v3305 = vadd.f32 %v3191, %v3274
        %v3306 = vadd.f32 %v3192, %v3277
        %v3307 = vadd.f32 %v3193, %v3280
        %v3308 = vadd.f32 %v3194, %v3283
        %v3309 = vadd.f32 %v3195, %v3286
        %v3310 = vadd.f32 %v3196, %v3289
        %v3311 = vadd.f32 %v3197, %v3292
        %v3312 = vadd.f32 %v3198, %v3295
        %v3313 = vld [vmem:[%s3084 + $0x2] sm:$0xff]
        %v3314 = vld [vmem:[%s3084 + $0xa] sm:$0xff]
        %v3315 = vld [vmem:[%s3084 + $0x1a] sm:$0xff]
        %v3316 = vld [vmem:[%s3084 + $0x22] sm:$0xff]
        %v3317 = vld [vmem:[%s3084 + $0x32] sm:$0xff]
        %v3318 = vld [vmem:[%s3084 + $0x3a] sm:$0xff]
        %v3319 = vld [vmem:[%s3084 + $0x4a] sm:$0xff]
        %v3320 = vld [vmem:[%s3084 + $0x52] sm:$0xff]
        %v3321 = vld [vmem:[%s3084 + $0x62] sm:$0xff]
        %v3322 = vld [vmem:[%s3084 + $0x6a] sm:$0xff]
        %v3323 = vld [vmem:[%s3084 + $0x7a] sm:$0xff]
        %v3324 = vld [vmem:[%s3084 + $0x82] sm:$0xff]
        %v3325 = vld [vmem:[%s3084 + $0x92] sm:$0xff]
        %v3326 = vld [vmem:[%s3084 + $0x9a] sm:$0xff]
        %v3327 = vld [vmem:[%s3084 + $0xaa] sm:$0xff]
        %v3328 = vld [vmem:[%s3084 + $0xb2] sm:$0xff]
        %s3329 = scalar_lea.vmem [#allocation3], 1024
        %v3330 = vld [vmem:[%s3329] sm:$0xff]
        %v3331 = vld [vmem:[%s3329 + $0x8] sm:$0xff]
        %v3332 = vld [vmem:[%s3329 + $0x10] sm:$0xff]
        %v3333 = vld [vmem:[%s3329 + $0x18] sm:$0xff]
        %v3334 = vld [vmem:[%s3329 + $0x20] sm:$0xff]
        %v3335 = vld [vmem:[%s3329 + $0x28] sm:$0xff]
        %v3336 = vld [vmem:[%s3329 + $0x30] sm:$0xff]
        %v3337 = vld [vmem:[%s3329 + $0x38] sm:$0xff]
        %v3338 = vld [vmem:[%s3329 + $0x40] sm:$0xff]
        %v3339 = vld [vmem:[%s3329 + $0x48] sm:$0xff]
        %v3340 = vld [vmem:[%s3329 + $0x50] sm:$0xff]
        %v3341 = vld [vmem:[%s3329 + $0x58] sm:$0xff]
        %v3342 = vld [vmem:[%s3329 + $0x60] sm:$0xff]
        %v3343 = vld [vmem:[%s3329 + $0x68] sm:$0xff]
        %v3344 = vld [vmem:[%s3329 + $0x70] sm:$0xff]
        %v3345 = vld [vmem:[%s3329 + $0x78] sm:$0xff]
        %3346 = vmatpush.msra.mxu0 %v3345
        %3347 = vmatpush.msra.mxu0 %v3344
        %3348 = vmatpush.msra.mxu0 %v3343
        %3349 = vmatpush.msra.mxu0 %v3342
        %3350 = vmatpush.msra.mxu0 %v3341
        %3351 = vmatpush.msra.mxu0 %v3340
        %3352 = vmatpush.msra.mxu0 %v3339
        %3353 = vmatpush.msra.mxu0 %v3338
        %3354 = vmatpush.msra.mxu0 %v3337
        %3355 = vmatpush.msra.mxu0 %v3336
        %3356 = vmatpush.msra.mxu0 %v3335
        %3357 = vmatpush.msra.mxu0 %v3334
        %3358 = vmatpush.msra.mxu0 %v3333
        %3359 = vmatpush.msra.mxu0 %v3332
        %3360 = vmatpush.msra.mxu0 %v3331
        %3361 = vmatpush.msra.mxu0 %v3330
        %3362 = vmatmul.f32.gmra.mxu0 %v3313
        %v3363 = vpop.f32.mrf.mxu0
        %v3364 = vadd.f32 0.0, %v3363
        %3365 = vmatmul.f32.gmra.mxu0 %v3314
        %v3366 = vpop.f32.mrf.mxu0
        %v3367 = vadd.f32 0.0, %v3366
        %3368 = vmatmul.f32.gmra.mxu0 %v3315
        %v3369 = vpop.f32.mrf.mxu0
        %v3370 = vadd.f32 0.0, %v3369
        %3371 = vmatmul.f32.gmra.mxu0 %v3316
        %v3372 = vpop.f32.mrf.mxu0
        %v3373 = vadd.f32 0.0, %v3372
        %3374 = vmatmul.f32.gmra.mxu0 %v3317
        %v3375 = vpop.f32.mrf.mxu0
        %v3376 = vadd.f32 0.0, %v3375
        %3377 = vmatmul.f32.gmra.mxu0 %v3318
        %v3378 = vpop.f32.mrf.mxu0
        %v3379 = vadd.f32 0.0, %v3378
        %3380 = vmatmul.f32.gmra.mxu0 %v3319
        %v3381 = vpop.f32.mrf.mxu0
        %v3382 = vadd.f32 0.0, %v3381
        %3383 = vmatmul.f32.gmra.mxu0 %v3320
        %v3384 = vpop.f32.mrf.mxu0
        %v3385 = vadd.f32 0.0, %v3384
        %3386 = vmatmul.f32.gmra.mxu0 %v3321
        %v3387 = vpop.f32.mrf.mxu0
        %v3388 = vadd.f32 0.0, %v3387
        %3389 = vmatmul.f32.gmra.mxu0 %v3322
        %v3390 = vpop.f32.mrf.mxu0
        %v3391 = vadd.f32 0.0, %v3390
        %3392 = vmatmul.f32.gmra.mxu0 %v3323
        %v3393 = vpop.f32.mrf.mxu0
        %v3394 = vadd.f32 0.0, %v3393
        %3395 = vmatmul.f32.gmra.mxu0 %v3324
        %v3396 = vpop.f32.mrf.mxu0
        %v3397 = vadd.f32 0.0, %v3396
        %3398 = vmatmul.f32.gmra.mxu0 %v3325
        %v3399 = vpop.f32.mrf.mxu0
        %v3400 = vadd.f32 0.0, %v3399
        %3401 = vmatmul.f32.gmra.mxu0 %v3326
        %v3402 = vpop.f32.mrf.mxu0
        %v3403 = vadd.f32 0.0, %v3402
        %3404 = vmatmul.f32.gmra.mxu0 %v3327
        %v3405 = vpop.f32.mrf.mxu0
        %v3406 = vadd.f32 0.0, %v3405
        %3407 = vmatmul.f32.gmra.mxu0 %v3328
        %v3408 = vpop.f32.mrf.mxu0
        %v3409 = vadd.f32 0.0, %v3408
        %3410 = vdwg.mxu0
        %v3411 = vadd.f32 %v3297, %v3364
        %v3412 = vadd.f32 %v3298, %v3367
        %v3413 = vadd.f32 %v3299, %v3370
        %v3414 = vadd.f32 %v3300, %v3373
        %v3415 = vadd.f32 %v3301, %v3376
        %v3416 = vadd.f32 %v3302, %v3379
        %v3417 = vadd.f32 %v3303, %v3382
        %v3418 = vadd.f32 %v3304, %v3385
        %v3419 = vadd.f32 %v3305, %v3388
        %v3420 = vadd.f32 %v3306, %v3391
        %v3421 = vadd.f32 %v3307, %v3394
        %v3422 = vadd.f32 %v3308, %v3397
        %v3423 = vadd.f32 %v3309, %v3400
        %v3424 = vadd.f32 %v3310, %v3403
        %v3425 = vadd.f32 %v3311, %v3406
        %v3426 = vadd.f32 %v3312, %v3409
        %v3428 = vperm.slane %v241, 0
        %v3430 = vadd.f32 %v3411, %v3428
        %v3431 = vadd.f32 %v3412, %v3428
        %v3432 = vadd.f32 %v3413, %v3428
        %v3433 = vadd.f32 %v3414, %v3428
        %v3434 = vadd.f32 %v3415, %v3428
        %v3435 = vadd.f32 %v3416, %v3428
        %v3436 = vadd.f32 %v3417, %v3428
        %v3437 = vadd.f32 %v3418, %v3428
        %v3438 = vadd.f32 %v3419, %v3428
        %v3439 = vadd.f32 %v3420, %v3428
        %v3440 = vadd.f32 %v3421, %v3428
        %v3441 = vadd.f32 %v3422, %v3428
        %v3442 = vadd.f32 %v3423, %v3428
        %v3443 = vadd.f32 %v3424, %v3428
        %v3444 = vadd.f32 %v3425, %v3428
        %v3445 = vadd.f32 %v3426, %v3428
        %v3446 = vld [vmem:[%s594 + $0x1] sm:$0xff]
        %v3447 = vld [vmem:[%s594 + $0x9] sm:$0xff]
        %v3448 = vld [vmem:[%s594 + $0x19] sm:$0xff]
        %v3449 = vld [vmem:[%s594 + $0x21] sm:$0xff]
        %v3450 = vld [vmem:[%s594 + $0x31] sm:$0xff]
        %v3451 = vld [vmem:[%s594 + $0x39] sm:$0xff]
        %v3452 = vld [vmem:[%s594 + $0x49] sm:$0xff]
        %v3453 = vld [vmem:[%s594 + $0x51] sm:$0xff]
        %v3454 = vld [vmem:[%s594 + $0x61] sm:$0xff]
        %v3455 = vld [vmem:[%s594 + $0x69] sm:$0xff]
        %v3456 = vld [vmem:[%s594 + $0x79] sm:$0xff]
        %v3457 = vld [vmem:[%s594 + $0x81] sm:$0xff]
        %v3458 = vld [vmem:[%s594 + $0x91] sm:$0xff]
        %v3459 = vld [vmem:[%s594 + $0x99] sm:$0xff]
        %v3460 = vld [vmem:[%s594 + $0xa9] sm:$0xff]
        %v3461 = vld [vmem:[%s594 + $0xb1] sm:$0xff]
        %v3462 = vadd.f32 %v3446, %v3430
        %v3463 = vadd.f32 %v3447, %v3431
        %v3464 = vadd.f32 %v3448, %v3432
        %v3465 = vadd.f32 %v3449, %v3433
        %v3466 = vadd.f32 %v3450, %v3434
        %v3467 = vadd.f32 %v3451, %v3435
        %v3468 = vadd.f32 %v3452, %v3436
        %v3469 = vadd.f32 %v3453, %v3437
        %v3470 = vadd.f32 %v3454, %v3438
        %v3471 = vadd.f32 %v3455, %v3439
        %v3472 = vadd.f32 %v3456, %v3440
        %v3473 = vadd.f32 %v3457, %v3441
        %v3474 = vadd.f32 %v3458, %v3442
        %v3475 = vadd.f32 %v3459, %v3443
        %v3476 = vadd.f32 %v3460, %v3444
        %v3477 = vadd.f32 %v3461, %v3445
        %3478 = vst [vmem:[%s234] sm:$0xff] %v3462
        %3479 = vst [vmem:[%s234 + $0x8] sm:$0xff] %v3463
        %3480 = vst [vmem:[%s234 + $0x10] sm:$0xff] %v3464
        %3481 = vst [vmem:[%s234 + $0x18] sm:$0xff] %v3465
        %3482 = vst [vmem:[%s234 + $0x20] sm:$0xff] %v3466
        %3483 = vst [vmem:[%s234 + $0x28] sm:$0xff] %v3467
        %3484 = vst [vmem:[%s234 + $0x30] sm:$0xff] %v3468
        %3485 = vst [vmem:[%s234 + $0x38] sm:$0xff] %v3469
        %3486 = vst [vmem:[%s234 + $0x40] sm:$0xff] %v3470
        %3487 = vst [vmem:[%s234 + $0x48] sm:$0xff] %v3471
        %3488 = vst [vmem:[%s234 + $0x50] sm:$0xff] %v3472
        %3489 = vst [vmem:[%s234 + $0x58] sm:$0xff] %v3473
        %3490 = vst [vmem:[%s234 + $0x60] sm:$0xff] %v3474
        %3491 = vst [vmem:[%s234 + $0x68] sm:$0xff] %v3475
        %3492 = vst [vmem:[%s234 + $0x70] sm:$0xff] %v3476
        %3493 = vst [vmem:[%s234 + $0x78] sm:$0xff] %v3477
        %s3494 = scalar_lea.vmem [#allocation2], 192
        %v3495 = vld [vmem:[%s3494] sm:$0xff]
        %v3496 = vld [vmem:[%s3494 + $0x8] sm:$0xff]
        %v3497 = vld [vmem:[%s3494 + $0x18] sm:$0xff]
        %v3498 = vld [vmem:[%s3494 + $0x20] sm:$0xff]
        %v3499 = vld [vmem:[%s3494 + $0x30] sm:$0xff]
        %v3500 = vld [vmem:[%s3494 + $0x38] sm:$0xff]
        %v3501 = vld [vmem:[%s3494 + $0x48] sm:$0xff]
        %v3502 = vld [vmem:[%s3494 + $0x50] sm:$0xff]
        %v3503 = vld [vmem:[%s3494 + $0x60] sm:$0xff]
        %v3504 = vld [vmem:[%s3494 + $0x68] sm:$0xff]
        %v3505 = vld [vmem:[%s3494 + $0x78] sm:$0xff]
        %v3506 = vld [vmem:[%s3494 + $0x80] sm:$0xff]
        %v3507 = vld [vmem:[%s3494 + $0x90] sm:$0xff]
        %v3508 = vld [vmem:[%s3494 + $0x98] sm:$0xff]
        %v3509 = vld [vmem:[%s3494 + $0xa8] sm:$0xff]
        %v3510 = vld [vmem:[%s3494 + $0xb0] sm:$0xff]
        %v3511 = vld [vmem:[#allocation3] sm:$0xff]
        %v3512 = vld [vmem:[#allocation3 + $0x8] sm:$0xff]
        %v3513 = vld [vmem:[#allocation3 + $0x10] sm:$0xff]
        %v3514 = vld [vmem:[#allocation3 + $0x18] sm:$0xff]
        %v3515 = vld [vmem:[#allocation3 + $0x20] sm:$0xff]
        %v3516 = vld [vmem:[#allocation3 + $0x28] sm:$0xff]
        %v3517 = vld [vmem:[#allocation3 + $0x30] sm:$0xff]
        %v3518 = vld [vmem:[#allocation3 + $0x38] sm:$0xff]
        %v3519 = vld [vmem:[#allocation3 + $0x40] sm:$0xff]
        %v3520 = vld [vmem:[#allocation3 + $0x48] sm:$0xff]
        %v3521 = vld [vmem:[#allocation3 + $0x50] sm:$0xff]
        %v3522 = vld [vmem:[#allocation3 + $0x58] sm:$0xff]
        %v3523 = vld [vmem:[#allocation3 + $0x60] sm:$0xff]
        %v3524 = vld [vmem:[#allocation3 + $0x68] sm:$0xff]
        %v3525 = vld [vmem:[#allocation3 + $0x70] sm:$0xff]
        %v3526 = vld [vmem:[#allocation3 + $0x78] sm:$0xff]
        %v3527 = vld [vmem:[%s3494 + $0x1] sm:$0xff]
        %v3528 = vld [vmem:[%s3494 + $0x9] sm:$0xff]
        %v3529 = vld [vmem:[%s3494 + $0x19] sm:$0xff]
        %v3530 = vld [vmem:[%s3494 + $0x21] sm:$0xff]
        %v3531 = vld [vmem:[%s3494 + $0x31] sm:$0xff]
        %v3532 = vld [vmem:[%s3494 + $0x39] sm:$0xff]
        %v3533 = vld [vmem:[%s3494 + $0x49] sm:$0xff]
        %v3534 = vld [vmem:[%s3494 + $0x51] sm:$0xff]
        %v3535 = vld [vmem:[%s3494 + $0x61] sm:$0xff]
        %v3536 = vld [vmem:[%s3494 + $0x69] sm:$0xff]
        %v3537 = vld [vmem:[%s3494 + $0x79] sm:$0xff]
        %v3538 = vld [vmem:[%s3494 + $0x81] sm:$0xff]
        %v3539 = vld [vmem:[%s3494 + $0x91] sm:$0xff]
        %v3540 = vld [vmem:[%s3494 + $0x99] sm:$0xff]
        %v3541 = vld [vmem:[%s3494 + $0xa9] sm:$0xff]
        %v3542 = vld [vmem:[%s3494 + $0xb1] sm:$0xff]
        %v3543 = vld [vmem:[%s2481] sm:$0xff]
        %v3544 = vld [vmem:[%s2481 + $0x8] sm:$0xff]
        %v3545 = vld [vmem:[%s2481 + $0x10] sm:$0xff]
        %v3546 = vld [vmem:[%s2481 + $0x18] sm:$0xff]
        %v3547 = vld [vmem:[%s2481 + $0x20] sm:$0xff]
        %v3548 = vld [vmem:[%s2481 + $0x28] sm:$0xff]
        %v3549 = vld [vmem:[%s2481 + $0x30] sm:$0xff]
        %v3550 = vld [vmem:[%s2481 + $0x38] sm:$0xff]
        %v3551 = vld [vmem:[%s2481 + $0x40] sm:$0xff]
        %v3552 = vld [vmem:[%s2481 + $0x48] sm:$0xff]
        %v3553 = vld [vmem:[%s2481 + $0x50] sm:$0xff]
        %v3554 = vld [vmem:[%s2481 + $0x58] sm:$0xff]
        %v3555 = vld [vmem:[%s2481 + $0x60] sm:$0xff]
        %v3556 = vld [vmem:[%s2481 + $0x68] sm:$0xff]
        %v3557 = vld [vmem:[%s2481 + $0x70] sm:$0xff]
        %v3558 = vld [vmem:[%s2481 + $0x78] sm:$0xff]
        %3559 = vmatpush.msra.mxu0 %v3558
        %3560 = vmatpush.msra.mxu0 %v3557
        %3561 = vmatpush.msra.mxu0 %v3556
        %3562 = vmatpush.msra.mxu0 %v3555
        %3563 = vmatpush.msra.mxu0 %v3554
        %3564 = vmatpush.msra.mxu0 %v3553
        %3565 = vmatpush.msra.mxu0 %v3552
        %3566 = vmatpush.msra.mxu0 %v3551
        %3567 = vmatpush.msra.mxu0 %v3550
        %3568 = vmatpush.msra.mxu0 %v3549
        %3569 = vmatpush.msra.mxu0 %v3548
        %3570 = vmatpush.msra.mxu0 %v3547
        %3571 = vmatpush.msra.mxu0 %v3546
        %3572 = vmatpush.msra.mxu0 %v3545
        %3573 = vmatpush.msra.mxu0 %v3544
        %3574 = vmatpush.msra.mxu0 %v3543
        %3575 = vmatmul.f32.gmra.mxu0 %v3527
        %v3576 = vpop.f32.mrf.mxu0
        %v3577 = vadd.f32 0.0, %v3576
        %3578 = vmatmul.f32.gmra.mxu0 %v3528
        %v3579 = vpop.f32.mrf.mxu0
        %v3580 = vadd.f32 0.0, %v3579
        %3581 = vmatmul.f32.gmra.mxu0 %v3529
        %v3582 = vpop.f32.mrf.mxu0
        %v3583 = vadd.f32 0.0, %v3582
        %3584 = vmatmul.f32.gmra.mxu0 %v3530
        %v3585 = vpop.f32.mrf.mxu0
        %v3586 = vadd.f32 0.0, %v3585
        %3587 = vmatmul.f32.gmra.mxu0 %v3531
        %v3588 = vpop.f32.mrf.mxu0
        %v3589 = vadd.f32 0.0, %v3588
        %3590 = vmatmul.f32.gmra.mxu0 %v3532
        %v3591 = vpop.f32.mrf.mxu0
        %v3592 = vadd.f32 0.0, %v3591
        %3593 = vmatmul.f32.gmra.mxu0 %v3533
        %v3594 = vpop.f32.mrf.mxu0
        %v3595 = vadd.f32 0.0, %v3594
        %3596 = vmatmul.f32.gmra.mxu0 %v3534
        %v3597 = vpop.f32.mrf.mxu0
        %v3598 = vadd.f32 0.0, %v3597
        %3599 = vmatmul.f32.gmra.mxu0 %v3535
        %v3600 = vpop.f32.mrf.mxu0
        %v3601 = vadd.f32 0.0, %v3600
        %3602 = vmatmul.f32.gmra.mxu0 %v3536
        %v3603 = vpop.f32.mrf.mxu0
        %v3604 = vadd.f32 0.0, %v3603
        %3605 = vmatmul.f32.gmra.mxu0 %v3537
        %v3606 = vpop.f32.mrf.mxu0
        %v3607 = vadd.f32 0.0, %v3606
        %3608 = vmatmul.f32.gmra.mxu0 %v3538
        %v3609 = vpop.f32.mrf.mxu0
        %v3610 = vadd.f32 0.0, %v3609
        %3611 = vmatmul.f32.gmra.mxu0 %v3539
        %v3612 = vpop.f32.mrf.mxu0
        %v3613 = vadd.f32 0.0, %v3612
        %3614 = vmatmul.f32.gmra.mxu0 %v3540
        %v3615 = vpop.f32.mrf.mxu0
        %v3616 = vadd.f32 0.0, %v3615
        %3617 = vmatmul.f32.gmra.mxu0 %v3541
        %v3618 = vpop.f32.mrf.mxu0
        %v3619 = vadd.f32 0.0, %v3618
        %3620 = vmatmul.f32.gmra.mxu0 %v3542
        %v3621 = vpop.f32.mrf.mxu0
        %v3622 = vadd.f32 0.0, %v3621
        %3623 = vdwg.mxu0
        %3624 = vmatpush.msra.mxu0 %v3526
        %3625 = vmatpush.msra.mxu0 %v3525
        %3626 = vmatpush.msra.mxu0 %v3524
        %3627 = vmatpush.msra.mxu0 %v3523
        %3628 = vmatpush.msra.mxu0 %v3522
        %3629 = vmatpush.msra.mxu0 %v3521
        %3630 = vmatpush.msra.mxu0 %v3520
        %3631 = vmatpush.msra.mxu0 %v3519
        %3632 = vmatpush.msra.mxu0 %v3518
        %3633 = vmatpush.msra.mxu0 %v3517
        %3634 = vmatpush.msra.mxu0 %v3516
        %3635 = vmatpush.msra.mxu0 %v3515
        %3636 = vmatpush.msra.mxu0 %v3514
        %3637 = vmatpush.msra.mxu0 %v3513
        %3638 = vmatpush.msra.mxu0 %v3512
        %3639 = vmatpush.msra.mxu0 %v3511
        %3640 = vmatmul.f32.gmra.mxu0 %v3495
        %v3641 = vpop.f32.mrf.mxu0
        %v3642 = vadd.f32 %v3577, %v3641
        %3643 = vmatmul.f32.gmra.mxu0 %v3496
        %v3644 = vpop.f32.mrf.mxu0
        %v3645 = vadd.f32 %v3580, %v3644
        %3646 = vmatmul.f32.gmra.mxu0 %v3497
        %v3647 = vpop.f32.mrf.mxu0
        %v3648 = vadd.f32 %v3583, %v3647
        %3649 = vmatmul.f32.gmra.mxu0 %v3498
        %v3650 = vpop.f32.mrf.mxu0
        %v3651 = vadd.f32 %v3586, %v3650
        %3652 = vmatmul.f32.gmra.mxu0 %v3499
        %v3653 = vpop.f32.mrf.mxu0
        %v3654 = vadd.f32 %v3589, %v3653
        %3655 = vmatmul.f32.gmra.mxu0 %v3500
        %v3656 = vpop.f32.mrf.mxu0
        %v3657 = vadd.f32 %v3592, %v3656
        %3658 = vmatmul.f32.gmra.mxu0 %v3501
        %v3659 = vpop.f32.mrf.mxu0
        %v3660 = vadd.f32 %v3595, %v3659
        %3661 = vmatmul.f32.gmra.mxu0 %v3502
        %v3662 = vpop.f32.mrf.mxu0
        %v3663 = vadd.f32 %v3598, %v3662
        %3664 = vmatmul.f32.gmra.mxu0 %v3503
        %v3665 = vpop.f32.mrf.mxu0
        %v3666 = vadd.f32 %v3601, %v3665
        %3667 = vmatmul.f32.gmra.mxu0 %v3504
        %v3668 = vpop.f32.mrf.mxu0
        %v3669 = vadd.f32 %v3604, %v3668
        %3670 = vmatmul.f32.gmra.mxu0 %v3505
        %v3671 = vpop.f32.mrf.mxu0
        %v3672 = vadd.f32 %v3607, %v3671
        %3673 = vmatmul.f32.gmra.mxu0 %v3506
        %v3674 = vpop.f32.mrf.mxu0
        %v3675 = vadd.f32 %v3610, %v3674
        %3676 = vmatmul.f32.gmra.mxu0 %v3507
        %v3677 = vpop.f32.mrf.mxu0
        %v3678 = vadd.f32 %v3613, %v3677
        %3679 = vmatmul.f32.gmra.mxu0 %v3508
        %v3680 = vpop.f32.mrf.mxu0
        %v3681 = vadd.f32 %v3616, %v3680
        %3682 = vmatmul.f32.gmra.mxu0 %v3509
        %v3683 = vpop.f32.mrf.mxu0
        %v3684 = vadd.f32 %v3619, %v3683
        %3685 = vmatmul.f32.gmra.mxu0 %v3510
        %v3686 = vpop.f32.mrf.mxu0
        %v3687 = vadd.f32 %v3622, %v3686
        %3688 = vdwg.mxu0
        %v3689 = vld [vmem:[%s3494 + $0x2] sm:$0xff]
        %v3690 = vld [vmem:[%s3494 + $0xa] sm:$0xff]
        %v3691 = vld [vmem:[%s3494 + $0x1a] sm:$0xff]
        %v3692 = vld [vmem:[%s3494 + $0x22] sm:$0xff]
        %v3693 = vld [vmem:[%s3494 + $0x32] sm:$0xff]
        %v3694 = vld [vmem:[%s3494 + $0x3a] sm:$0xff]
        %v3695 = vld [vmem:[%s3494 + $0x4a] sm:$0xff]
        %v3696 = vld [vmem:[%s3494 + $0x52] sm:$0xff]
        %v3697 = vld [vmem:[%s3494 + $0x62] sm:$0xff]
        %v3698 = vld [vmem:[%s3494 + $0x6a] sm:$0xff]
        %v3699 = vld [vmem:[%s3494 + $0x7a] sm:$0xff]
        %v3700 = vld [vmem:[%s3494 + $0x82] sm:$0xff]
        %v3701 = vld [vmem:[%s3494 + $0x92] sm:$0xff]
        %v3702 = vld [vmem:[%s3494 + $0x9a] sm:$0xff]
        %v3703 = vld [vmem:[%s3494 + $0xaa] sm:$0xff]
        %v3704 = vld [vmem:[%s3494 + $0xb2] sm:$0xff]
        %v3705 = vld [vmem:[%s2644] sm:$0xff]
        %v3706 = vld [vmem:[%s2644 + $0x8] sm:$0xff]
        %v3707 = vld [vmem:[%s2644 + $0x10] sm:$0xff]
        %v3708 = vld [vmem:[%s2644 + $0x18] sm:$0xff]
        %v3709 = vld [vmem:[%s2644 + $0x20] sm:$0xff]
        %v3710 = vld [vmem:[%s2644 + $0x28] sm:$0xff]
        %v3711 = vld [vmem:[%s2644 + $0x30] sm:$0xff]
        %v3712 = vld [vmem:[%s2644 + $0x38] sm:$0xff]
        %v3713 = vld [vmem:[%s2644 + $0x40] sm:$0xff]
        %v3714 = vld [vmem:[%s2644 + $0x48] sm:$0xff]
        %v3715 = vld [vmem:[%s2644 + $0x50] sm:$0xff]
        %v3716 = vld [vmem:[%s2644 + $0x58] sm:$0xff]
        %v3717 = vld [vmem:[%s2644 + $0x60] sm:$0xff]
        %v3718 = vld [vmem:[%s2644 + $0x68] sm:$0xff]
        %v3719 = vld [vmem:[%s2644 + $0x70] sm:$0xff]
        %v3720 = vld [vmem:[%s2644 + $0x78] sm:$0xff]
        %3721 = vmatpush.msra.mxu0 %v3720
        %3722 = vmatpush.msra.mxu0 %v3719
        %3723 = vmatpush.msra.mxu0 %v3718
        %3724 = vmatpush.msra.mxu0 %v3717
        %3725 = vmatpush.msra.mxu0 %v3716
        %3726 = vmatpush.msra.mxu0 %v3715
        %3727 = vmatpush.msra.mxu0 %v3714
        %3728 = vmatpush.msra.mxu0 %v3713
        %3729 = vmatpush.msra.mxu0 %v3712
        %3730 = vmatpush.msra.mxu0 %v3711
        %3731 = vmatpush.msra.mxu0 %v3710
        %3732 = vmatpush.msra.mxu0 %v3709
        %3733 = vmatpush.msra.mxu0 %v3708
        %3734 = vmatpush.msra.mxu0 %v3707
        %3735 = vmatpush.msra.mxu0 %v3706
        %3736 = vmatpush.msra.mxu0 %v3705
        %3737 = vmatmul.f32.gmra.mxu0 %v3689
        %v3738 = vpop.f32.mrf.mxu0
        %v3739 = vadd.f32 0.0, %v3738
        %3740 = vmatmul.f32.gmra.mxu0 %v3690
        %v3741 = vpop.f32.mrf.mxu0
        %v3742 = vadd.f32 0.0, %v3741
        %3743 = vmatmul.f32.gmra.mxu0 %v3691
        %v3744 = vpop.f32.mrf.mxu0
        %v3745 = vadd.f32 0.0, %v3744
        %3746 = vmatmul.f32.gmra.mxu0 %v3692
        %v3747 = vpop.f32.mrf.mxu0
        %v3748 = vadd.f32 0.0, %v3747
        %3749 = vmatmul.f32.gmra.mxu0 %v3693
        %v3750 = vpop.f32.mrf.mxu0
        %v3751 = vadd.f32 0.0, %v3750
        %3752 = vmatmul.f32.gmra.mxu0 %v3694
        %v3753 = vpop.f32.mrf.mxu0
        %v3754 = vadd.f32 0.0, %v3753
        %3755 = vmatmul.f32.gmra.mxu0 %v3695
        %v3756 = vpop.f32.mrf.mxu0
        %v3757 = vadd.f32 0.0, %v3756
        %3758 = vmatmul.f32.gmra.mxu0 %v3696
        %v3759 = vpop.f32.mrf.mxu0
        %v3760 = vadd.f32 0.0, %v3759
        %3761 = vmatmul.f32.gmra.mxu0 %v3697
        %v3762 = vpop.f32.mrf.mxu0
        %v3763 = vadd.f32 0.0, %v3762
        %3764 = vmatmul.f32.gmra.mxu0 %v3698
        %v3765 = vpop.f32.mrf.mxu0
        %v3766 = vadd.f32 0.0, %v3765
        %3767 = vmatmul.f32.gmra.mxu0 %v3699
        %v3768 = vpop.f32.mrf.mxu0
        %v3769 = vadd.f32 0.0, %v3768
        %3770 = vmatmul.f32.gmra.mxu0 %v3700
        %v3771 = vpop.f32.mrf.mxu0
        %v3772 = vadd.f32 0.0, %v3771
        %3773 = vmatmul.f32.gmra.mxu0 %v3701
        %v3774 = vpop.f32.mrf.mxu0
        %v3775 = vadd.f32 0.0, %v3774
        %3776 = vmatmul.f32.gmra.mxu0 %v3702
        %v3777 = vpop.f32.mrf.mxu0
        %v3778 = vadd.f32 0.0, %v3777
        %3779 = vmatmul.f32.gmra.mxu0 %v3703
        %v3780 = vpop.f32.mrf.mxu0
        %v3781 = vadd.f32 0.0, %v3780
        %3782 = vmatmul.f32.gmra.mxu0 %v3704
        %v3783 = vpop.f32.mrf.mxu0
        %v3784 = vadd.f32 0.0, %v3783
        %3785 = vdwg.mxu0
        %v3786 = vadd.f32 %v3642, %v3739
        %v3787 = vadd.f32 %v3645, %v3742
        %v3788 = vadd.f32 %v3648, %v3745
        %v3789 = vadd.f32 %v3651, %v3748
        %v3790 = vadd.f32 %v3654, %v3751
        %v3791 = vadd.f32 %v3657, %v3754
        %v3792 = vadd.f32 %v3660, %v3757
        %v3793 = vadd.f32 %v3663, %v3760
        %v3794 = vadd.f32 %v3666, %v3763
        %v3795 = vadd.f32 %v3669, %v3766
        %v3796 = vadd.f32 %v3672, %v3769
        %v3797 = vadd.f32 %v3675, %v3772
        %v3798 = vadd.f32 %v3678, %v3775
        %v3799 = vadd.f32 %v3681, %v3778
        %v3800 = vadd.f32 %v3684, %v3781
        %v3801 = vadd.f32 %v3687, %v3784
        %v3802 = vld [vmem:[%s2416] sm:$0xff]
        %v3803 = vld [vmem:[%s2416 + $0x8] sm:$0xff]
        %v3804 = vld [vmem:[%s2416 + $0x18] sm:$0xff]
        %v3805 = vld [vmem:[%s2416 + $0x20] sm:$0xff]
        %v3806 = vld [vmem:[%s2416 + $0x30] sm:$0xff]
        %v3807 = vld [vmem:[%s2416 + $0x38] sm:$0xff]
        %v3808 = vld [vmem:[%s2416 + $0x48] sm:$0xff]
        %v3809 = vld [vmem:[%s2416 + $0x50] sm:$0xff]
        %v3810 = vld [vmem:[%s2416 + $0x60] sm:$0xff]
        %v3811 = vld [vmem:[%s2416 + $0x68] sm:$0xff]
        %v3812 = vld [vmem:[%s2416 + $0x78] sm:$0xff]
        %v3813 = vld [vmem:[%s2416 + $0x80] sm:$0xff]
        %v3814 = vld [vmem:[%s2416 + $0x90] sm:$0xff]
        %v3815 = vld [vmem:[%s2416 + $0x98] sm:$0xff]
        %v3816 = vld [vmem:[%s2416 + $0xa8] sm:$0xff]
        %v3817 = vld [vmem:[%s2416 + $0xb0] sm:$0xff]
        %v3818 = vld [vmem:[%s2758] sm:$0xff]
        %v3819 = vld [vmem:[%s2758 + $0x8] sm:$0xff]
        %v3820 = vld [vmem:[%s2758 + $0x10] sm:$0xff]
        %v3821 = vld [vmem:[%s2758 + $0x18] sm:$0xff]
        %v3822 = vld [vmem:[%s2758 + $0x20] sm:$0xff]
        %v3823 = vld [vmem:[%s2758 + $0x28] sm:$0xff]
        %v3824 = vld [vmem:[%s2758 + $0x30] sm:$0xff]
        %v3825 = vld [vmem:[%s2758 + $0x38] sm:$0xff]
        %v3826 = vld [vmem:[%s2758 + $0x40] sm:$0xff]
        %v3827 = vld [vmem:[%s2758 + $0x48] sm:$0xff]
        %v3828 = vld [vmem:[%s2758 + $0x50] sm:$0xff]
        %v3829 = vld [vmem:[%s2758 + $0x58] sm:$0xff]
        %v3830 = vld [vmem:[%s2758 + $0x60] sm:$0xff]
        %v3831 = vld [vmem:[%s2758 + $0x68] sm:$0xff]
        %v3832 = vld [vmem:[%s2758 + $0x70] sm:$0xff]
        %v3833 = vld [vmem:[%s2758 + $0x78] sm:$0xff]
        %3834 = vmatpush.msra.mxu0 %v3833
        %3835 = vmatpush.msra.mxu0 %v3832
        %3836 = vmatpush.msra.mxu0 %v3831
        %3837 = vmatpush.msra.mxu0 %v3830
        %3838 = vmatpush.msra.mxu0 %v3829
        %3839 = vmatpush.msra.mxu0 %v3828
        %3840 = vmatpush.msra.mxu0 %v3827
        %3841 = vmatpush.msra.mxu0 %v3826
        %3842 = vmatpush.msra.mxu0 %v3825
        %3843 = vmatpush.msra.mxu0 %v3824
        %3844 = vmatpush.msra.mxu0 %v3823
        %3845 = vmatpush.msra.mxu0 %v3822
        %3846 = vmatpush.msra.mxu0 %v3821
        %3847 = vmatpush.msra.mxu0 %v3820
        %3848 = vmatpush.msra.mxu0 %v3819
        %3849 = vmatpush.msra.mxu0 %v3818
        %3850 = vmatmul.f32.gmra.mxu0 %v3802
        %v3851 = vpop.f32.mrf.mxu0
        %v3852 = vadd.f32 0.0, %v3851
        %3853 = vmatmul.f32.gmra.mxu0 %v3803
        %v3854 = vpop.f32.mrf.mxu0
        %v3855 = vadd.f32 0.0, %v3854
        %3856 = vmatmul.f32.gmra.mxu0 %v3804
        %v3857 = vpop.f32.mrf.mxu0
        %v3858 = vadd.f32 0.0, %v3857
        %3859 = vmatmul.f32.gmra.mxu0 %v3805
        %v3860 = vpop.f32.mrf.mxu0
        %v3861 = vadd.f32 0.0, %v3860
        %3862 = vmatmul.f32.gmra.mxu0 %v3806
        %v3863 = vpop.f32.mrf.mxu0
        %v3864 = vadd.f32 0.0, %v3863
        %3865 = vmatmul.f32.gmra.mxu0 %v3807
        %v3866 = vpop.f32.mrf.mxu0
        %v3867 = vadd.f32 0.0, %v3866
        %3868 = vmatmul.f32.gmra.mxu0 %v3808
        %v3869 = vpop.f32.mrf.mxu0
        %v3870 = vadd.f32 0.0, %v3869
        %3871 = vmatmul.f32.gmra.mxu0 %v3809
        %v3872 = vpop.f32.mrf.mxu0
        %v3873 = vadd.f32 0.0, %v3872
        %3874 = vmatmul.f32.gmra.mxu0 %v3810
        %v3875 = vpop.f32.mrf.mxu0
        %v3876 = vadd.f32 0.0, %v3875
        %3877 = vmatmul.f32.gmra.mxu0 %v3811
        %v3878 = vpop.f32.mrf.mxu0
        %v3879 = vadd.f32 0.0, %v3878
        %3880 = vmatmul.f32.gmra.mxu0 %v3812
        %v3881 = vpop.f32.mrf.mxu0
        %v3882 = vadd.f32 0.0, %v3881
        %3883 = vmatmul.f32.gmra.mxu0 %v3813
        %v3884 = vpop.f32.mrf.mxu0
        %v3885 = vadd.f32 0.0, %v3884
        %3886 = vmatmul.f32.gmra.mxu0 %v3814
        %v3887 = vpop.f32.mrf.mxu0
        %v3888 = vadd.f32 0.0, %v3887
        %3889 = vmatmul.f32.gmra.mxu0 %v3815
        %v3890 = vpop.f32.mrf.mxu0
        %v3891 = vadd.f32 0.0, %v3890
        %3892 = vmatmul.f32.gmra.mxu0 %v3816
        %v3893 = vpop.f32.mrf.mxu0
        %v3894 = vadd.f32 0.0, %v3893
        %3895 = vmatmul.f32.gmra.mxu0 %v3817
        %v3896 = vpop.f32.mrf.mxu0
        %v3897 = vadd.f32 0.0, %v3896
        %3898 = vdwg.mxu0
        %v3899 = vadd.f32 %v3786, %v3852
        %v3900 = vadd.f32 %v3787, %v3855
        %v3901 = vadd.f32 %v3788, %v3858
        %v3902 = vadd.f32 %v3789, %v3861
        %v3903 = vadd.f32 %v3790, %v3864
        %v3904 = vadd.f32 %v3791, %v3867
        %v3905 = vadd.f32 %v3792, %v3870
        %v3906 = vadd.f32 %v3793, %v3873
        %v3907 = vadd.f32 %v3794, %v3876
        %v3908 = vadd.f32 %v3795, %v3879
        %v3909 = vadd.f32 %v3796, %v3882
        %v3910 = vadd.f32 %v3797, %v3885
        %v3911 = vadd.f32 %v3798, %v3888
        %v3912 = vadd.f32 %v3799, %v3891
        %v3913 = vadd.f32 %v3800, %v3894
        %v3914 = vadd.f32 %v3801, %v3897
        %v3915 = vld [vmem:[%s2416 + $0x1] sm:$0xff]
        %v3916 = vld [vmem:[%s2416 + $0x9] sm:$0xff]
        %v3917 = vld [vmem:[%s2416 + $0x19] sm:$0xff]
        %v3918 = vld [vmem:[%s2416 + $0x21] sm:$0xff]
        %v3919 = vld [vmem:[%s2416 + $0x31] sm:$0xff]
        %v3920 = vld [vmem:[%s2416 + $0x39] sm:$0xff]
        %v3921 = vld [vmem:[%s2416 + $0x49] sm:$0xff]
        %v3922 = vld [vmem:[%s2416 + $0x51] sm:$0xff]
        %v3923 = vld [vmem:[%s2416 + $0x61] sm:$0xff]
        %v3924 = vld [vmem:[%s2416 + $0x69] sm:$0xff]
        %v3925 = vld [vmem:[%s2416 + $0x79] sm:$0xff]
        %v3926 = vld [vmem:[%s2416 + $0x81] sm:$0xff]
        %v3927 = vld [vmem:[%s2416 + $0x91] sm:$0xff]
        %v3928 = vld [vmem:[%s2416 + $0x99] sm:$0xff]
        %v3929 = vld [vmem:[%s2416 + $0xa9] sm:$0xff]
        %v3930 = vld [vmem:[%s2416 + $0xb1] sm:$0xff]
        %v3931 = vld [vmem:[%s2872] sm:$0xff]
        %v3932 = vld [vmem:[%s2872 + $0x8] sm:$0xff]
        %v3933 = vld [vmem:[%s2872 + $0x10] sm:$0xff]
        %v3934 = vld [vmem:[%s2872 + $0x18] sm:$0xff]
        %v3935 = vld [vmem:[%s2872 + $0x20] sm:$0xff]
        %v3936 = vld [vmem:[%s2872 + $0x28] sm:$0xff]
        %v3937 = vld [vmem:[%s2872 + $0x30] sm:$0xff]
        %v3938 = vld [vmem:[%s2872 + $0x38] sm:$0xff]
        %v3939 = vld [vmem:[%s2872 + $0x40] sm:$0xff]
        %v3940 = vld [vmem:[%s2872 + $0x48] sm:$0xff]
        %v3941 = vld [vmem:[%s2872 + $0x50] sm:$0xff]
        %v3942 = vld [vmem:[%s2872 + $0x58] sm:$0xff]
        %v3943 = vld [vmem:[%s2872 + $0x60] sm:$0xff]
        %v3944 = vld [vmem:[%s2872 + $0x68] sm:$0xff]
        %v3945 = vld [vmem:[%s2872 + $0x70] sm:$0xff]
        %v3946 = vld [vmem:[%s2872 + $0x78] sm:$0xff]
        %3947 = vmatpush.msra.mxu0 %v3946
        %3948 = vmatpush.msra.mxu0 %v3945
        %3949 = vmatpush.msra.mxu0 %v3944
        %3950 = vmatpush.msra.mxu0 %v3943
        %3951 = vmatpush.msra.mxu0 %v3942
        %3952 = vmatpush.msra.mxu0 %v3941
        %3953 = vmatpush.msra.mxu0 %v3940
        %3954 = vmatpush.msra.mxu0 %v3939
        %3955 = vmatpush.msra.mxu0 %v3938
        %3956 = vmatpush.msra.mxu0 %v3937
        %3957 = vmatpush.msra.mxu0 %v3936
        %3958 = vmatpush.msra.mxu0 %v3935
        %3959 = vmatpush.msra.mxu0 %v3934
        %3960 = vmatpush.msra.mxu0 %v3933
        %3961 = vmatpush.msra.mxu0 %v3932
        %3962 = vmatpush.msra.mxu0 %v3931
        %3963 = vmatmul.f32.gmra.mxu0 %v3915
        %v3964 = vpop.f32.mrf.mxu0
        %v3965 = vadd.f32 0.0, %v3964
        %3966 = vmatmul.f32.gmra.mxu0 %v3916
        %v3967 = vpop.f32.mrf.mxu0
        %v3968 = vadd.f32 0.0, %v3967
        %3969 = vmatmul.f32.gmra.mxu0 %v3917
        %v3970 = vpop.f32.mrf.mxu0
        %v3971 = vadd.f32 0.0, %v3970
        %3972 = vmatmul.f32.gmra.mxu0 %v3918
        %v3973 = vpop.f32.mrf.mxu0
        %v3974 = vadd.f32 0.0, %v3973
        %3975 = vmatmul.f32.gmra.mxu0 %v3919
        %v3976 = vpop.f32.mrf.mxu0
        %v3977 = vadd.f32 0.0, %v3976
        %3978 = vmatmul.f32.gmra.mxu0 %v3920
        %v3979 = vpop.f32.mrf.mxu0
        %v3980 = vadd.f32 0.0, %v3979
        %3981 = vmatmul.f32.gmra.mxu0 %v3921
        %v3982 = vpop.f32.mrf.mxu0
        %v3983 = vadd.f32 0.0, %v3982
        %3984 = vmatmul.f32.gmra.mxu0 %v3922
        %v3985 = vpop.f32.mrf.mxu0
        %v3986 = vadd.f32 0.0, %v3985
        %3987 = vmatmul.f32.gmra.mxu0 %v3923
        %v3988 = vpop.f32.mrf.mxu0
        %v3989 = vadd.f32 0.0, %v3988
        %3990 = vmatmul.f32.gmra.mxu0 %v3924
        %v3991 = vpop.f32.mrf.mxu0
        %v3992 = vadd.f32 0.0, %v3991
        %3993 = vmatmul.f32.gmra.mxu0 %v3925
        %v3994 = vpop.f32.mrf.mxu0
        %v3995 = vadd.f32 0.0, %v3994
        %3996 = vmatmul.f32.gmra.mxu0 %v3926
        %v3997 = vpop.f32.mrf.mxu0
        %v3998 = vadd.f32 0.0, %v3997
        %3999 = vmatmul.f32.gmra.mxu0 %v3927
        %v4000 = vpop.f32.mrf.mxu0
        %v4001 = vadd.f32 0.0, %v4000
        %4002 = vmatmul.f32.gmra.mxu0 %v3928
        %v4003 = vpop.f32.mrf.mxu0
        %v4004 = vadd.f32 0.0, %v4003
        %4005 = vmatmul.f32.gmra.mxu0 %v3929
        %v4006 = vpop.f32.mrf.mxu0
        %v4007 = vadd.f32 0.0, %v4006
        %4008 = vmatmul.f32.gmra.mxu0 %v3930
        %v4009 = vpop.f32.mrf.mxu0
        %v4010 = vadd.f32 0.0, %v4009
        %4011 = vdwg.mxu0
        %v4012 = vadd.f32 %v3899, %v3965
        %v4013 = vadd.f32 %v3900, %v3968
        %v4014 = vadd.f32 %v3901, %v3971
        %v4015 = vadd.f32 %v3902, %v3974
        %v4016 = vadd.f32 %v3903, %v3977
        %v4017 = vadd.f32 %v3904, %v3980
        %v4018 = vadd.f32 %v3905, %v3983
        %v4019 = vadd.f32 %v3906, %v3986
        %v4020 = vadd.f32 %v3907, %v3989
        %v4021 = vadd.f32 %v3908, %v3992
        %v4022 = vadd.f32 %v3909, %v3995
        %v4023 = vadd.f32 %v3910, %v3998
        %v4024 = vadd.f32 %v3911, %v4001
        %v4025 = vadd.f32 %v3912, %v4004
        %v4026 = vadd.f32 %v3913, %v4007
        %v4027 = vadd.f32 %v3914, %v4010
        %v4028 = vld [vmem:[%s2416 + $0x2] sm:$0xff]
        %v4029 = vld [vmem:[%s2416 + $0xa] sm:$0xff]
        %v4030 = vld [vmem:[%s2416 + $0x1a] sm:$0xff]
        %v4031 = vld [vmem:[%s2416 + $0x22] sm:$0xff]
        %v4032 = vld [vmem:[%s2416 + $0x32] sm:$0xff]
        %v4033 = vld [vmem:[%s2416 + $0x3a] sm:$0xff]
        %v4034 = vld [vmem:[%s2416 + $0x4a] sm:$0xff]
        %v4035 = vld [vmem:[%s2416 + $0x52] sm:$0xff]
        %v4036 = vld [vmem:[%s2416 + $0x62] sm:$0xff]
        %v4037 = vld [vmem:[%s2416 + $0x6a] sm:$0xff]
        %v4038 = vld [vmem:[%s2416 + $0x7a] sm:$0xff]
        %v4039 = vld [vmem:[%s2416 + $0x82] sm:$0xff]
        %v4040 = vld [vmem:[%s2416 + $0x92] sm:$0xff]
        %v4041 = vld [vmem:[%s2416 + $0x9a] sm:$0xff]
        %v4042 = vld [vmem:[%s2416 + $0xaa] sm:$0xff]
        %v4043 = vld [vmem:[%s2416 + $0xb2] sm:$0xff]
        %v4044 = vld [vmem:[%s2986] sm:$0xff]
        %v4045 = vld [vmem:[%s2986 + $0x8] sm:$0xff]
        %v4046 = vld [vmem:[%s2986 + $0x10] sm:$0xff]
        %v4047 = vld [vmem:[%s2986 + $0x18] sm:$0xff]
        %v4048 = vld [vmem:[%s2986 + $0x20] sm:$0xff]
        %v4049 = vld [vmem:[%s2986 + $0x28] sm:$0xff]
        %v4050 = vld [vmem:[%s2986 + $0x30] sm:$0xff]
        %v4051 = vld [vmem:[%s2986 + $0x38] sm:$0xff]
        %v4052 = vld [vmem:[%s2986 + $0x40] sm:$0xff]
        %v4053 = vld [vmem:[%s2986 + $0x48] sm:$0xff]
        %v4054 = vld [vmem:[%s2986 + $0x50] sm:$0xff]
        %v4055 = vld [vmem:[%s2986 + $0x58] sm:$0xff]
        %v4056 = vld [vmem:[%s2986 + $0x60] sm:$0xff]
        %v4057 = vld [vmem:[%s2986 + $0x68] sm:$0xff]
        %v4058 = vld [vmem:[%s2986 + $0x70] sm:$0xff]
        %v4059 = vld [vmem:[%s2986 + $0x78] sm:$0xff]
        %4060 = vmatpush.msra.mxu0 %v4059
        %4061 = vmatpush.msra.mxu0 %v4058
        %4062 = vmatpush.msra.mxu0 %v4057
        %4063 = vmatpush.msra.mxu0 %v4056
        %4064 = vmatpush.msra.mxu0 %v4055
        %4065 = vmatpush.msra.mxu0 %v4054
        %4066 = vmatpush.msra.mxu0 %v4053
        %4067 = vmatpush.msra.mxu0 %v4052
        %4068 = vmatpush.msra.mxu0 %v4051
        %4069 = vmatpush.msra.mxu0 %v4050
        %4070 = vmatpush.msra.mxu0 %v4049
        %4071 = vmatpush.msra.mxu0 %v4048
        %4072 = vmatpush.msra.mxu0 %v4047
        %4073 = vmatpush.msra.mxu0 %v4046
        %4074 = vmatpush.msra.mxu0 %v4045
        %4075 = vmatpush.msra.mxu0 %v4044
        %4076 = vmatmul.f32.gmra.mxu0 %v4028
        %v4077 = vpop.f32.mrf.mxu0
        %v4078 = vadd.f32 0.0, %v4077
        %4079 = vmatmul.f32.gmra.mxu0 %v4029
        %v4080 = vpop.f32.mrf.mxu0
        %v4081 = vadd.f32 0.0, %v4080
        %4082 = vmatmul.f32.gmra.mxu0 %v4030
        %v4083 = vpop.f32.mrf.mxu0
        %v4084 = vadd.f32 0.0, %v4083
        %4085 = vmatmul.f32.gmra.mxu0 %v4031
        %v4086 = vpop.f32.mrf.mxu0
        %v4087 = vadd.f32 0.0, %v4086
        %4088 = vmatmul.f32.gmra.mxu0 %v4032
        %v4089 = vpop.f32.mrf.mxu0
        %v4090 = vadd.f32 0.0, %v4089
        %4091 = vmatmul.f32.gmra.mxu0 %v4033
        %v4092 = vpop.f32.mrf.mxu0
        %v4093 = vadd.f32 0.0, %v4092
        %4094 = vmatmul.f32.gmra.mxu0 %v4034
        %v4095 = vpop.f32.mrf.mxu0
        %v4096 = vadd.f32 0.0, %v4095
        %4097 = vmatmul.f32.gmra.mxu0 %v4035
        %v4098 = vpop.f32.mrf.mxu0
        %v4099 = vadd.f32 0.0, %v4098
        %4100 = vmatmul.f32.gmra.mxu0 %v4036
        %v4101 = vpop.f32.mrf.mxu0
        %v4102 = vadd.f32 0.0, %v4101
        %4103 = vmatmul.f32.gmra.mxu0 %v4037
        %v4104 = vpop.f32.mrf.mxu0
        %v4105 = vadd.f32 0.0, %v4104
        %4106 = vmatmul.f32.gmra.mxu0 %v4038
        %v4107 = vpop.f32.mrf.mxu0
        %v4108 = vadd.f32 0.0, %v4107
        %4109 = vmatmul.f32.gmra.mxu0 %v4039
        %v4110 = vpop.f32.mrf.mxu0
        %v4111 = vadd.f32 0.0, %v4110
        %4112 = vmatmul.f32.gmra.mxu0 %v4040
        %v4113 = vpop.f32.mrf.mxu0
        %v4114 = vadd.f32 0.0, %v4113
        %4115 = vmatmul.f32.gmra.mxu0 %v4041
        %v4116 = vpop.f32.mrf.mxu0
        %v4117 = vadd.f32 0.0, %v4116
        %4118 = vmatmul.f32.gmra.mxu0 %v4042
        %v4119 = vpop.f32.mrf.mxu0
        %v4120 = vadd.f32 0.0, %v4119
        %4121 = vmatmul.f32.gmra.mxu0 %v4043
        %v4122 = vpop.f32.mrf.mxu0
        %v4123 = vadd.f32 0.0, %v4122
        %4124 = vdwg.mxu0
        %v4125 = vadd.f32 %v4012, %v4078
        %v4126 = vadd.f32 %v4013, %v4081
        %v4127 = vadd.f32 %v4014, %v4084
        %v4128 = vadd.f32 %v4015, %v4087
        %v4129 = vadd.f32 %v4016, %v4090
        %v4130 = vadd.f32 %v4017, %v4093
        %v4131 = vadd.f32 %v4018, %v4096
        %v4132 = vadd.f32 %v4019, %v4099
        %v4133 = vadd.f32 %v4020, %v4102
        %v4134 = vadd.f32 %v4021, %v4105
        %v4135 = vadd.f32 %v4022, %v4108
        %v4136 = vadd.f32 %v4023, %v4111
        %v4137 = vadd.f32 %v4024, %v4114
        %v4138 = vadd.f32 %v4025, %v4117
        %v4139 = vadd.f32 %v4026, %v4120
        %v4140 = vadd.f32 %v4027, %v4123
        %s4141 = scalar_lea.vmem [#allocation2], 240
        %v4142 = vld [vmem:[%s4141] sm:$0xff]
        %v4143 = vld [vmem:[%s4141 + $0x8] sm:$0xff]
        %v4144 = vld [vmem:[%s4141 + $0x18] sm:$0xff]
        %v4145 = vld [vmem:[%s4141 + $0x20] sm:$0xff]
        %v4146 = vld [vmem:[%s4141 + $0x30] sm:$0xff]
        %v4147 = vld [vmem:[%s4141 + $0x38] sm:$0xff]
        %v4148 = vld [vmem:[%s4141 + $0x48] sm:$0xff]
        %v4149 = vld [vmem:[%s4141 + $0x50] sm:$0xff]
        %v4150 = vld [vmem:[%s4141 + $0x60] sm:$0xff]
        %v4151 = vld [vmem:[%s4141 + $0x68] sm:$0xff]
        %v4152 = vld [vmem:[%s4141 + $0x78] sm:$0xff]
        %v4153 = vld [vmem:[%s4141 + $0x80] sm:$0xff]
        %v4154 = vld [vmem:[%s4141 + $0x90] sm:$0xff]
        %v4155 = vld [vmem:[%s4141 + $0x98] sm:$0xff]
        %v4156 = vld [vmem:[%s4141 + $0xa8] sm:$0xff]
        %v4157 = vld [vmem:[%s4141 + $0xb0] sm:$0xff]
        %v4158 = vld [vmem:[%s3101] sm:$0xff]
        %v4159 = vld [vmem:[%s3101 + $0x8] sm:$0xff]
        %v4160 = vld [vmem:[%s3101 + $0x10] sm:$0xff]
        %v4161 = vld [vmem:[%s3101 + $0x18] sm:$0xff]
        %v4162 = vld [vmem:[%s3101 + $0x20] sm:$0xff]
        %v4163 = vld [vmem:[%s3101 + $0x28] sm:$0xff]
        %v4164 = vld [vmem:[%s3101 + $0x30] sm:$0xff]
        %v4165 = vld [vmem:[%s3101 + $0x38] sm:$0xff]
        %v4166 = vld [vmem:[%s3101 + $0x40] sm:$0xff]
        %v4167 = vld [vmem:[%s3101 + $0x48] sm:$0xff]
        %v4168 = vld [vmem:[%s3101 + $0x50] sm:$0xff]
        %v4169 = vld [vmem:[%s3101 + $0x58] sm:$0xff]
        %v4170 = vld [vmem:[%s3101 + $0x60] sm:$0xff]
        %v4171 = vld [vmem:[%s3101 + $0x68] sm:$0xff]
        %v4172 = vld [vmem:[%s3101 + $0x70] sm:$0xff]
        %v4173 = vld [vmem:[%s3101 + $0x78] sm:$0xff]
        %4174 = vmatpush.msra.mxu0 %v4173
        %4175 = vmatpush.msra.mxu0 %v4172
        %4176 = vmatpush.msra.mxu0 %v4171
        %4177 = vmatpush.msra.mxu0 %v4170
        %4178 = vmatpush.msra.mxu0 %v4169
        %4179 = vmatpush.msra.mxu0 %v4168
        %4180 = vmatpush.msra.mxu0 %v4167
        %4181 = vmatpush.msra.mxu0 %v4166
        %4182 = vmatpush.msra.mxu0 %v4165
        %4183 = vmatpush.msra.mxu0 %v4164
        %4184 = vmatpush.msra.mxu0 %v4163
        %4185 = vmatpush.msra.mxu0 %v4162
        %4186 = vmatpush.msra.mxu0 %v4161
        %4187 = vmatpush.msra.mxu0 %v4160
        %4188 = vmatpush.msra.mxu0 %v4159
        %4189 = vmatpush.msra.mxu0 %v4158
        %4190 = vmatmul.f32.gmra.mxu0 %v4142
        %v4191 = vpop.f32.mrf.mxu0
        %v4192 = vadd.f32 0.0, %v4191
        %4193 = vmatmul.f32.gmra.mxu0 %v4143
        %v4194 = vpop.f32.mrf.mxu0
        %v4195 = vadd.f32 0.0, %v4194
        %4196 = vmatmul.f32.gmra.mxu0 %v4144
        %v4197 = vpop.f32.mrf.mxu0
        %v4198 = vadd.f32 0.0, %v4197
        %4199 = vmatmul.f32.gmra.mxu0 %v4145
        %v4200 = vpop.f32.mrf.mxu0
        %v4201 = vadd.f32 0.0, %v4200
        %4202 = vmatmul.f32.gmra.mxu0 %v4146
        %v4203 = vpop.f32.mrf.mxu0
        %v4204 = vadd.f32 0.0, %v4203
        %4205 = vmatmul.f32.gmra.mxu0 %v4147
        %v4206 = vpop.f32.mrf.mxu0
        %v4207 = vadd.f32 0.0, %v4206
        %4208 = vmatmul.f32.gmra.mxu0 %v4148
        %v4209 = vpop.f32.mrf.mxu0
        %v4210 = vadd.f32 0.0, %v4209
        %4211 = vmatmul.f32.gmra.mxu0 %v4149
        %v4212 = vpop.f32.mrf.mxu0
        %v4213 = vadd.f32 0.0, %v4212
        %4214 = vmatmul.f32.gmra.mxu0 %v4150
        %v4215 = vpop.f32.mrf.mxu0
        %v4216 = vadd.f32 0.0, %v4215
        %4217 = vmatmul.f32.gmra.mxu0 %v4151
        %v4218 = vpop.f32.mrf.mxu0
        %v4219 = vadd.f32 0.0, %v4218
        %4220 = vmatmul.f32.gmra.mxu0 %v4152
        %v4221 = vpop.f32.mrf.mxu0
        %v4222 = vadd.f32 0.0, %v4221
        %4223 = vmatmul.f32.gmra.mxu0 %v4153
        %v4224 = vpop.f32.mrf.mxu0
        %v4225 = vadd.f32 0.0, %v4224
        %4226 = vmatmul.f32.gmra.mxu0 %v4154
        %v4227 = vpop.f32.mrf.mxu0
        %v4228 = vadd.f32 0.0, %v4227
        %4229 = vmatmul.f32.gmra.mxu0 %v4155
        %v4230 = vpop.f32.mrf.mxu0
        %v4231 = vadd.f32 0.0, %v4230
        %4232 = vmatmul.f32.gmra.mxu0 %v4156
        %v4233 = vpop.f32.mrf.mxu0
        %v4234 = vadd.f32 0.0, %v4233
        %4235 = vmatmul.f32.gmra.mxu0 %v4157
        %v4236 = vpop.f32.mrf.mxu0
        %v4237 = vadd.f32 0.0, %v4236
        %4238 = vdwg.mxu0
        %v4239 = vadd.f32 %v4125, %v4192
        %v4240 = vadd.f32 %v4126, %v4195
        %v4241 = vadd.f32 %v4127, %v4198
        %v4242 = vadd.f32 %v4128, %v4201
        %v4243 = vadd.f32 %v4129, %v4204
        %v4244 = vadd.f32 %v4130, %v4207
        %v4245 = vadd.f32 %v4131, %v4210
        %v4246 = vadd.f32 %v4132, %v4213
        %v4247 = vadd.f32 %v4133, %v4216
        %v4248 = vadd.f32 %v4134, %v4219
        %v4249 = vadd.f32 %v4135, %v4222
        %v4250 = vadd.f32 %v4136, %v4225
        %v4251 = vadd.f32 %v4137, %v4228
        %v4252 = vadd.f32 %v4138, %v4231
        %v4253 = vadd.f32 %v4139, %v4234
        %v4254 = vadd.f32 %v4140, %v4237
        %v4255 = vld [vmem:[%s4141 + $0x1] sm:$0xff]
        %v4256 = vld [vmem:[%s4141 + $0x9] sm:$0xff]
        %v4257 = vld [vmem:[%s4141 + $0x19] sm:$0xff]
        %v4258 = vld [vmem:[%s4141 + $0x21] sm:$0xff]
        %v4259 = vld [vmem:[%s4141 + $0x31] sm:$0xff]
        %v4260 = vld [vmem:[%s4141 + $0x39] sm:$0xff]
        %v4261 = vld [vmem:[%s4141 + $0x49] sm:$0xff]
        %v4262 = vld [vmem:[%s4141 + $0x51] sm:$0xff]
        %v4263 = vld [vmem:[%s4141 + $0x61] sm:$0xff]
        %v4264 = vld [vmem:[%s4141 + $0x69] sm:$0xff]
        %v4265 = vld [vmem:[%s4141 + $0x79] sm:$0xff]
        %v4266 = vld [vmem:[%s4141 + $0x81] sm:$0xff]
        %v4267 = vld [vmem:[%s4141 + $0x91] sm:$0xff]
        %v4268 = vld [vmem:[%s4141 + $0x99] sm:$0xff]
        %v4269 = vld [vmem:[%s4141 + $0xa9] sm:$0xff]
        %v4270 = vld [vmem:[%s4141 + $0xb1] sm:$0xff]
        %v4271 = vld [vmem:[%s3215] sm:$0xff]
        %v4272 = vld [vmem:[%s3215 + $0x8] sm:$0xff]
        %v4273 = vld [vmem:[%s3215 + $0x10] sm:$0xff]
        %v4274 = vld [vmem:[%s3215 + $0x18] sm:$0xff]
        %v4275 = vld [vmem:[%s3215 + $0x20] sm:$0xff]
        %v4276 = vld [vmem:[%s3215 + $0x28] sm:$0xff]
        %v4277 = vld [vmem:[%s3215 + $0x30] sm:$0xff]
        %v4278 = vld [vmem:[%s3215 + $0x38] sm:$0xff]
        %v4279 = vld [vmem:[%s3215 + $0x40] sm:$0xff]
        %v4280 = vld [vmem:[%s3215 + $0x48] sm:$0xff]
        %v4281 = vld [vmem:[%s3215 + $0x50] sm:$0xff]
        %v4282 = vld [vmem:[%s3215 + $0x58] sm:$0xff]
        %v4283 = vld [vmem:[%s3215 + $0x60] sm:$0xff]
        %v4284 = vld [vmem:[%s3215 + $0x68] sm:$0xff]
        %v4285 = vld [vmem:[%s3215 + $0x70] sm:$0xff]
        %v4286 = vld [vmem:[%s3215 + $0x78] sm:$0xff]
        %4287 = vmatpush.msra.mxu0 %v4286
        %4288 = vmatpush.msra.mxu0 %v4285
        %4289 = vmatpush.msra.mxu0 %v4284
        %4290 = vmatpush.msra.mxu0 %v4283
        %4291 = vmatpush.msra.mxu0 %v4282
        %4292 = vmatpush.msra.mxu0 %v4281
        %4293 = vmatpush.msra.mxu0 %v4280
        %4294 = vmatpush.msra.mxu0 %v4279
        %4295 = vmatpush.msra.mxu0 %v4278
        %4296 = vmatpush.msra.mxu0 %v4277
        %4297 = vmatpush.msra.mxu0 %v4276
        %4298 = vmatpush.msra.mxu0 %v4275
        %4299 = vmatpush.msra.mxu0 %v4274
        %4300 = vmatpush.msra.mxu0 %v4273
        %4301 = vmatpush.msra.mxu0 %v4272
        %4302 = vmatpush.msra.mxu0 %v4271
        %4303 = vmatmul.f32.gmra.mxu0 %v4255
        %v4304 = vpop.f32.mrf.mxu0
        %v4305 = vadd.f32 0.0, %v4304
        %4306 = vmatmul.f32.gmra.mxu0 %v4256
        %v4307 = vpop.f32.mrf.mxu0
        %v4308 = vadd.f32 0.0, %v4307
        %4309 = vmatmul.f32.gmra.mxu0 %v4257
        %v4310 = vpop.f32.mrf.mxu0
        %v4311 = vadd.f32 0.0, %v4310
        %4312 = vmatmul.f32.gmra.mxu0 %v4258
        %v4313 = vpop.f32.mrf.mxu0
        %v4314 = vadd.f32 0.0, %v4313
        %4315 = vmatmul.f32.gmra.mxu0 %v4259
        %v4316 = vpop.f32.mrf.mxu0
        %v4317 = vadd.f32 0.0, %v4316
        %4318 = vmatmul.f32.gmra.mxu0 %v4260
        %v4319 = vpop.f32.mrf.mxu0
        %v4320 = vadd.f32 0.0, %v4319
        %4321 = vmatmul.f32.gmra.mxu0 %v4261
        %v4322 = vpop.f32.mrf.mxu0
        %v4323 = vadd.f32 0.0, %v4322
        %4324 = vmatmul.f32.gmra.mxu0 %v4262
        %v4325 = vpop.f32.mrf.mxu0
        %v4326 = vadd.f32 0.0, %v4325
        %4327 = vmatmul.f32.gmra.mxu0 %v4263
        %v4328 = vpop.f32.mrf.mxu0
        %v4329 = vadd.f32 0.0, %v4328
        %4330 = vmatmul.f32.gmra.mxu0 %v4264
        %v4331 = vpop.f32.mrf.mxu0
        %v4332 = vadd.f32 0.0, %v4331
        %4333 = vmatmul.f32.gmra.mxu0 %v4265
        %v4334 = vpop.f32.mrf.mxu0
        %v4335 = vadd.f32 0.0, %v4334
        %4336 = vmatmul.f32.gmra.mxu0 %v4266
        %v4337 = vpop.f32.mrf.mxu0
        %v4338 = vadd.f32 0.0, %v4337
        %4339 = vmatmul.f32.gmra.mxu0 %v4267
        %v4340 = vpop.f32.mrf.mxu0
        %v4341 = vadd.f32 0.0, %v4340
        %4342 = vmatmul.f32.gmra.mxu0 %v4268
        %v4343 = vpop.f32.mrf.mxu0
        %v4344 = vadd.f32 0.0, %v4343
        %4345 = vmatmul.f32.gmra.mxu0 %v4269
        %v4346 = vpop.f32.mrf.mxu0
        %v4347 = vadd.f32 0.0, %v4346
        %4348 = vmatmul.f32.gmra.mxu0 %v4270
        %v4349 = vpop.f32.mrf.mxu0
        %v4350 = vadd.f32 0.0, %v4349
        %4351 = vdwg.mxu0
        %v4352 = vadd.f32 %v4239, %v4305
        %v4353 = vadd.f32 %v4240, %v4308
        %v4354 = vadd.f32 %v4241, %v4311
        %v4355 = vadd.f32 %v4242, %v4314
        %v4356 = vadd.f32 %v4243, %v4317
        %v4357 = vadd.f32 %v4244, %v4320
        %v4358 = vadd.f32 %v4245, %v4323
        %v4359 = vadd.f32 %v4246, %v4326
        %v4360 = vadd.f32 %v4247, %v4329
        %v4361 = vadd.f32 %v4248, %v4332
        %v4362 = vadd.f32 %v4249, %v4335
        %v4363 = vadd.f32 %v4250, %v4338
        %v4364 = vadd.f32 %v4251, %v4341
        %v4365 = vadd.f32 %v4252, %v4344
        %v4366 = vadd.f32 %v4253, %v4347
        %v4367 = vadd.f32 %v4254, %v4350
        %v4368 = vld [vmem:[%s4141 + $0x2] sm:$0xff]
        %v4369 = vld [vmem:[%s4141 + $0xa] sm:$0xff]
        %v4370 = vld [vmem:[%s4141 + $0x1a] sm:$0xff]
        %v4371 = vld [vmem:[%s4141 + $0x22] sm:$0xff]
        %v4372 = vld [vmem:[%s4141 + $0x32] sm:$0xff]
        %v4373 = vld [vmem:[%s4141 + $0x3a] sm:$0xff]
        %v4374 = vld [vmem:[%s4141 + $0x4a] sm:$0xff]
        %v4375 = vld [vmem:[%s4141 + $0x52] sm:$0xff]
        %v4376 = vld [vmem:[%s4141 + $0x62] sm:$0xff]
        %v4377 = vld [vmem:[%s4141 + $0x6a] sm:$0xff]
        %v4378 = vld [vmem:[%s4141 + $0x7a] sm:$0xff]
        %v4379 = vld [vmem:[%s4141 + $0x82] sm:$0xff]
        %v4380 = vld [vmem:[%s4141 + $0x92] sm:$0xff]
        %v4381 = vld [vmem:[%s4141 + $0x9a] sm:$0xff]
        %v4382 = vld [vmem:[%s4141 + $0xaa] sm:$0xff]
        %v4383 = vld [vmem:[%s4141 + $0xb2] sm:$0xff]
        %v4384 = vld [vmem:[%s3329] sm:$0xff]
        %v4385 = vld [vmem:[%s3329 + $0x8] sm:$0xff]
        %v4386 = vld [vmem:[%s3329 + $0x10] sm:$0xff]
        %v4387 = vld [vmem:[%s3329 + $0x18] sm:$0xff]
        %v4388 = vld [vmem:[%s3329 + $0x20] sm:$0xff]
        %v4389 = vld [vmem:[%s3329 + $0x28] sm:$0xff]
        %v4390 = vld [vmem:[%s3329 + $0x30] sm:$0xff]
        %v4391 = vld [vmem:[%s3329 + $0x38] sm:$0xff]
        %v4392 = vld [vmem:[%s3329 + $0x40] sm:$0xff]
        %v4393 = vld [vmem:[%s3329 + $0x48] sm:$0xff]
        %v4394 = vld [vmem:[%s3329 + $0x50] sm:$0xff]
        %v4395 = vld [vmem:[%s3329 + $0x58] sm:$0xff]
        %v4396 = vld [vmem:[%s3329 + $0x60] sm:$0xff]
        %v4397 = vld [vmem:[%s3329 + $0x68] sm:$0xff]
        %v4398 = vld [vmem:[%s3329 + $0x70] sm:$0xff]
        %v4399 = vld [vmem:[%s3329 + $0x78] sm:$0xff]
        %4400 = vmatpush.msra.mxu0 %v4399
        %4401 = vmatpush.msra.mxu0 %v4398
        %4402 = vmatpush.msra.mxu0 %v4397
        %4403 = vmatpush.msra.mxu0 %v4396
        %4404 = vmatpush.msra.mxu0 %v4395
        %4405 = vmatpush.msra.mxu0 %v4394
        %4406 = vmatpush.msra.mxu0 %v4393
        %4407 = vmatpush.msra.mxu0 %v4392
        %4408 = vmatpush.msra.mxu0 %v4391
        %4409 = vmatpush.msra.mxu0 %v4390
        %4410 = vmatpush.msra.mxu0 %v4389
        %4411 = vmatpush.msra.mxu0 %v4388
        %4412 = vmatpush.msra.mxu0 %v4387
        %4413 = vmatpush.msra.mxu0 %v4386
        %4414 = vmatpush.msra.mxu0 %v4385
        %4415 = vmatpush.msra.mxu0 %v4384
        %4416 = vmatmul.f32.gmra.mxu0 %v4368
        %v4417 = vpop.f32.mrf.mxu0
        %v4418 = vadd.f32 0.0, %v4417
        %4419 = vmatmul.f32.gmra.mxu0 %v4369
        %v4420 = vpop.f32.mrf.mxu0
        %v4421 = vadd.f32 0.0, %v4420
        %4422 = vmatmul.f32.gmra.mxu0 %v4370
        %v4423 = vpop.f32.mrf.mxu0
        %v4424 = vadd.f32 0.0, %v4423
        %4425 = vmatmul.f32.gmra.mxu0 %v4371
        %v4426 = vpop.f32.mrf.mxu0
        %v4427 = vadd.f32 0.0, %v4426
        %4428 = vmatmul.f32.gmra.mxu0 %v4372
        %v4429 = vpop.f32.mrf.mxu0
        %v4430 = vadd.f32 0.0, %v4429
        %4431 = vmatmul.f32.gmra.mxu0 %v4373
        %v4432 = vpop.f32.mrf.mxu0
        %v4433 = vadd.f32 0.0, %v4432
        %4434 = vmatmul.f32.gmra.mxu0 %v4374
        %v4435 = vpop.f32.mrf.mxu0
        %v4436 = vadd.f32 0.0, %v4435
        %4437 = vmatmul.f32.gmra.mxu0 %v4375
        %v4438 = vpop.f32.mrf.mxu0
        %v4439 = vadd.f32 0.0, %v4438
        %4440 = vmatmul.f32.gmra.mxu0 %v4376
        %v4441 = vpop.f32.mrf.mxu0
        %v4442 = vadd.f32 0.0, %v4441
        %4443 = vmatmul.f32.gmra.mxu0 %v4377
        %v4444 = vpop.f32.mrf.mxu0
        %v4445 = vadd.f32 0.0, %v4444
        %4446 = vmatmul.f32.gmra.mxu0 %v4378
        %v4447 = vpop.f32.mrf.mxu0
        %v4448 = vadd.f32 0.0, %v4447
        %4449 = vmatmul.f32.gmra.mxu0 %v4379
        %v4450 = vpop.f32.mrf.mxu0
        %v4451 = vadd.f32 0.0, %v4450
        %4452 = vmatmul.f32.gmra.mxu0 %v4380
        %v4453 = vpop.f32.mrf.mxu0
        %v4454 = vadd.f32 0.0, %v4453
        %4455 = vmatmul.f32.gmra.mxu0 %v4381
        %v4456 = vpop.f32.mrf.mxu0
        %v4457 = vadd.f32 0.0, %v4456
        %4458 = vmatmul.f32.gmra.mxu0 %v4382
        %v4459 = vpop.f32.mrf.mxu0
        %v4460 = vadd.f32 0.0, %v4459
        %4461 = vmatmul.f32.gmra.mxu0 %v4383
        %v4462 = vpop.f32.mrf.mxu0
        %v4463 = vadd.f32 0.0, %v4462
        %4464 = vdwg.mxu0
        %v4465 = vadd.f32 %v4352, %v4418
        %v4466 = vadd.f32 %v4353, %v4421
        %v4467 = vadd.f32 %v4354, %v4424
        %v4468 = vadd.f32 %v4355, %v4427
        %v4469 = vadd.f32 %v4356, %v4430
        %v4470 = vadd.f32 %v4357, %v4433
        %v4471 = vadd.f32 %v4358, %v4436
        %v4472 = vadd.f32 %v4359, %v4439
        %v4473 = vadd.f32 %v4360, %v4442
        %v4474 = vadd.f32 %v4361, %v4445
        %v4475 = vadd.f32 %v4362, %v4448
        %v4476 = vadd.f32 %v4363, %v4451
        %v4477 = vadd.f32 %v4364, %v4454
        %v4478 = vadd.f32 %v4365, %v4457
        %v4479 = vadd.f32 %v4366, %v4460
        %v4480 = vadd.f32 %v4367, %v4463
        %v4481 = vadd.f32 %v4465, %v3428
        %v4482 = vadd.f32 %v4466, %v3428
        %v4483 = vadd.f32 %v4467, %v3428
        %v4484 = vadd.f32 %v4468, %v3428
        %v4485 = vadd.f32 %v4469, %v3428
        %v4486 = vadd.f32 %v4470, %v3428
        %v4487 = vadd.f32 %v4471, %v3428
        %v4488 = vadd.f32 %v4472, %v3428
        %v4489 = vadd.f32 %v4473, %v3428
        %v4490 = vadd.f32 %v4474, %v3428
        %v4491 = vadd.f32 %v4475, %v3428
        %v4492 = vadd.f32 %v4476, %v3428
        %v4493 = vadd.f32 %v4477, %v3428
        %v4494 = vadd.f32 %v4478, %v3428
        %v4495 = vadd.f32 %v4479, %v3428
        %v4496 = vadd.f32 %v4480, %v3428
        %v4497 = vld [vmem:[%s1672 + $0x1] sm:$0xff]
        %v4498 = vld [vmem:[%s1672 + $0x9] sm:$0xff]
        %v4499 = vld [vmem:[%s1672 + $0x19] sm:$0xff]
        %v4500 = vld [vmem:[%s1672 + $0x21] sm:$0xff]
        %v4501 = vld [vmem:[%s1672 + $0x31] sm:$0xff]
        %v4502 = vld [vmem:[%s1672 + $0x39] sm:$0xff]
        %v4503 = vld [vmem:[%s1672 + $0x49] sm:$0xff]
        %v4504 = vld [vmem:[%s1672 + $0x51] sm:$0xff]
        %v4505 = vld [vmem:[%s1672 + $0x61] sm:$0xff]
        %v4506 = vld [vmem:[%s1672 + $0x69] sm:$0xff]
        %v4507 = vld [vmem:[%s1672 + $0x79] sm:$0xff]
        %v4508 = vld [vmem:[%s1672 + $0x81] sm:$0xff]
        %v4509 = vld [vmem:[%s1672 + $0x91] sm:$0xff]
        %v4510 = vld [vmem:[%s1672 + $0x99] sm:$0xff]
        %v4511 = vld [vmem:[%s1672 + $0xa9] sm:$0xff]
        %v4512 = vld [vmem:[%s1672 + $0xb1] sm:$0xff]
        %v4513 = vadd.f32 %v4497, %v4481
        %v4514 = vadd.f32 %v4498, %v4482
        %v4515 = vadd.f32 %v4499, %v4483
        %v4516 = vadd.f32 %v4500, %v4484
        %v4517 = vadd.f32 %v4501, %v4485
        %v4518 = vadd.f32 %v4502, %v4486
        %v4519 = vadd.f32 %v4503, %v4487
        %v4520 = vadd.f32 %v4504, %v4488
        %v4521 = vadd.f32 %v4505, %v4489
        %v4522 = vadd.f32 %v4506, %v4490
        %v4523 = vadd.f32 %v4507, %v4491
        %v4524 = vadd.f32 %v4508, %v4492
        %v4525 = vadd.f32 %v4509, %v4493
        %v4526 = vadd.f32 %v4510, %v4494
        %v4527 = vadd.f32 %v4511, %v4495
        %v4528 = vadd.f32 %v4512, %v4496
        %s4529 = scalar_lea.vmem %s234, 128 [#allocation6]
        %4530 = vst [vmem:[%s4529] sm:$0xff] %v4513
        %4531 = vst [vmem:[%s4529 + $0x8] sm:$0xff] %v4514
        %4532 = vst [vmem:[%s4529 + $0x10] sm:$0xff] %v4515
        %4533 = vst [vmem:[%s4529 + $0x18] sm:$0xff] %v4516
        %4534 = vst [vmem:[%s4529 + $0x20] sm:$0xff] %v4517
        %4535 = vst [vmem:[%s4529 + $0x28] sm:$0xff] %v4518
        %4536 = vst [vmem:[%s4529 + $0x30] sm:$0xff] %v4519
        %4537 = vst [vmem:[%s4529 + $0x38] sm:$0xff] %v4520
        %4538 = vst [vmem:[%s4529 + $0x40] sm:$0xff] %v4521
        %4539 = vst [vmem:[%s4529 + $0x48] sm:$0xff] %v4522
        %4540 = vst [vmem:[%s4529 + $0x50] sm:$0xff] %v4523
        %4541 = vst [vmem:[%s4529 + $0x58] sm:$0xff] %v4524
        %4542 = vst [vmem:[%s4529 + $0x60] sm:$0xff] %v4525
        %4543 = vst [vmem:[%s4529 + $0x68] sm:$0xff] %v4526
        %4544 = vst [vmem:[%s4529 + $0x70] sm:$0xff] %v4527
        %4545 = vst [vmem:[%s4529 + $0x78] sm:$0xff] %v4528
        %s4546 = sand.u32 %s138, 1
        %s4547 = scalar_lea.sflag [#allocation5], %s4546
        %s4548 = sand.u32 %s138, 1
        %s4549 = smul.addr %s4548, 256
        %s4550 = scalar_lea.vmem [#allocation6], %s4549
        // Predicated region
        $region45: #{tpu_custom_call.1} parent=39 // pred_check
          %p4551 = pneg %p148
        $region46: #{tpu_custom_call.1} parent=39 // pred_check_branch
          %4553 = sbr.rel (%p4551) target = $region48
        $region47: #{tpu_custom_call.1} parent=39 // pred_region
          %4555 = vsyncadd %s4547, 0
          %s4556 = smul.addr %s20, 32
          %s4557 = smul.addr %s4556, 8
          %s4558 = scalar_lea.hbm %s5, %s4557
          %s4559 = sshll.u32 %s4550, 4
          %s4560 = int_to_ptr.vmem [resolvable:$true] %s4559
          %s4561 = sshll.u32 %s4558, 4
          %s4562 = int_to_ptr.hbm [resolvable:$true] %s4561
          %4567 = dma.vmem_to_hbm [thread:$0]  %s4560, 4096, %s4562, %s4547, 128, 128, 8
        $region48: #{tpu_custom_call.1} parent=39 // pred_fallthru
          _
      $region40: #{tpu_custom_call.1} parent=5 // pred_fallthru
        _
      %p4568 = scmp.le.s32.totalorder 2, %s15
      // Predicated region
      $region49: #{tpu_custom_call.1} parent=5 // pred_check
        %p4569 = pneg %p4568
      $region50: #{tpu_custom_call.1} parent=5 // pred_check_branch
        %4571 = sbr.rel (%p4569) target = $region52
      $region51: #{tpu_custom_call.1} parent=5 // pred_region
        %s4572 = ssub.s32 %s15, 2
        // Predicated region
        $region53: #{tpu_custom_call.1} parent=51 // pred_check
          %p4573 = pneg %p154
        $region54: #{tpu_custom_call.1} parent=51 // pred_check_branch
          %4575 = sbr.rel (%p4573) target = $region56
        $region55: #{tpu_custom_call.1} parent=51 // pred_region
          %s4576 = sand.u32 %s139, 1
          %s4577 = scalar_lea.sflag [#allocation5], %s4576
          %s4578 = sand.u32 %s139, 1
          %s4579 = smul.addr %s4578, 256
          %s4580 = scalar_lea.vmem [#allocation6], %s4579
          %4582 = dma.done %s4577, 4096
        $region56: #{tpu_custom_call.1} parent=51 // pred_fallthru
          _
      $region52: #{tpu_custom_call.1} parent=5 // pred_fallthru
        _
    $region6: #{tpu_custom_call.1} parent=1 // loop_footer
      %s19 = sadd.s32 1, %s15
    $region7: #{tpu_custom_call.1} parent=1 // loop_footer_branch
      %14 = sbr.rel target = $region3
    $region8: #{tpu_custom_call.1} parent=1 // loop_exit
      _
    %4583 = vsyncpa [#allocation4], 1
    %s4584 = scalar_lea.sflag [#allocation4], 1
    %4585 = vsyncpa %s4584, 1
    %4586 = vsyncpa [#allocation5], 1
    %s4587 = scalar_lea.sflag [#allocation5], 1
    %4588 = vsyncpa %s4587, 1

</llo_original>
